<compile_context>
chip_gen: v7x
topology: tpu7x:2x2x1
jax: 0.10.0
libtpu: 0.0.40
codegen_flags: <defaults>
</compile_context>

<pallas_src>
import math

import numpy as np
import jax
import jax.numpy as jnp
from jax.experimental import pallas as pl
from jax.experimental.pallas import tpu as pltpu


_TM_MAX = 1024     # rows per tile; outputs/weights stay far below VMEM limits
_LANE = 128
_ROW_GRAIN = 16    # bf16 feature output packs 2 rows per sublane


def _round_up(n, m):
    return ((n + m - 1) // m) * m


def _cdiv(a, b):
    return -(-a // b)


def _pick_tm(m):
    """Choose the M-tile size.

    Prefers (a) >= 2 tiles (so the "parallel" grid axis can shard across
    v7x's two TensorCores), (b) balanced tiles near _TM_MAX, and (c) an exact
    divisor of m so no padded rows are produced and the padded feature slab
    can be carried straight into the next level.  Returns (tm, mpad).
    """
    m = int(m)
    g = _ROW_GRAIN
    ntiles = max(1, _cdiv(m, _TM_MAX))
    if m >= 2 * g:
        ntiles = max(ntiles, 2)
    target = max(g, _round_up(_cdiv(m, ntiles), g))
    hi = min(target, max(g, (m // g) * g))
    lo = max(g, (target // 2 // g) * g)
    t = hi
    while t >= lo:
        if m % t == 0:
            return t, m            # exact division: no padded rows
        t -= g
    return target, _round_up(m, target)   # balanced tiles, < g rows pad/tile


# ----------------------------------------------------------------------------
# Fused per-level kernel:  f = SiLU(x @ Wbb + bbb);  y = f @ Wdt + bdt
# One grid step processes one M-tile; weights stay resident in VMEM.
# ----------------------------------------------------------------------------
def _fused_stage_kernel(x_ref, wbb_ref, bbb_ref, wdt_ref, bdt_ref,
                        f_ref, y_ref):
    # x_ref: (TM, Cin) bf16; wbb: (Cin, Cmid) bf16; bbb: (1, Cmid) f32
    # wdt: (Cmid, Cdet) bf16; bdt: (1, Cdet) f32;  Cmid/Cdet lane-dense.
    h = jnp.dot(x_ref[...], wbb_ref[...], preferred_element_type=jnp.float32)
    h = h + bbb_ref[...]
    f = h * jax.nn.sigmoid(h)                       # SiLU in f32 (VPU + EUP)
    f_ref[...] = f.astype(f_ref.dtype)              # bf16, lane-dense (TM,Cmid)
    y = jnp.dot(f.astype(wdt_ref.dtype), wdt_ref[...],
                preferred_element_type=jnp.float32)
    y_ref[...] = (y + bdt_ref[...]).astype(y_ref.dtype)


def fused_stage(x2d, wbb, bbb, wdt, bdt, *, tm, vmem_limit_bytes):
    """x2d: (Mpad, Cin) bf16, Mpad % tm == 0.  Returns (f bf16, y f32)."""
    mpad, cin = x2d.shape
    cmid = wbb.shape[1]
    cdet = wdt.shape[1]
    grid = mpad // tm

    flops = 2 * mpad * cin * cmid + 2 * mpad * cmid * cdet
    bytes_accessed = (mpad * cin * 2                       # x (bf16)
                      + cin * cmid * 2 + cmid * cdet * 2   # weights (bf16)
                      + (cmid + cdet) * 4                  # biases (f32)
                      + mpad * cmid * 2                    # f out (bf16)
                      + mpad * cdet * 4)                   # y out (f32)

    return pl.pallas_call(
        _fused_stage_kernel,
        out_shape=(jax.ShapeDtypeStruct((mpad, cmid), jnp.bfloat16),
                   jax.ShapeDtypeStruct((mpad, cdet), jnp.float32)),
        grid=(grid,),
        in_specs=[
            pl.BlockSpec((tm, cin), lambda i: (i, 0)),     # streamed rows
            pl.BlockSpec((cin, cmid), lambda i: (0, 0)),   # resident weights
            pl.BlockSpec((1, cmid), lambda i: (0, 0)),
            pl.BlockSpec((cmid, cdet), lambda i: (0, 0)),
            pl.BlockSpec((1, cdet), lambda i: (0, 0)),
        ],
        out_specs=(pl.BlockSpec((tm, cmid), lambda i: (i, 0)),
                   pl.BlockSpec((tm, cdet), lambda i: (i, 0))),
        compiler_params=pltpu.CompilerParams(
            dimension_semantics=("parallel",),
            vmem_limit_bytes=vmem_limit_bytes),
        cost_estimate=pl.CostEstimate(
            flops=flops,
            transcendentals=mpad * cmid,                   # sigmoid on EUP
            bytes_accessed=bytes_accessed),
    )(x2d, wbb, bbb, wdt, bdt)


# ----------------------------------------------------------------------------
# Yolov5 (JAX/Pallas version)
# ----------------------------------------------------------------------------
class Yolov5Pallas:
    def __init__(self, cfg, nc):
        self.cfg = cfg
        self.nc = nc
        self.no = nc + 5
        anchors = cfg["anchors"]
        self.nl = len(anchors)
        self.na = len(anchors[0]) // 2
        self.n_out_layer = self.nl
        ch = cfg["ch"]

        # Detect buffers (match Detect.__init__).
        self.anchors = np.asarray(anchors, np.float32).reshape(self.nl, -1, 2)
        self.anchor_grid = self.anchors.copy().reshape(self.nl, 1, -1, 1, 1, 2)

        # ---- chip-generation dependent knobs --------------------------------
        try:
            kind = jax.devices()[0].device_kind.lower()
        except Exception:  # pragma: no cover
            kind = ""
        is_128_mxu = any(t in kind for t in ("v2", "v3", "v4", "v5"))
        self._mxu_256 = not is_128_mxu          # v6e/v7x: 256-wide MXU columns
        # v7x has 64 MiB physical VMEM (leave headroom); v5e/v6e have 128 MiB.
        self._vmem_limit = (40 if "v7" in kind else 64) * 1024 * 1024

        key = jax.random.PRNGKey(0)

        # ---- backbone (synthetic replacement, see TODO at top) ----
        self.bb_strides = [int(s) for s in cfg["backbone_stride"]]
        self.bb_w, self.bb_b = [], []
        c_in = ch
        for c_out in cfg["backbone_ch"]:
            key, kw, kb = jax.random.split(key, 3)
            bound = 1.0 / math.sqrt(c_in)
            self.bb_w.append(jax.random.uniform(
                kw, (c_in, c_out), jnp.float32, -bound, bound))
            self.bb_b.append(jax.random.uniform(
                kb, (1, c_out), jnp.float32, -bound, bound))
            c_in = c_out

        # ---- Detect head: one 1x1 conv per level (nn.Conv2d(c, no*na, 1)) ----
        self.det_w = []
        self.det_b = []  # numpy so _initialize_biases can edit in place
        for c in cfg["backbone_ch"]:
            key, kw, kb = jax.random.split(key, 3)
            bound = 1.0 / math.sqrt(c)     # fan_in = c * 1 * 1
            self.det_w.append(jax.random.uniform(
                kw, (c, self.no * self.na), jnp.float32, -bound, bound))
            self.det_b.append(np.asarray(jax.random.uniform(
                kb, (self.no * self.na,), jnp.float32, -bound, bound)))

        # jit the whole forward (params passed as args so post-init bias edits
        # are honored without retracing).
        self._fwd = jax.jit(self._forward_impl)

        # ---- stride derivation (dry-run on a zero 256x256 image) ----
        s = 256
        preds = self.forward(jnp.zeros((1, ch, s, s), jnp.float32))
        self.stride = np.asarray([s / p.shape[-2] for p in preds], np.float32)
        self.anchors = self.anchors / self.stride.reshape(-1, 1, 1)
        self._check_anchor_order()
        self._initialize_biases()

    # -- helpers --------------------------------------------------------------
    def _pad_dim(self, c):
        p = _round_up(c, _LANE)
        if p > _LANE and self._mxu_256:
            p = _round_up(c, 256)       # fill 256-wide MXU columns on v6e/v7x
        return p

    # -- forward pass ---------------------------------------------------------
    def forward(self, x_nchw):
        """x_nchw: (bs, ch, H, W).  Returns list of (bs, na, ny, nx, no)."""
        params = (list(self.bb_w), list(self.bb_b), list(self.det_w),
                  [jnp.asarray(b, jnp.float32) for b in self.det_b])
        return self._fwd(x_nchw, params)

    def _forward_impl(self, x_nchw, params):
        bb_w, bb_b, det_w, det_b = params
        # NHWC bf16 activations at the kernel boundary (MXU path).
        x = jnp.transpose(x_nchw, (0, 2, 3, 1)).astype(jnp.bfloat16)
        outs = []
        for i, s in enumerate(self.bb_strides):
            # TODO(synk): fold this stride-s subsample into the next stage's
            # input BlockSpec / kernel DMA instead of a wrapper strided slice.
            x = x[:, ::s, ::s, :]
            n, h, ww, cin = x.shape
            m = n * h * ww

            cbb_in = bb_w[i].shape[0]          # real input channels this level
            cbb = bb_w[i].shape[1]             # real mid channels
            cdet_real = det_w[i].shape[1]      # na * no
            cmid = self._pad_dim(cbb)
            cdet = self._pad_dim(cdet_real)

            # Lane-dense padded weights/biases (tiny; built + fused under jit).
            # Zero rows (cin - cbb_in) line up with the zero-padded channels of
            # the carried bf16 feature slab, so the extension is exact.
            wbb = jnp.pad(bb_w[i].astype(jnp.bfloat16),
                          ((0, cin - cbb_in), (0, cmid - cbb)))
            bbb = jnp.pad(bb_b[i].reshape(1, -1), ((0, 0), (0, cmid - cbb)))
            wdt = jnp.pad(det_w[i].astype(jnp.bfloat16),
                          ((0, cmid - cbb), (0, cdet - cdet_real)))
            bdt = jnp.pad(det_b[i].reshape(1, -1),
                          ((0, 0), (0, cdet - cdet_real)))

            # Balanced M tiles; >=2 tiles when possible (v7x megacore).
            tm, mpad = _pick_tm(m)
            x2d = x.reshape(m, cin)
            if mpad != m:
                x2d = jnp.pad(x2d, ((0, mpad - m), (0, 0)))

            f_pad, y_pad = fused_stage(x2d, wbb, bbb, wdt, bdt, tm=tm,
                                       vmem_limit_bytes=self._vmem_limit)

            # Carry the feature in its padded, lane-dense bf16 form; only drop
            # padded rows (they hold SiLU(bias) != 0) before the reshape.
            f = f_pad if mpad == m else f_pad[:m]
            x = f.reshape(n, h, ww, cmid)

            y = y_pad[:m, :cdet_real]
            y = y.reshape(n, h, ww, self.na, self.no)
            # NHWC channel index = a*no + o, so this reshape/transpose matches
            # torch's view(bs, na, no, ny, nx).permute(0, 1, 3, 4, 2)
            outs.append(jnp.transpose(y, (0, 3, 1, 2, 4)))  # (bs,na,ny,nx,no)
        return outs

    # -- pure-JAX reference (no Pallas) with identical bf16 rounding ----------
    def forward_ref(self, x_nchw):
        x = jnp.transpose(x_nchw, (0, 2, 3, 1)).astype(jnp.float32)
        outs = []
        for i, s in enumerate(self.bb_strides):
            x = x[:, ::s, ::s, :]
            h = jnp.einsum("nhwc,cd->nhwd", x.astype(jnp.bfloat16),
                           self.bb_w[i].astype(jnp.bfloat16),
                           preferred_element_type=jnp.float32)
            h = h + self.bb_b[i].reshape(1, 1, 1, -1)
            f = h * jax.nn.sigmoid(h)
            x = f
            y = jnp.einsum("nhwc,cd->nhwd", f.astype(jnp.bfloat16),
                           self.det_w[i].astype(jnp.bfloat16),
                           preferred_element_type=jnp.float32)
            y = y + jnp.asarray(self.det_b[i], jnp.float32).reshape(1, 1, 1, -1)
            n, hh, ww, _ = f.shape
            y = y.reshape(n, hh, ww, self.na, self.no).transpose(0, 3, 1, 2, 4)
            outs.append(y)
        return outs

    # -- init-time bookkeeping (mirrors the PyTorch module) -------------------
    def _check_anchor_order(self):
        a = self.anchor_grid.prod(-1).reshape(-1)
        da = a[-1] - a[0]
        ds = self.stride[-1] - self.stride[0]
        if np.sign(da) != np.sign(ds):
            print("Reversing anchor order")
            self.anchors = self.anchors[::-1].copy()
            self.anchor_grid = self.anchor_grid[::-1].copy()

    def _initialize_biases(self, cf=None):
        for i, s in enumerate(self.stride):
            b = self.det_b[i].reshape(self.na, -1).copy()
            b[:, 4] += math.log(8.0 / (640.0 / float(s)) ** 2)
            if cf is None:
                b[:, 5:] += math.log(0.6 / (self.nc - 0.99))
            else:
                b[:, 5:] += np.log(cf / cf.sum())
            self.det_b[i] = b.reshape(-1)


# ----------------------------------------------------------------------------
if __name__ == "__main__":
    cfg = {
        "ch": 4,
        "anchors": [
            [10, 13, 16, 30, 33, 23],       # P3/8
            [30, 61, 62, 45, 59, 119],      # P4/16
            [116, 90, 156, 198, 373, 326],  # P5/32
        ],
        "backbone_ch": [8, 16, 32],         # feature channels feeding Detect
        "backbone_stride": [8, 2, 2],       # cumulative strides 8 / 16 / 32
    }
    nc = 3  # number of classes

    model = Yolov5Pallas(cfg, nc)

    # Small input; spatial must be a multiple of 32 (stride-32 level exists).
    key = jax.random.PRNGKey(0)
    x = jax.random.normal(key, (2, cfg["ch"], 64, 64), dtype=jnp.float32)

    outs = jax.block_until_ready(model.forward(x))

    # shape checks: (bs, na, ny, nx, no)
    expected = [(2, 3, 8, 8, nc + 5), (2, 3, 4, 4, nc + 5), (2, 3, 2, 2, nc + 5)]
    for o, e in zip(outs, expected):
        assert tuple(o.shape) == e, (o.shape, e)

    # numeric check against a pure-JAX reference with identical bf16 rounding
    refs = jax.block_until_ready(model.forward_ref(x))
    for o, r in zip(outs, refs):
        np.testing.assert_allclose(np.asarray(o), np.asarray(r),
                                   rtol=1e-2, atol=1e-2)

    print("KERNEL_OK")
</pallas_src>

<mosaic_0001>
module attributes {stable_mosaic.version = 11 : i64} {
  func.func @_fused_stage_kernel(%arg0: i32, %arg1: memref<512x4xbf16, #tpu.memory_space<vmem>>, %arg2: memref<4x128xbf16, #tpu.memory_space<vmem>>, %arg3: memref<1x128xf32, #tpu.memory_space<vmem>>, %arg4: memref<128x128xbf16, #tpu.memory_space<vmem>>, %arg5: memref<1x128xf32, #tpu.memory_space<vmem>>, %arg6: memref<512x128xbf16, #tpu.memory_space<vmem>>, %arg7: memref<512x128xf32, #tpu.memory_space<vmem>>) attributes {dimension_semantics = [#tpu.dimension_semantics<parallel>], iteration_bounds = array<i64: 2>, scalar_prefetch = 0 : i64, scratch_operands = 0 : i64, tpu.core_type = #tpu.core_type<tc>, window_params = [{transform_indices = @transform_0, window_bounds = array<i64: 512, 4>}, {pipeline_mode = #tpu.pipeline_mode<synchronous>, transform_indices = @transform_1, window_bounds = array<i64: 4, 128>}, {pipeline_mode = #tpu.pipeline_mode<synchronous>, transform_indices = @transform_2, window_bounds = array<i64: 1, 128>}, {pipeline_mode = #tpu.pipeline_mode<synchronous>, transform_indices = @transform_3, window_bounds = array<i64: 128, 128>}, {pipeline_mode = #tpu.pipeline_mode<synchronous>, transform_indices = @transform_4, window_bounds = array<i64: 1, 128>}, {transform_indices = @transform_5, window_bounds = array<i64: 512, 128>}, {transform_indices = @transform_6, window_bounds = array<i64: 512, 128>}]} {
    %c0 = arith.constant 0 : index
    %c0_0 = arith.constant 0 : index
    %0 = vector.load %arg1[%c0, %c0_0] : memref<512x4xbf16, #tpu.memory_space<vmem>>, vector<512x4xbf16>
    %c0_1 = arith.constant 0 : index
    %c0_2 = arith.constant 0 : index
    %1 = vector.load %arg2[%c0_1, %c0_2] : memref<4x128xbf16, #tpu.memory_space<vmem>>, vector<4x128xbf16>
    %cst = arith.constant dense<0.000000e+00> : vector<512x128xf32>
    %2 = tpu.matmul %0, %1, %cst {dimension_numbers = #tpu.dot_dimension_numbers<[1], [0], [0], [1], [0, 0, 1, 1], [], []>} : vector<512x4xbf16>, vector<4x128xbf16>, vector<512x128xf32> -> vector<512x128xf32>
    %c0_3 = arith.constant 0 : index
    %c0_4 = arith.constant 0 : index
    %3 = vector.load %arg3[%c0_3, %c0_4] : memref<1x128xf32, #tpu.memory_space<vmem>>, vector<1x128xf32>
    %4 = vector.broadcast %3 : vector<1x128xf32> to vector<512x128xf32>
    %5 = arith.addf %2, %4 : vector<512x128xf32>
    %6 = arith.negf %5 : vector<512x128xf32>
    %7 = math.exp %6 : vector<512x128xf32>
    %cst_5 = arith.constant 1.000000e+00 : f32
    %8 = vector.broadcast %cst_5 : f32 to vector<512x128xf32>
    %9 = arith.addf %8, %7 : vector<512x128xf32>
    %10 = arith.divf %8, %9 : vector<512x128xf32>
    %11 = arith.mulf %5, %10 : vector<512x128xf32>
    %12 = arith.truncf %11 : vector<512x128xf32> to vector<512x128xbf16>
    %c0_6 = arith.constant 0 : index
    %c0_7 = arith.constant 0 : index
    %13 = vector.load %arg6[%c0_6, %c0_7] : memref<512x128xbf16, #tpu.memory_space<vmem>>, vector<512x128xbf16>
    tpu.vector_store %arg6[%c0_6, %c0_7], %12 {strides = array<i32>} : memref<512x128xbf16, #tpu.memory_space<vmem>>, vector<512x128xbf16>,
    %14 = arith.truncf %11 : vector<512x128xf32> to vector<512x128xbf16>
    %c0_8 = arith.constant 0 : index
    %c0_9 = arith.constant 0 : index
    %15 = vector.load %arg4[%c0_8, %c0_9] : memref<128x128xbf16, #tpu.memory_space<vmem>>, vector<128x128xbf16>
    %cst_10 = arith.constant dense<0.000000e+00> : vector<512x128xf32>
    %16 = tpu.matmul %14, %15, %cst_10 {dimension_numbers = #tpu.dot_dimension_numbers<[1], [0], [0], [1], [0, 0, 1, 1], [], []>} : vector<512x128xbf16>, vector<128x128xbf16>, vector<512x128xf32> -> vector<512x128xf32>
    %c0_11 = arith.constant 0 : index
    %c0_12 = arith.constant 0 : index
    %17 = vector.load %arg5[%c0_11, %c0_12] : memref<1x128xf32, #tpu.memory_space<vmem>>, vector<1x128xf32>
    %18 = vector.broadcast %17 : vector<1x128xf32> to vector<512x128xf32>
    %19 = arith.addf %16, %18 : vector<512x128xf32>
    %c0_13 = arith.constant 0 : index
    %c0_14 = arith.constant 0 : index
    %20 = vector.load %arg7[%c0_13, %c0_14] : memref<512x128xf32, #tpu.memory_space<vmem>>, vector<512x128xf32>
    tpu.vector_store %arg7[%c0_13, %c0_14], %19 {strides = array<i32>} : memref<512x128xf32, #tpu.memory_space<vmem>>, vector<512x128xf32>,
    return
  }
  func.func @transform_0(%arg0: i32) -> (i32, i32) {
    %c0_i32 = arith.constant 0 : i32
    %c0_i32_0 = arith.constant 0 : i32
    return %arg0, %c0_i32 : i32, i32
  }
  func.func @transform_1(%arg0: i32) -> (i32, i32) {
    %c0_i32 = arith.constant 0 : i32
    %c0_i32_0 = arith.constant 0 : i32
    %c0_i32_1 = arith.constant 0 : i32
    return %c0_i32, %c0_i32_0 : i32, i32
  }
  func.func @transform_2(%arg0: i32) -> (i32, i32) {
    %c0_i32 = arith.constant 0 : i32
    %c0_i32_0 = arith.constant 0 : i32
    %c0_i32_1 = arith.constant 0 : i32
    return %c0_i32, %c0_i32_0 : i32, i32
  }
  func.func @transform_3(%arg0: i32) -> (i32, i32) {
    %c0_i32 = arith.constant 0 : i32
    %c0_i32_0 = arith.constant 0 : i32
    %c0_i32_1 = arith.constant 0 : i32
    return %c0_i32, %c0_i32_0 : i32, i32
  }
  func.func @transform_4(%arg0: i32) -> (i32, i32) {
    %c0_i32 = arith.constant 0 : i32
    %c0_i32_0 = arith.constant 0 : i32
    %c0_i32_1 = arith.constant 0 : i32
    return %c0_i32, %c0_i32_0 : i32, i32
  }
  func.func @transform_5(%arg0: i32) -> (i32, i32) {
    %c0_i32 = arith.constant 0 : i32
    %c0_i32_0 = arith.constant 0 : i32
    return %arg0, %c0_i32 : i32, i32
  }
  func.func @transform_6(%arg0: i32) -> (i32, i32) {
    %c0_i32 = arith.constant 0 : i32
    %c0_i32_0 = arith.constant 0 : i32
    return %arg0, %c0_i32 : i32, i32
  }
}

module attributes {stable_mosaic.version = 11 : i64} {
  func.func @_fused_stage_kernel(%arg0: i32, %arg1: memref<128x128xbf16, #tpu.memory_space<vmem>>, %arg2: memref<128x128xbf16, #tpu.memory_space<vmem>>, %arg3: memref<1x128xf32, #tpu.memory_space<vmem>>, %arg4: memref<128x128xbf16, #tpu.memory_space<vmem>>, %arg5: memref<1x128xf32, #tpu.memory_space<vmem>>, %arg6: memref<128x128xbf16, #tpu.memory_space<vmem>>, %arg7: memref<128x128xf32, #tpu.memory_space<vmem>>) attributes {dimension_semantics = [#tpu.dimension_semantics<parallel>], iteration_bounds = array<i64: 2>, scalar_prefetch = 0 : i64, scratch_operands = 0 : i64, tpu.core_type = #tpu.core_type<tc>, window_params = [{transform_indices = @transform_0, window_bounds = array<i64: 128, 128>}, {pipeline_mode = #tpu.pipeline_mode<synchronous>, transform_indices = @transform_1, window_bounds = array<i64: 128, 128>}, {pipeline_mode = #tpu.pipeline_mode<synchronous>, transform_indices = @transform_2, window_bounds = array<i64: 1, 128>}, {pipeline_mode = #tpu.pipeline_mode<synchronous>, transform_indices = @transform_3, window_bounds = array<i64: 128, 128>}, {pipeline_mode = #tpu.pipeline_mode<synchronous>, transform_indices = @transform_4, window_bounds = array<i64: 1, 128>}, {transform_indices = @transform_5, window_bounds = array<i64: 128, 128>}, {transform_indices = @transform_6, window_bounds = array<i64: 128, 128>}]} {
    %c0 = arith.constant 0 : index
    %c0_0 = arith.constant 0 : index
    %0 = vector.load %arg1[%c0, %c0_0] : memref<128x128xbf16, #tpu.memory_space<vmem>>, vector<128x128xbf16>
    %c0_1 = arith.constant 0 : index
    %c0_2 = arith.constant 0 : index
    %1 = vector.load %arg2[%c0_1, %c0_2] : memref<128x128xbf16, #tpu.memory_space<vmem>>, vector<128x128xbf16>
    %cst = arith.constant dense<0.000000e+00> : vector<128x128xf32>
    %2 = tpu.matmul %0, %1, %cst {dimension_numbers = #tpu.dot_dimension_numbers<[1], [0], [0], [1], [0, 0, 1, 1], [], []>} : vector<128x128xbf16>, vector<128x128xbf16>, vector<128x128xf32> -> vector<128x128xf32>
    %c0_3 = arith.constant 0 : index
    %c0_4 = arith.constant 0 : index
    %3 = vector.load %arg3[%c0_3, %c0_4] : memref<1x128xf32, #tpu.memory_space<vmem>>, vector<1x128xf32>
    %4 = vector.broadcast %3 : vector<1x128xf32> to vector<128x128xf32>
    %5 = arith.addf %2, %4 : vector<128x128xf32>
    %6 = arith.negf %5 : vector<128x128xf32>
    %7 = math.exp %6 : vector<128x128xf32>
    %cst_5 = arith.constant 1.000000e+00 : f32
    %8 = vector.broadcast %cst_5 : f32 to vector<128x128xf32>
    %9 = arith.addf %8, %7 : vector<128x128xf32>
    %10 = arith.divf %8, %9 : vector<128x128xf32>
    %11 = arith.mulf %5, %10 : vector<128x128xf32>
    %12 = arith.truncf %11 : vector<128x128xf32> to vector<128x128xbf16>
    %c0_6 = arith.constant 0 : index
    %c0_7 = arith.constant 0 : index
    %13 = vector.load %arg6[%c0_6, %c0_7] : memref<128x128xbf16, #tpu.memory_space<vmem>>, vector<128x128xbf16>
    tpu.vector_store %arg6[%c0_6, %c0_7], %12 {strides = array<i32>} : memref<128x128xbf16, #tpu.memory_space<vmem>>, vector<128x128xbf16>,
    %14 = arith.truncf %11 : vector<128x128xf32> to vector<128x128xbf16>
    %c0_8 = arith.constant 0 : index
    %c0_9 = arith.constant 0 : index
    %15 = vector.load %arg4[%c0_8, %c0_9] : memref<128x128xbf16, #tpu.memory_space<vmem>>, vector<128x128xbf16>
    %cst_10 = arith.constant dense<0.000000e+00> : vector<128x128xf32>
    %16 = tpu.matmul %14, %15, %cst_10 {dimension_numbers = #tpu.dot_dimension_numbers<[1], [0], [0], [1], [0, 0, 1, 1], [], []>} : vector<128x128xbf16>, vector<128x128xbf16>, vector<128x128xf32> -> vector<128x128xf32>
    %c0_11 = arith.constant 0 : index
    %c0_12 = arith.constant 0 : index
    %17 = vector.load %arg5[%c0_11, %c0_12] : memref<1x128xf32, #tpu.memory_space<vmem>>, vector<1x128xf32>
    %18 = vector.broadcast %17 : vector<1x128xf32> to vector<128x128xf32>
    %19 = arith.addf %16, %18 : vector<128x128xf32>
    %c0_13 = arith.constant 0 : index
    %c0_14 = arith.constant 0 : index
    %20 = vector.load %arg7[%c0_13, %c0_14] : memref<128x128xf32, #tpu.memory_space<vmem>>, vector<128x128xf32>
    tpu.vector_store %arg7[%c0_13, %c0_14], %19 {strides = array<i32>} : memref<128x128xf32, #tpu.memory_space<vmem>>, vector<128x128xf32>,
    return
  }
  func.func @transform_0(%arg0: i32) -> (i32, i32) {
    %c0_i32 = arith.constant 0 : i32
    %c0_i32_0 = arith.constant 0 : i32
    return %arg0, %c0_i32 : i32, i32
  }
  func.func @transform_1(%arg0: i32) -> (i32, i32) {
    %c0_i32 = arith.constant 0 : i32
    %c0_i32_0 = arith.constant 0 : i32
    %c0_i32_1 = arith.constant 0 : i32
    return %c0_i32, %c0_i32_0 : i32, i32
  }
  func.func @transform_2(%arg0: i32) -> (i32, i32) {
    %c0_i32 = arith.constant 0 : i32
    %c0_i32_0 = arith.constant 0 : i32
    %c0_i32_1 = arith.constant 0 : i32
    return %c0_i32, %c0_i32_0 : i32, i32
  }
  func.func @transform_3(%arg0: i32) -> (i32, i32) {
    %c0_i32 = arith.constant 0 : i32
    %c0_i32_0 = arith.constant 0 : i32
    %c0_i32_1 = arith.constant 0 : i32
    return %c0_i32, %c0_i32_0 : i32, i32
  }
  func.func @transform_4(%arg0: i32) -> (i32, i32) {
    %c0_i32 = arith.constant 0 : i32
    %c0_i32_0 = arith.constant 0 : i32
    %c0_i32_1 = arith.constant 0 : i32
    return %c0_i32, %c0_i32_0 : i32, i32
  }
  func.func @transform_5(%arg0: i32) -> (i32, i32) {
    %c0_i32 = arith.constant 0 : i32
    %c0_i32_0 = arith.constant 0 : i32
    return %arg0, %c0_i32 : i32, i32
  }
  func.func @transform_6(%arg0: i32) -> (i32, i32) {
    %c0_i32 = arith.constant 0 : i32
    %c0_i32_0 = arith.constant 0 : i32
    return %arg0, %c0_i32 : i32, i32
  }
}

module attributes {stable_mosaic.version = 11 : i64} {
  func.func @_fused_stage_kernel(%arg0: i32, %arg1: memref<32x128xbf16, #tpu.memory_space<vmem>>, %arg2: memref<128x128xbf16, #tpu.memory_space<vmem>>, %arg3: memref<1x128xf32, #tpu.memory_space<vmem>>, %arg4: memref<128x128xbf16, #tpu.memory_space<vmem>>, %arg5: memref<1x128xf32, #tpu.memory_space<vmem>>, %arg6: memref<32x128xbf16, #tpu.memory_space<vmem>>, %arg7: memref<32x128xf32, #tpu.memory_space<vmem>>) attributes {dimension_semantics = [#tpu.dimension_semantics<parallel>], iteration_bounds = array<i64: 2>, scalar_prefetch = 0 : i64, scratch_operands = 0 : i64, tpu.core_type = #tpu.core_type<tc>, window_params = [{transform_indices = @transform_0, window_bounds = array<i64: 32, 128>}, {pipeline_mode = #tpu.pipeline_mode<synchronous>, transform_indices = @transform_1, window_bounds = array<i64: 128, 128>}, {pipeline_mode = #tpu.pipeline_mode<synchronous>, transform_indices = @transform_2, window_bounds = array<i64: 1, 128>}, {pipeline_mode = #tpu.pipeline_mode<synchronous>, transform_indices = @transform_3, window_bounds = array<i64: 128, 128>}, {pipeline_mode = #tpu.pipeline_mode<synchronous>, transform_indices = @transform_4, window_bounds = array<i64: 1, 128>}, {transform_indices = @transform_5, window_bounds = array<i64: 32, 128>}, {transform_indices = @transform_6, window_bounds = array<i64: 32, 128>}]} {
    %c0 = arith.constant 0 : index
    %c0_0 = arith.constant 0 : index
    %0 = vector.load %arg1[%c0, %c0_0] : memref<32x128xbf16, #tpu.memory_space<vmem>>, vector<32x128xbf16>
    %c0_1 = arith.constant 0 : index
    %c0_2 = arith.constant 0 : index
    %1 = vector.load %arg2[%c0_1, %c0_2] : memref<128x128xbf16, #tpu.memory_space<vmem>>, vector<128x128xbf16>
    %cst = arith.constant dense<0.000000e+00> : vector<32x128xf32>
    %2 = tpu.matmul %0, %1, %cst {dimension_numbers = #tpu.dot_dimension_numbers<[1], [0], [0], [1], [0, 0, 1, 1], [], []>} : vector<32x128xbf16>, vector<128x128xbf16>, vector<32x128xf32> -> vector<32x128xf32>
    %c0_3 = arith.constant 0 : index
    %c0_4 = arith.constant 0 : index
    %3 = vector.load %arg3[%c0_3, %c0_4] : memref<1x128xf32, #tpu.memory_space<vmem>>, vector<1x128xf32>
    %4 = vector.broadcast %3 : vector<1x128xf32> to vector<32x128xf32>
    %5 = arith.addf %2, %4 : vector<32x128xf32>
    %6 = arith.negf %5 : vector<32x128xf32>
    %7 = math.exp %6 : vector<32x128xf32>
    %cst_5 = arith.constant 1.000000e+00 : f32
    %8 = vector.broadcast %cst_5 : f32 to vector<32x128xf32>
    %9 = arith.addf %8, %7 : vector<32x128xf32>
    %10 = arith.divf %8, %9 : vector<32x128xf32>
    %11 = arith.mulf %5, %10 : vector<32x128xf32>
    %12 = arith.truncf %11 : vector<32x128xf32> to vector<32x128xbf16>
    %c0_6 = arith.constant 0 : index
    %c0_7 = arith.constant 0 : index
    %13 = vector.load %arg6[%c0_6, %c0_7] : memref<32x128xbf16, #tpu.memory_space<vmem>>, vector<32x128xbf16>
    tpu.vector_store %arg6[%c0_6, %c0_7], %12 {strides = array<i32>} : memref<32x128xbf16, #tpu.memory_space<vmem>>, vector<32x128xbf16>,
    %14 = arith.truncf %11 : vector<32x128xf32> to vector<32x128xbf16>
    %c0_8 = arith.constant 0 : index
    %c0_9 = arith.constant 0 : index
    %15 = vector.load %arg4[%c0_8, %c0_9] : memref<128x128xbf16, #tpu.memory_space<vmem>>, vector<128x128xbf16>
    %cst_10 = arith.constant dense<0.000000e+00> : vector<32x128xf32>
    %16 = tpu.matmul %14, %15, %cst_10 {dimension_numbers = #tpu.dot_dimension_numbers<[1], [0], [0], [1], [0, 0, 1, 1], [], []>} : vector<32x128xbf16>, vector<128x128xbf16>, vector<32x128xf32> -> vector<32x128xf32>
    %c0_11 = arith.constant 0 : index
    %c0_12 = arith.constant 0 : index
    %17 = vector.load %arg5[%c0_11, %c0_12] : memref<1x128xf32, #tpu.memory_space<vmem>>, vector<1x128xf32>
    %18 = vector.broadcast %17 : vector<1x128xf32> to vector<32x128xf32>
    %19 = arith.addf %16, %18 : vector<32x128xf32>
    %c0_13 = arith.constant 0 : index
    %c0_14 = arith.constant 0 : index
    %20 = vector.load %arg7[%c0_13, %c0_14] : memref<32x128xf32, #tpu.memory_space<vmem>>, vector<32x128xf32>
    tpu.vector_store %arg7[%c0_13, %c0_14], %19 {strides = array<i32>} : memref<32x128xf32, #tpu.memory_space<vmem>>, vector<32x128xf32>,
    return
  }
  func.func @transform_0(%arg0: i32) -> (i32, i32) {
    %c0_i32 = arith.constant 0 : i32
    %c0_i32_0 = arith.constant 0 : i32
    return %arg0, %c0_i32 : i32, i32
  }
  func.func @transform_1(%arg0: i32) -> (i32, i32) {
    %c0_i32 = arith.constant 0 : i32
    %c0_i32_0 = arith.constant 0 : i32
    %c0_i32_1 = arith.constant 0 : i32
    return %c0_i32, %c0_i32_0 : i32, i32
  }
  func.func @transform_2(%arg0: i32) -> (i32, i32) {
    %c0_i32 = arith.constant 0 : i32
    %c0_i32_0 = arith.constant 0 : i32
    %c0_i32_1 = arith.constant 0 : i32
    return %c0_i32, %c0_i32_0 : i32, i32
  }
  func.func @transform_3(%arg0: i32) -> (i32, i32) {
    %c0_i32 = arith.constant 0 : i32
    %c0_i32_0 = arith.constant 0 : i32
    %c0_i32_1 = arith.constant 0 : i32
    return %c0_i32, %c0_i32_0 : i32, i32
  }
  func.func @transform_4(%arg0: i32) -> (i32, i32) {
    %c0_i32 = arith.constant 0 : i32
    %c0_i32_0 = arith.constant 0 : i32
    %c0_i32_1 = arith.constant 0 : i32
    return %c0_i32, %c0_i32_0 : i32, i32
  }
  func.func @transform_5(%arg0: i32) -> (i32, i32) {
    %c0_i32 = arith.constant 0 : i32
    %c0_i32_0 = arith.constant 0 : i32
    return %arg0, %c0_i32 : i32, i32
  }
  func.func @transform_6(%arg0: i32) -> (i32, i32) {
    %c0_i32 = arith.constant 0 : i32
    %c0_i32_0 = arith.constant 0 : i32
    return %arg0, %c0_i32 : i32, i32
  }
}

</mosaic_0001>

<llo_original>
// kernel: _forward_impl.4
$region0: #{_forward_impl.4}
  #allocation0 [shape = 'u32[]', space=smem, size = 0x4, offset = 0x4, fixed_abs, tag = 'smem constant byte address 0x4 - core index']
  #allocation1 [shape = 'u32[144,128]{1,0:T(1,128)}', space=vmem, size = 0x12000, scoped, tag = 'internal scratch']
  %s0 = inlined_call_operand.hbm [shape: bf16[256,128], index: 0, kind: input, shape index: {}]
  %s1 = inlined_call_operand.hbm [shape: bf16[128,128], index: 1, kind: input, shape index: {}]
  %s2 = inlined_call_operand.hbm [shape: f32[1,128], index: 2, kind: input, shape index: {}]
  %s3 = inlined_call_operand.hbm [shape: bf16[128,128], index: 3, kind: input, shape index: {}]
  %s4 = inlined_call_operand.hbm [shape: f32[1,128], index: 4, kind: input, shape index: {}]
  %s5 = inlined_call_operand.hbm [shape: bf16[256,128], index: 5, kind: output, shape index: {0}]
  %s6 = inlined_call_operand.hbm [shape: f32[256,128], index: 6, kind: output, shape index: {1}]
  %7 = xla_tuple %s5, %s6
  %s8 = sld [smem:[#allocation0]]
  $region81: #{_forward_impl.4} parent=0
    _
  %s10 = ssub.s32 1, %s8
  %s11 = scalar_select 0, %s10, %s8
  $region1: #{_forward_impl.4} parent=0
    #allocation2 [shape = 'u8[65536]{0}', space=vmem, size = 0x10000, scoped, tag = 'input window, operand 0']
    #allocation3 [shape = 's32[2]{0}', space=sflag, size = 0x8, scoped, tag = 'scoped memory for _forward_impl.4']
    #allocation4 [shape = 's32[2]{0}', space=sflag, size = 0x8, scoped, tag = 'scoped memory for _forward_impl.4']
    #allocation5 [shape = 'u8[32768]{0}', space=vmem, size = 0x8000, scoped, tag = 'input window, operand 1, single buffered']
    #allocation6 [shape = 's32[1]{0}', space=sflag, size = 0x4, scoped, tag = 'scoped memory for _forward_impl.4']
    #allocation7 [shape = 'u8[512]{0}', space=vmem, size = 0x400, scoped, tag = 'input window, operand 2, single buffered']
    #allocation8 [shape = 'u8[32768]{0}', space=vmem, size = 0x8000, scoped, tag = 'input window, operand 3, single buffered']
    #allocation9 [shape = 's32[1]{0}', space=sflag, size = 0x4, scoped, tag = 'scoped memory for _forward_impl.4']
    #allocation10 [shape = 'u8[512]{0}', space=vmem, size = 0x400, scoped, tag = 'input window, operand 4, single buffered']
    #allocation11 [shape = 'u8[65536]{0}', space=vmem, size = 0x10000, scoped, tag = 'output window, operand 0']
    #allocation12 [shape = 'u8[131072]{0}', space=vmem, size = 0x20000, scoped, tag = 'output window, operand 1']
    #allocation13 [shape = 's32[2]{0}', space=sflag, size = 0x8, scoped, tag = 'scoped memory for _forward_impl.4']
    %12 = vsyncpa [#allocation3], 0
    %s13 = scalar_lea.sflag [#allocation3], 1
    %14 = vsyncpa %s13, 0
    %15 = vsyncpa [#allocation6], 0
    %16 = vsyncpa [#allocation9], 0
    %17 = vsyncpa [#allocation4], 0
    %s18 = scalar_lea.sflag [#allocation4], 1
    %19 = vsyncpa %s18, 0
    %20 = vsyncpa [#allocation13], 0
    %s21 = scalar_lea.sflag [#allocation13], 1
    %22 = vsyncpa %s21, 0
    loop: start=0, step=1, limit=4
    $region2: #{_forward_impl.4} parent=1 // loop_pre_header
      _
    $region3: #{_forward_impl.4} parent=1 // loop_header
      %s24 = sphi 0, %s28
      %p25 = scmp.ge.s32.totalorder %s24, 4
      %s34 = sphi 0, %s36
      %s37 = sphi 0, %s34
      %s38 = sphi 0, %s37
      %s54 = sphi 0, %s38
      %s58 = sphi 0, %s58
      %s60 = sphi 0, %s58
      %s61 = sphi 0, %s60
      %s75 = sphi 0, %s61
      %s79 = sphi 0, %s79
      %s81 = sphi 0, %s79
      %s82 = sphi 0, %s81
      %s96 = sphi 0, %s82
      %s100 = sphi 0, %s100
      %s102 = sphi 0, %s100
      %s103 = sphi 0, %s102
      %s117 = sphi 0, %s103
      %s121 = sphi 0, %s121
      %s123 = sphi 0, %s121
      %s124 = sphi 0, %s123
      %s138 = sphi 0, %s124
      %s144 = sphi 0, %s146
      %s147 = sphi 0, %s144
      %s148 = sphi 0, %s147
      %s164 = sphi 0, %s148
      %s170 = sphi 0, %s172
      %s173 = sphi 0, %s170
      %s174 = sphi 0, %s173
      %s190 = sphi 0, %s174
    $region4: #{_forward_impl.4} parent=1 // loop_header_branch
      %27 = sbr.rel (%p25) target = $region8
    $region5: #{_forward_impl.4} parent=1 // loop_body
      %s29 = ssub.s32 %s24, 1
      %s30 = ssub.s32 %s24, 2
      %s31 = sadd.s32 %s24, 1
      %s32 = ssub.s32 %s24, %s31
      %p33 = scmp.eq.s32.totalorder %s32, 0
      %s35 = sadd.s32 %s34, 1
      %s36 = scalar_select %p33, %s34, %s35
      %p39 = pneg %p33
      %p40 = scmp.eq.s32.totalorder %s24, 1
      %p41 = por %p39, %p40
      %p42 = scmp.ne.s32.totalorder %s34, %s37
      %p43 = scmp.eq.s32.totalorder %s24, 0
      %p44 = por %p42, %p43
      %p45 = scmp.ne.s32.totalorder %s34, %s37
      %p46 = scmp.eq.s32.totalorder %s29, 1
      %p47 = por %p45, %p46
      %p48 = scmp.ne.s32.totalorder %s37, %s38
      %p49 = scmp.eq.s32.totalorder %s29, 0
      %p50 = por %p48, %p49
      %p51 = scmp.ne.s32.totalorder %s37, %s38
      %p52 = scmp.eq.s32.totalorder %s30, 1
      %p53 = por %p51, %p52
      %p55 = scmp.ne.s32.totalorder %s38, %s54
      %p56 = scmp.eq.s32.totalorder %s30, 0
      %p57 = por %p55, %p56
      %s59 = sadd.s32 %s58, 1
      %p62 = scmp.eq.s32.totalorder %s24, 1
      %p63 = scmp.ne.s32.totalorder %s58, %s60
      %p64 = scmp.eq.s32.totalorder %s24, 0
      %p65 = por %p63, %p64
      %p66 = scmp.ne.s32.totalorder %s58, %s60
      %p67 = scmp.eq.s32.totalorder %s29, 1
      %p68 = por %p66, %p67
      %p69 = scmp.ne.s32.totalorder %s60, %s61
      %p70 = scmp.eq.s32.totalorder %s29, 0
      %p71 = por %p69, %p70
      %p72 = scmp.ne.s32.totalorder %s60, %s61
      %p73 = scmp.eq.s32.totalorder %s30, 1
      %p74 = por %p72, %p73
      %p76 = scmp.ne.s32.totalorder %s61, %s75
      %p77 = scmp.eq.s32.totalorder %s30, 0
      %p78 = por %p76, %p77
      %s80 = sadd.s32 %s79, 1
      %p83 = scmp.eq.s32.totalorder %s24, 1
      %p84 = scmp.ne.s32.totalorder %s79, %s81
      %p85 = scmp.eq.s32.totalorder %s24, 0
      %p86 = por %p84, %p85
      %p87 = scmp.ne.s32.totalorder %s79, %s81
      %p88 = scmp.eq.s32.totalorder %s29, 1
      %p89 = por %p87, %p88
      %p90 = scmp.ne.s32.totalorder %s81, %s82
      %p91 = scmp.eq.s32.totalorder %s29, 0
      %p92 = por %p90, %p91
      %p93 = scmp.ne.s32.totalorder %s81, %s82
      %p94 = scmp.eq.s32.totalorder %s30, 1
      %p95 = por %p93, %p94
      %p97 = scmp.ne.s32.totalorder %s82, %s96
      %p98 = scmp.eq.s32.totalorder %s30, 0
      %p99 = por %p97, %p98
      %s101 = sadd.s32 %s100, 1
      %p104 = scmp.eq.s32.totalorder %s24, 1
      %p105 = scmp.ne.s32.totalorder %s100, %s102
      %p106 = scmp.eq.s32.totalorder %s24, 0
      %p107 = por %p105, %p106
      %p108 = scmp.ne.s32.totalorder %s100, %s102
      %p109 = scmp.eq.s32.totalorder %s29, 1
      %p110 = por %p108, %p109
      %p111 = scmp.ne.s32.totalorder %s102, %s103
      %p112 = scmp.eq.s32.totalorder %s29, 0
      %p113 = por %p111, %p112
      %p114 = scmp.ne.s32.totalorder %s102, %s103
      %p115 = scmp.eq.s32.totalorder %s30, 1
      %p116 = por %p114, %p115
      %p118 = scmp.ne.s32.totalorder %s103, %s117
      %p119 = scmp.eq.s32.totalorder %s30, 0
      %p120 = por %p118, %p119
      %s122 = sadd.s32 %s121, 1
      %p125 = scmp.eq.s32.totalorder %s24, 1
      %p126 = scmp.ne.s32.totalorder %s121, %s123
      %p127 = scmp.eq.s32.totalorder %s24, 0
      %p128 = por %p126, %p127
      %p129 = scmp.ne.s32.totalorder %s121, %s123
      %p130 = scmp.eq.s32.totalorder %s29, 1
      %p131 = por %p129, %p130
      %p132 = scmp.ne.s32.totalorder %s123, %s124
      %p133 = scmp.eq.s32.totalorder %s29, 0
      %p134 = por %p132, %p133
      %p135 = scmp.ne.s32.totalorder %s123, %s124
      %p136 = scmp.eq.s32.totalorder %s30, 1
      %p137 = por %p135, %p136
      %p139 = scmp.ne.s32.totalorder %s124, %s138
      %p140 = scmp.eq.s32.totalorder %s30, 0
      %p141 = por %p139, %p140
      %s142 = ssub.s32 %s24, %s31
      %p143 = scmp.eq.s32.totalorder %s142, 0
      %s145 = sadd.s32 %s144, 1
      %s146 = scalar_select %p143, %s144, %s145
      %p149 = pneg %p143
      %p150 = scmp.eq.s32.totalorder %s24, 1
      %p151 = por %p149, %p150
      %p152 = scmp.ne.s32.totalorder %s144, %s147
      %p153 = scmp.eq.s32.totalorder %s24, 0
      %p154 = por %p152, %p153
      %p155 = scmp.ne.s32.totalorder %s144, %s147
      %p156 = scmp.eq.s32.totalorder %s29, 1
      %p157 = por %p155, %p156
      %p158 = scmp.ne.s32.totalorder %s147, %s148
      %p159 = scmp.eq.s32.totalorder %s29, 0
      %p160 = por %p158, %p159
      %p161 = scmp.ne.s32.totalorder %s147, %s148
      %p162 = scmp.eq.s32.totalorder %s30, 1
      %p163 = por %p161, %p162
      %p165 = scmp.ne.s32.totalorder %s148, %s164
      %p166 = scmp.eq.s32.totalorder %s30, 0
      %p167 = por %p165, %p166
      %s168 = ssub.s32 %s24, %s31
      %p169 = scmp.eq.s32.totalorder %s168, 0
      %s171 = sadd.s32 %s170, 1
      %s172 = scalar_select %p169, %s170, %s171
      %p175 = pneg %p169
      %p176 = scmp.eq.s32.totalorder %s24, 1
      %p177 = por %p175, %p176
      %p178 = scmp.ne.s32.totalorder %s170, %s173
      %p179 = scmp.eq.s32.totalorder %s24, 0
      %p180 = por %p178, %p179
      %p181 = scmp.ne.s32.totalorder %s170, %s173
      %p182 = scmp.eq.s32.totalorder %s29, 1
      %p183 = por %p181, %p182
      %p184 = scmp.ne.s32.totalorder %s173, %s174
      %p185 = scmp.eq.s32.totalorder %s29, 0
      %p186 = por %p184, %p185
      %p187 = scmp.ne.s32.totalorder %s173, %s174
      %p188 = scmp.eq.s32.totalorder %s30, 1
      %p189 = por %p187, %p188
      %p191 = scmp.ne.s32.totalorder %s174, %s190
      %p192 = scmp.eq.s32.totalorder %s30, 0
      %p193 = por %p191, %p192
      %p194 = scmp.le.s32.totalorder 1, %s24
      %p195 = scmp.lt.s32.totalorder %s24, 3
      %p196 = pnand %p194, %p195
      %p197 = pneg %p196
      // Predicated region
      $region9: #{_forward_impl.4} parent=5 // pred_check
        _
      $region10: #{_forward_impl.4} parent=5 // pred_check_branch
        %199 = sbr.rel (%p196) target = $region12
      $region11: #{_forward_impl.4} parent=5 // pred_region
        %s200 = ssub.s32 %s24, 1
        // Predicated region
        $region13: #{_forward_impl.4} parent=11 // pred_check
          %p201 = pneg %p71
        $region14: #{_forward_impl.4} parent=11 // pred_check_branch
          %203 = sbr.rel (%p201) target = $region16
        $region15: #{_forward_impl.4} parent=11 // pred_region
          %s205 = ssub.s32 1024, 1024
          %206 = vsyncadd [#allocation6], %s205
          %s207 = sshll.u32 [#allocation5], 4
          %s208 = int_to_ptr.vmem [resolvable:$true] %s207
          %213 = dma.hbm_to_vmem [thread:$0]  %s1, 1024, %s208, [#allocation6], 64, 64, 4
        $region16: #{_forward_impl.4} parent=11 // pred_fallthru
          _
        // Predicated region
        $region17: #{_forward_impl.4} parent=11 // pred_check
          %p214 = pneg %p92
        $region18: #{_forward_impl.4} parent=11 // pred_check_branch
          %216 = sbr.rel (%p214) target = $region20
        $region19: #{_forward_impl.4} parent=11 // pred_region
          %s218 = ssub.s32 16, 16
          %219 = vsyncadd [#allocation6], %s218
          %s221 = sshll.u32 [#allocation7], 4
          %s222 = int_to_ptr.vmem [resolvable:$true] %s221
          %224 = dma.hbm_to_vmem [thread:$0]  %s2, 16, %s222, [#allocation6]
        $region20: #{_forward_impl.4} parent=11 // pred_fallthru
          _
        // Predicated region
        $region21: #{_forward_impl.4} parent=11 // pred_check
          %p225 = pneg %p113
        $region22: #{_forward_impl.4} parent=11 // pred_check_branch
          %227 = sbr.rel (%p225) target = $region24
        $region23: #{_forward_impl.4} parent=11 // pred_region
          %s229 = ssub.s32 1024, 1024
          %230 = vsyncadd [#allocation9], %s229
          %s231 = sshll.u32 [#allocation8], 4
          %s232 = int_to_ptr.vmem [resolvable:$true] %s231
          %237 = dma.hbm_to_vmem [thread:$0]  %s3, 1024, %s232, [#allocation9], 64, 64, 4
        $region24: #{_forward_impl.4} parent=11 // pred_fallthru
          _
        // Predicated region
        $region25: #{_forward_impl.4} parent=11 // pred_check
          %p238 = pneg %p134
        $region26: #{_forward_impl.4} parent=11 // pred_check_branch
          %240 = sbr.rel (%p238) target = $region28
        $region27: #{_forward_impl.4} parent=11 // pred_region
          %s242 = ssub.s32 16, 16
          %243 = vsyncadd [#allocation9], %s242
          %s245 = sshll.u32 [#allocation10], 4
          %s246 = int_to_ptr.vmem [resolvable:$true] %s245
          %248 = dma.hbm_to_vmem [thread:$0]  %s4, 16, %s246, [#allocation9]
        $region28: #{_forward_impl.4} parent=11 // pred_fallthru
          _
      $region12: #{_forward_impl.4} parent=5 // pred_fallthru
        _
      %p249 = scmp.lt.s32.totalorder %s24, 2
      // Predicated region
      $region29: #{_forward_impl.4} parent=5 // pred_check
        %p250 = pneg %p249
      $region30: #{_forward_impl.4} parent=5 // pred_check_branch
        %252 = sbr.rel (%p250) target = $region32
      $region31: #{_forward_impl.4} parent=5 // pred_region
        // Predicated region
        $region33: #{_forward_impl.4} parent=31 // pred_check
          %p253 = pneg %p44
        $region34: #{_forward_impl.4} parent=31 // pred_check_branch
          %255 = sbr.rel (%p253) target = $region36
        $region35: #{_forward_impl.4} parent=31 // pred_region
          %s256 = sand.u32 %s34, 1
          %s257 = scalar_lea.sflag [#allocation3], %s256
          %s258 = sand.u32 %s34, 1
          %s259 = smul.addr %s258, 64
          %s260 = scalar_lea.vmem [#allocation2], %s259
          %s261 = smul.u32 16, %s24
          %s263 = ssub.s32 1024, 1024
          %264 = vsyncadd %s257, %s263
          %s265 = smul.addr %s261, 64
          %s266 = scalar_lea.hbm %s0, %s265
          %s267 = sshll.u32 %s260, 4
          %s268 = int_to_ptr.vmem [resolvable:$true] %s267
          %273 = dma.hbm_to_vmem [thread:$0]  %s266, 1024, %s268, %s257, 64, 64, 4
        $region36: #{_forward_impl.4} parent=31 // pred_fallthru
          _
      $region32: #{_forward_impl.4} parent=5 // pred_fallthru
        _
      %p274 = scmp.le.s32.totalorder 1, %s24
      %p275 = scmp.lt.s32.totalorder %s24, 3
      %p276 = pnand %p274, %p275
      %p277 = pneg %p276
      // Predicated region
      $region37: #{_forward_impl.4} parent=5 // pred_check
        _
      $region38: #{_forward_impl.4} parent=5 // pred_check_branch
        %279 = sbr.rel (%p276) target = $region40
      $region39: #{_forward_impl.4} parent=5 // pred_region
        %s280 = ssub.s32 %s24, 1
        %s281 = sand.u32 %s37, 1
        %s282 = scalar_lea.sflag [#allocation3], %s281
        %s283 = sand.u32 %s37, 1
        %s284 = smul.addr %s283, 64
        %s285 = scalar_lea.vmem [#allocation2], %s284
        // Predicated region
        $region41: #{_forward_impl.4} parent=39 // pred_check
          %p286 = pneg %p50
        $region42: #{_forward_impl.4} parent=39 // pred_check_branch
          %288 = sbr.rel (%p286) target = $region44
        $region43: #{_forward_impl.4} parent=39 // pred_region
          %289 = dma.done %s282, 1024
        $region44: #{_forward_impl.4} parent=39 // pred_fallthru
          _
        // Predicated region
        $region45: #{_forward_impl.4} parent=39 // pred_check
          %p290 = pneg %p71
        $region46: #{_forward_impl.4} parent=39 // pred_check_branch
          %292 = sbr.rel (%p290) target = $region48
        $region47: #{_forward_impl.4} parent=39 // pred_region
          %293 = dma.done [#allocation6], 1024
        $region48: #{_forward_impl.4} parent=39 // pred_fallthru
          _
        // Predicated region
        $region49: #{_forward_impl.4} parent=39 // pred_check
          %p294 = pneg %p92
        $region50: #{_forward_impl.4} parent=39 // pred_check_branch
          %296 = sbr.rel (%p294) target = $region52
        $region51: #{_forward_impl.4} parent=39 // pred_region
          %297 = dma.done [#allocation6], 16
        $region52: #{_forward_impl.4} parent=39 // pred_fallthru
          _
        // Predicated region
        $region53: #{_forward_impl.4} parent=39 // pred_check
          %p298 = pneg %p113
        $region54: #{_forward_impl.4} parent=39 // pred_check_branch
          %300 = sbr.rel (%p298) target = $region56
        $region55: #{_forward_impl.4} parent=39 // pred_region
          %301 = dma.done [#allocation9], 1024
        $region56: #{_forward_impl.4} parent=39 // pred_fallthru
          _
        // Predicated region
        $region57: #{_forward_impl.4} parent=39 // pred_check
          %p302 = pneg %p134
        $region58: #{_forward_impl.4} parent=39 // pred_check_branch
          %304 = sbr.rel (%p302) target = $region60
        $region59: #{_forward_impl.4} parent=39 // pred_region
          %305 = dma.done [#allocation9], 16
        $region60: #{_forward_impl.4} parent=39 // pred_fallthru
          _
        %s306 = sand.u32 %s37, 1
        %s307 = scalar_lea.sflag [#allocation3], %s306
        %s308 = sand.u32 %s37, 1
        %s309 = smul.addr %s308, 64
        %s310 = scalar_lea.vmem [#allocation2], %s309
        %p311 = pneg %p50
        %p312 = pneg %p47
        %p313 = pneg %p71
        %p314 = pneg %p68
        %p315 = pneg %p92
        %p316 = pneg %p89
        %p317 = pneg %p113
        %p318 = pneg %p110
        %p319 = pneg %p134
        %p320 = pneg %p131
        %p321 = pneg %p160
        %p322 = pneg %p157
        %s323 = sand.u32 %s147, 1
        %s324 = scalar_lea.sflag [#allocation4], %s323
        %s325 = sand.u32 %s147, 1
        %s326 = smul.addr %s325, 64
        %s327 = scalar_lea.vmem [#allocation11], %s326
        %p328 = pneg %p186
        %p329 = pneg %p183
        %s330 = sand.u32 %s173, 1
        %s331 = scalar_lea.sflag [#allocation13], %s330
        %s332 = sand.u32 %s173, 1
        %s333 = smul.addr %s332, 128
        %s334 = scalar_lea.vmem [#allocation12], %s333
        %s335 = smul.u32 16, %s29
        %s336 = smul.u32 16, %s29
        %s337 = smul.u32 16, %s29
        %v339 = vld [vmem:[%s285] sm:$0xf]
        %v340 = vld [vmem:[%s285 + $0x4] sm:$0xf]
        %v341 = vld [vmem:[%s285 + $0x8] sm:$0xf]
        %v342 = vld [vmem:[%s285 + $0xc] sm:$0xf]
        %v343 = vld [vmem:[%s285 + $0x10] sm:$0xf]
        %v344 = vld [vmem:[%s285 + $0x14] sm:$0xf]
        %v345 = vld [vmem:[%s285 + $0x18] sm:$0xf]
        %v346 = vld [vmem:[%s285 + $0x1c] sm:$0xf]
        %v347 = vld [vmem:[%s285 + $0x20] sm:$0xf]
        %v348 = vld [vmem:[%s285 + $0x24] sm:$0xf]
        %v349 = vld [vmem:[%s285 + $0x28] sm:$0xf]
        %v350 = vld [vmem:[%s285 + $0x2c] sm:$0xf]
        %v351 = vld [vmem:[%s285 + $0x30] sm:$0xf]
        %v352 = vld [vmem:[%s285 + $0x34] sm:$0xf]
        %v353 = vld [vmem:[%s285 + $0x38] sm:$0xf]
        %v354 = vld [vmem:[%s285 + $0x3c] sm:$0xf]
        %v355 = vld [vmem:[#allocation5] sm:$0xf]
        %v356 = vld [vmem:[#allocation5 + $0x4] sm:$0xf]
        %v357 = vld [vmem:[#allocation5 + $0x8] sm:$0xf]
        %v358 = vld [vmem:[#allocation5 + $0xc] sm:$0xf]
        %v359 = vld [vmem:[#allocation5 + $0x10] sm:$0xf]
        %v360 = vld [vmem:[#allocation5 + $0x14] sm:$0xf]
        %v361 = vld [vmem:[#allocation5 + $0x18] sm:$0xf]
        %v362 = vld [vmem:[#allocation5 + $0x1c] sm:$0xf]
        %v363 = vld [vmem:[#allocation5 + $0x20] sm:$0xf]
        %v364 = vld [vmem:[#allocation5 + $0x24] sm:$0xf]
        %v365 = vld [vmem:[#allocation5 + $0x28] sm:$0xf]
        %v366 = vld [vmem:[#allocation5 + $0x2c] sm:$0xf]
        %v367 = vld [vmem:[#allocation5 + $0x30] sm:$0xf]
        %v368 = vld [vmem:[#allocation5 + $0x34] sm:$0xf]
        %v369 = vld [vmem:[#allocation5 + $0x38] sm:$0xf]
        %v370 = vld [vmem:[#allocation5 + $0x3c] sm:$0xf]
        %v371 = vld [vmem:[#allocation7] sm:$0x1]
        %v373 = vlaneseq
        %v374 = vshrl.u32 %v373, 7
        %v375 = vsub.s32 0, %v374
        %v376 = vrot.slane %v371, %v375
        %v394 = vunpack.c.l.b16 %v339
        %v395 = vunpack.c.l.b16 %v340
        %v396 = vunpack.c.l.b16 %v341
        %v397 = vunpack.c.l.b16 %v342
        %v398 = vunpack.c.l.b16 %v343
        %v399 = vunpack.c.l.b16 %v344
        %v400 = vunpack.c.l.b16 %v345
        %v401 = vunpack.c.l.b16 %v346
        %v402 = vunpack.c.l.b16 %v347
        %v403 = vunpack.c.l.b16 %v348
        %v404 = vunpack.c.l.b16 %v349
        %v405 = vunpack.c.l.b16 %v350
        %v406 = vunpack.c.l.b16 %v351
        %v407 = vunpack.c.l.b16 %v352
        %v408 = vunpack.c.l.b16 %v353
        %v409 = vunpack.c.l.b16 %v354
        %v410 = vpack.c.b16 %v395, %v394
        %v411 = vpack.c.b16 %v397, %v396
        %v412 = vpack.c.b16 %v399, %v398
        %v413 = vpack.c.b16 %v401, %v400
        %v414 = vpack.c.b16 %v403, %v402
        %v415 = vpack.c.b16 %v405, %v404
        %v416 = vpack.c.b16 %v407, %v406
        %v417 = vpack.c.b16 %v409, %v408
        %v442 = vunpack.c.l.b16 %v355
        %v443 = vunpack.c.l.b16 %v356
        %v444 = vunpack.c.l.b16 %v357
        %v445 = vunpack.c.l.b16 %v358
        %v446 = vunpack.c.l.b16 %v359
        %v447 = vunpack.c.l.b16 %v360
        %v448 = vunpack.c.l.b16 %v361
        %v449 = vunpack.c.l.b16 %v362
        %v450 = vunpack.c.l.b16 %v363
        %v451 = vunpack.c.l.b16 %v364
        %v452 = vunpack.c.l.b16 %v365
        %v453 = vunpack.c.l.b16 %v366
        %v454 = vunpack.c.l.b16 %v367
        %v455 = vunpack.c.l.b16 %v368
        %v456 = vunpack.c.l.b16 %v369
        %v457 = vunpack.c.l.b16 %v370
        %v458 = vpack.c.b16 %v443, %v442
        %v459 = vpack.c.b16 %v445, %v444
        %v460 = vpack.c.b16 %v447, %v446
        %v461 = vpack.c.b16 %v449, %v448
        %v462 = vpack.c.b16 %v451, %v450
        %v463 = vpack.c.b16 %v453, %v452
        %v464 = vpack.c.b16 %v455, %v454
        %v465 = vpack.c.b16 %v457, %v456
        %474 = vmatprep.subr.bf16.mxu0 0
        %475 = vmatpush1.bf16.msra.mxu0 %v458
        %476 = vmatprep.subr.bf16.mxu0 0
        %477 = vmatpush1.bf16.msra.mxu0 %v459
        %478 = vmatprep.subr.bf16.mxu0 0
        %479 = vmatpush1.bf16.msra.mxu0 %v460
        %480 = vmatprep.subr.bf16.mxu0 0
        %481 = vmatpush1.bf16.msra.mxu0 %v461
        %482 = vmatprep.subr.bf16.mxu0 0
        %483 = vmatpush1.bf16.msra.mxu0 %v462
        %484 = vmatprep.subr.bf16.mxu0 0
        %485 = vmatpush1.bf16.msra.mxu0 %v463
        %486 = vmatprep.subr.bf16.mxu0 0
        %487 = vmatpush1.bf16.msra.mxu0 %v464
        %488 = vmatprep.subr.bf16.mxu0 0
        %489 = vmatpush1.bf16.msra.mxu0 %v465
        %490 = vmatprep.subr.bf16.mxu0 0
        %491 = vmatpush1.bf16.msra.mxu0 0
        %492 = vmatprep.subr.bf16.mxu0 0
        %493 = vmatpush1.bf16.msra.mxu0 0
        %494 = vmatprep.subr.bf16.mxu0 0
        %495 = vmatpush1.bf16.msra.mxu0 0
        %496 = vmatprep.subr.bf16.mxu0 0
        %497 = vmatpush1.bf16.msra.mxu0 0
        %498 = vmatprep.subr.bf16.mxu0 0
        %499 = vmatpush1.bf16.msra.mxu0 0
        %500 = vmatprep.subr.bf16.mxu0 0
        %501 = vmatpush1.bf16.msra.mxu0 0
        %502 = vmatprep.subr.bf16.mxu0 0
        %503 = vmatpush1.bf16.msra.mxu0 0
        %504 = vmatprep.subr.bf16.mxu0 0
        %505 = vmatpush1.bf16.msra.mxu0 0
        %506 = vmatprep.mubr.bf16.mxu0 0
        %507 = vmatmul.mubr.bf16.gmra.mrb[0].mxu0 %v410
        %v508 = vpop.f32.mrb[0].mxu0
        %v509 = vadd.f32 %v376, %v508
        %v510 = vpop.f32.mrb[0].mxu0
        %v511 = vpop.f32.mrb[0].mxu0
        %v512 = vadd.f32 %v376, %v511
        %v513 = vpop.f32.mrb[0].mxu0
        %514 = vmatprep.mubr.bf16.mxu0 0
        %515 = vmatmul.mubr.bf16.gmra.mrb[0].mxu0 %v411
        %v516 = vpop.f32.mrb[0].mxu0
        %v517 = vadd.f32 %v376, %v516
        %v518 = vpop.f32.mrb[0].mxu0
        %v519 = vpop.f32.mrb[0].mxu0
        %v520 = vadd.f32 %v376, %v519
        %v521 = vpop.f32.mrb[0].mxu0
        %522 = vmatprep.mubr.bf16.mxu0 0
        %523 = vmatmul.mubr.bf16.gmra.mrb[0].mxu0 %v412
        %v524 = vpop.f32.mrb[0].mxu0
        %v525 = vadd.f32 %v376, %v524
        %v526 = vpop.f32.mrb[0].mxu0
        %v527 = vpop.f32.mrb[0].mxu0
        %v528 = vadd.f32 %v376, %v527
        %v529 = vpop.f32.mrb[0].mxu0
        %530 = vmatprep.mubr.bf16.mxu0 0
        %531 = vmatmul.mubr.bf16.gmra.mrb[0].mxu0 %v413
        %v532 = vpop.f32.mrb[0].mxu0
        %v533 = vadd.f32 %v376, %v532
        %v534 = vpop.f32.mrb[0].mxu0
        %v535 = vpop.f32.mrb[0].mxu0
        %v536 = vadd.f32 %v376, %v535
        %v537 = vpop.f32.mrb[0].mxu0
        %538 = vmatprep.mubr.bf16.mxu0 0
        %539 = vmatmul.mubr.bf16.gmra.mrb[0].mxu0 %v414
        %v540 = vpop.f32.mrb[0].mxu0
        %v541 = vadd.f32 %v376, %v540
        %v542 = vpop.f32.mrb[0].mxu0
        %v543 = vpop.f32.mrb[0].mxu0
        %v544 = vadd.f32 %v376, %v543
        %v545 = vpop.f32.mrb[0].mxu0
        %546 = vmatprep.mubr.bf16.mxu0 0
        %547 = vmatmul.mubr.bf16.gmra.mrb[0].mxu0 %v415
        %v548 = vpop.f32.mrb[0].mxu0
        %v549 = vadd.f32 %v376, %v548
        %v550 = vpop.f32.mrb[0].mxu0
        %v551 = vpop.f32.mrb[0].mxu0
        %v552 = vadd.f32 %v376, %v551
        %v553 = vpop.f32.mrb[0].mxu0
        %554 = vmatprep.mubr.bf16.mxu0 0
        %555 = vmatmul.mubr.bf16.gmra.mrb[0].mxu0 %v416
        %v556 = vpop.f32.mrb[0].mxu0
        %v557 = vadd.f32 %v376, %v556
        %v558 = vpop.f32.mrb[0].mxu0
        %v559 = vpop.f32.mrb[0].mxu0
        %v560 = vadd.f32 %v376, %v559
        %v561 = vpop.f32.mrb[0].mxu0
        %562 = vmatprep.mubr.bf16.mxu0 0
        %563 = vmatmul.mubr.bf16.gmra.mrb[0].mxu0 %v417
        %v564 = vpop.f32.mrb[0].mxu0
        %v565 = vadd.f32 %v376, %v564
        %v566 = vpop.f32.mrb[0].mxu0
        %v567 = vpop.f32.mrb[0].mxu0
        %v568 = vadd.f32 %v376, %v567
        %v569 = vpop.f32.mrb[0].mxu0
        %570 = vdwg.mxu0
        %v571 = vxor.u32 %v509, 2147483648
        %v572 = vxor.u32 %v512, 2147483648
        %v573 = vxor.u32 %v517, 2147483648
        %v574 = vxor.u32 %v520, 2147483648
        %v575 = vxor.u32 %v525, 2147483648
        %v576 = vxor.u32 %v528, 2147483648
        %v577 = vxor.u32 %v533, 2147483648
        %v578 = vxor.u32 %v536, 2147483648
        %v579 = vxor.u32 %v541, 2147483648
        %v580 = vxor.u32 %v544, 2147483648
        %v581 = vxor.u32 %v549, 2147483648
        %v582 = vxor.u32 %v552, 2147483648
        %v583 = vxor.u32 %v557, 2147483648
        %v584 = vxor.u32 %v560, 2147483648
        %v585 = vxor.u32 %v565, 2147483648
        %v586 = vxor.u32 %v568, 2147483648
        %v587 = vmul.f32 %v571, 1.442695
        %v588 = vpow.pop %v587
        %v589 = vmul.f32 %v572, 1.442695
        %v590 = vpow.pop %v589
        %v591 = vmul.f32 %v573, 1.442695
        %v592 = vpow.pop %v591
        %v593 = vmul.f32 %v574, 1.442695
        %v594 = vpow.pop %v593
        %v595 = vmul.f32 %v575, 1.442695
        %v596 = vpow.pop %v595
        %v597 = vmul.f32 %v576, 1.442695
        %v598 = vpow.pop %v597
        %v599 = vmul.f32 %v577, 1.442695
        %v600 = vpow.pop %v599
        %v601 = vmul.f32 %v578, 1.442695
        %v602 = vpow.pop %v601
        %v603 = vmul.f32 %v579, 1.442695
        %v604 = vpow.pop %v603
        %v605 = vmul.f32 %v580, 1.442695
        %v606 = vpow.pop %v605
        %v607 = vmul.f32 %v581, 1.442695
        %v608 = vpow.pop %v607
        %v609 = vmul.f32 %v582, 1.442695
        %v610 = vpow.pop %v609
        %v611 = vmul.f32 %v583, 1.442695
        %v612 = vpow.pop %v611
        %v613 = vmul.f32 %v584, 1.442695
        %v614 = vpow.pop %v613
        %v615 = vmul.f32 %v585, 1.442695
        %v616 = vpow.pop %v615
        %v617 = vmul.f32 %v586, 1.442695
        %v618 = vpow.pop %v617
        %v619 = vadd.f32 %v588, 1.0
        %v620 = vadd.f32 %v590, 1.0
        %v621 = vadd.f32 %v592, 1.0
        %v622 = vadd.f32 %v594, 1.0
        %v623 = vadd.f32 %v596, 1.0
        %v624 = vadd.f32 %v598, 1.0
        %v625 = vadd.f32 %v600, 1.0
        %v626 = vadd.f32 %v602, 1.0
        %v627 = vadd.f32 %v604, 1.0
        %v628 = vadd.f32 %v606, 1.0
        %v629 = vadd.f32 %v608, 1.0
        %v630 = vadd.f32 %v610, 1.0
        %v631 = vadd.f32 %v612, 1.0
        %v632 = vadd.f32 %v614, 1.0
        %v633 = vadd.f32 %v616, 1.0
        %v634 = vadd.f32 %v618, 1.0
        %v635 = vrcp.pop %v619
        %v636 = vmul.f32 1.0, %v635
        %v637 = vrcp.pop %v620
        %v638 = vmul.f32 1.0, %v637
        %v639 = vrcp.pop %v621
        %v640 = vmul.f32 1.0, %v639
        %v641 = vrcp.pop %v622
        %v642 = vmul.f32 1.0, %v641
        %v643 = vrcp.pop %v623
        %v644 = vmul.f32 1.0, %v643
        %v645 = vrcp.pop %v624
        %v646 = vmul.f32 1.0, %v645
        %v647 = vrcp.pop %v625
        %v648 = vmul.f32 1.0, %v647
        %v649 = vrcp.pop %v626
        %v650 = vmul.f32 1.0, %v649
        %v651 = vrcp.pop %v627
        %v652 = vmul.f32 1.0, %v651
        %v653 = vrcp.pop %v628
        %v654 = vmul.f32 1.0, %v653
        %v655 = vrcp.pop %v629
        %v656 = vmul.f32 1.0, %v655
        %v657 = vrcp.pop %v630
        %v658 = vmul.f32 1.0, %v657
        %v659 = vrcp.pop %v631
        %v660 = vmul.f32 1.0, %v659
        %v661 = vrcp.pop %v632
        %v662 = vmul.f32 1.0, %v661
        %v663 = vrcp.pop %v633
        %v664 = vmul.f32 1.0, %v663
        %v665 = vrcp.pop %v634
        %v666 = vmul.f32 1.0, %v665
        %v667 = vmul.f32 %v509, %v636
        %v668 = vmul.f32 %v512, %v638
        %v669 = vmul.f32 %v517, %v640
        %v670 = vmul.f32 %v520, %v642
        %v671 = vmul.f32 %v525, %v644
        %v672 = vmul.f32 %v528, %v646
        %v673 = vmul.f32 %v533, %v648
        %v674 = vmul.f32 %v536, %v650
        %v675 = vmul.f32 %v541, %v652
        %v676 = vmul.f32 %v544, %v654
        %v677 = vmul.f32 %v549, %v656
        %v678 = vmul.f32 %v552, %v658
        %v679 = vmul.f32 %v557, %v660
        %v680 = vmul.f32 %v560, %v662
        %v681 = vmul.f32 %v565, %v664
        %v682 = vmul.f32 %v568, %v666
        %v683 = vpack.c.bf16 %v668, %v667
        %v684 = vpack.c.bf16 %v670, %v669
        %v685 = vpack.c.bf16 %v672, %v671
        %v686 = vpack.c.bf16 %v674, %v673
        %v687 = vpack.c.bf16 %v676, %v675
        %v688 = vpack.c.bf16 %v678, %v677
        %v689 = vpack.c.bf16 %v680, %v679
        %v690 = vpack.c.bf16 %v682, %v681
        %v699 = vunpack.c.l.b16 %v683
        %v700 = vunpack.c.h.b16 %v683
        %v701 = vunpack.c.l.b16 %v684
        %v702 = vunpack.c.h.b16 %v684
        %v703 = vunpack.c.l.b16 %v685
        %v704 = vunpack.c.h.b16 %v685
        %v705 = vunpack.c.l.b16 %v686
        %v706 = vunpack.c.h.b16 %v686
        %v707 = vunpack.c.l.b16 %v687
        %v708 = vunpack.c.h.b16 %v687
        %v709 = vunpack.c.l.b16 %v688
        %v710 = vunpack.c.h.b16 %v688
        %v711 = vunpack.c.l.b16 %v689
        %v712 = vunpack.c.h.b16 %v689
        %v713 = vunpack.c.l.b16 %v690
        %v714 = vunpack.c.h.b16 %v690
        %v715 = vpack.c.b16 %v699, %v699
        %v716 = vpack.c.b16 %v700, %v700
        %v717 = vpack.c.b16 %v701, %v701
        %v718 = vpack.c.b16 %v702, %v702
        %v719 = vpack.c.b16 %v703, %v703
        %v720 = vpack.c.b16 %v704, %v704
        %v721 = vpack.c.b16 %v705, %v705
        %v722 = vpack.c.b16 %v706, %v706
        %v723 = vpack.c.b16 %v707, %v707
        %v724 = vpack.c.b16 %v708, %v708
        %v725 = vpack.c.b16 %v709, %v709
        %v726 = vpack.c.b16 %v710, %v710
        %v727 = vpack.c.b16 %v711, %v711
        %v728 = vpack.c.b16 %v712, %v712
        %v729 = vpack.c.b16 %v713, %v713
        %v730 = vpack.c.b16 %v714, %v714
        %747 = vst [vmem:[%s327] sm:$0xf] %v715
        %748 = vst [vmem:[%s327 + $0x4] sm:$0xf] %v716
        %749 = vst [vmem:[%s327 + $0x8] sm:$0xf] %v717
        %750 = vst [vmem:[%s327 + $0xc] sm:$0xf] %v718
        %751 = vst [vmem:[%s327 + $0x10] sm:$0xf] %v719
        %752 = vst [vmem:[%s327 + $0x14] sm:$0xf] %v720
        %753 = vst [vmem:[%s327 + $0x18] sm:$0xf] %v721
        %754 = vst [vmem:[%s327 + $0x1c] sm:$0xf] %v722
        %755 = vst [vmem:[%s327 + $0x20] sm:$0xf] %v723
        %756 = vst [vmem:[%s327 + $0x24] sm:$0xf] %v724
        %757 = vst [vmem:[%s327 + $0x28] sm:$0xf] %v725
        %758 = vst [vmem:[%s327 + $0x2c] sm:$0xf] %v726
        %759 = vst [vmem:[%s327 + $0x30] sm:$0xf] %v727
        %760 = vst [vmem:[%s327 + $0x34] sm:$0xf] %v728
        %761 = vst [vmem:[%s327 + $0x38] sm:$0xf] %v729
        %762 = vst [vmem:[%s327 + $0x3c] sm:$0xf] %v730
        %v763 = vld [vmem:[#allocation8] sm:$0xf]
        %v764 = vld [vmem:[#allocation8 + $0x4] sm:$0xf]
        %v765 = vld [vmem:[#allocation8 + $0x8] sm:$0xf]
        %v766 = vld [vmem:[#allocation8 + $0xc] sm:$0xf]
        %v767 = vld [vmem:[#allocation8 + $0x10] sm:$0xf]
        %v768 = vld [vmem:[#allocation8 + $0x14] sm:$0xf]
        %v769 = vld [vmem:[#allocation8 + $0x18] sm:$0xf]
        %v770 = vld [vmem:[#allocation8 + $0x1c] sm:$0xf]
        %v771 = vld [vmem:[#allocation8 + $0x20] sm:$0xf]
        %v772 = vld [vmem:[#allocation8 + $0x24] sm:$0xf]
        %v773 = vld [vmem:[#allocation8 + $0x28] sm:$0xf]
        %v774 = vld [vmem:[#allocation8 + $0x2c] sm:$0xf]
        %v775 = vld [vmem:[#allocation8 + $0x30] sm:$0xf]
        %v776 = vld [vmem:[#allocation8 + $0x34] sm:$0xf]
        %v777 = vld [vmem:[#allocation8 + $0x38] sm:$0xf]
        %v778 = vld [vmem:[#allocation8 + $0x3c] sm:$0xf]
        %v779 = vld [vmem:[#allocation10] sm:$0x1]
        %v781 = vlaneseq
        %v782 = vshrl.u32 %v781, 7
        %v783 = vsub.s32 0, %v782
        %v784 = vrot.slane %v779, %v783
        %v802 = vunpack.c.l.b16 %v763
        %v803 = vunpack.c.l.b16 %v764
        %v804 = vunpack.c.l.b16 %v765
        %v805 = vunpack.c.l.b16 %v766
        %v806 = vunpack.c.l.b16 %v767
        %v807 = vunpack.c.l.b16 %v768
        %v808 = vunpack.c.l.b16 %v769
        %v809 = vunpack.c.l.b16 %v770
        %v810 = vunpack.c.l.b16 %v771
        %v811 = vunpack.c.l.b16 %v772
        %v812 = vunpack.c.l.b16 %v773
        %v813 = vunpack.c.l.b16 %v774
        %v814 = vunpack.c.l.b16 %v775
        %v815 = vunpack.c.l.b16 %v776
        %v816 = vunpack.c.l.b16 %v777
        %v817 = vunpack.c.l.b16 %v778
        %v818 = vpack.c.b16 %v803, %v802
        %v819 = vpack.c.b16 %v805, %v804
        %v820 = vpack.c.b16 %v807, %v806
        %v821 = vpack.c.b16 %v809, %v808
        %v822 = vpack.c.b16 %v811, %v810
        %v823 = vpack.c.b16 %v813, %v812
        %v824 = vpack.c.b16 %v815, %v814
        %v825 = vpack.c.b16 %v817, %v816
        %834 = vmatprep.subr.bf16.mxu0 0
        %835 = vmatpush1.bf16.msra.mxu0 %v818
        %836 = vmatprep.subr.bf16.mxu0 0
        %837 = vmatpush1.bf16.msra.mxu0 %v819
        %838 = vmatprep.subr.bf16.mxu0 0
        %839 = vmatpush1.bf16.msra.mxu0 %v820
        %840 = vmatprep.subr.bf16.mxu0 0
        %841 = vmatpush1.bf16.msra.mxu0 %v821
        %842 = vmatprep.subr.bf16.mxu0 0
        %843 = vmatpush1.bf16.msra.mxu0 %v822
        %844 = vmatprep.subr.bf16.mxu0 0
        %845 = vmatpush1.bf16.msra.mxu0 %v823
        %846 = vmatprep.subr.bf16.mxu0 0
        %847 = vmatpush1.bf16.msra.mxu0 %v824
        %848 = vmatprep.subr.bf16.mxu0 0
        %849 = vmatpush1.bf16.msra.mxu0 %v825
        %850 = vmatprep.subr.bf16.mxu0 0
        %851 = vmatpush1.bf16.msra.mxu0 0
        %852 = vmatprep.subr.bf16.mxu0 0
        %853 = vmatpush1.bf16.msra.mxu0 0
        %854 = vmatprep.subr.bf16.mxu0 0
        %855 = vmatpush1.bf16.msra.mxu0 0
        %856 = vmatprep.subr.bf16.mxu0 0
        %857 = vmatpush1.bf16.msra.mxu0 0
        %858 = vmatprep.subr.bf16.mxu0 0
        %859 = vmatpush1.bf16.msra.mxu0 0
        %860 = vmatprep.subr.bf16.mxu0 0
        %861 = vmatpush1.bf16.msra.mxu0 0
        %862 = vmatprep.subr.bf16.mxu0 0
        %863 = vmatpush1.bf16.msra.mxu0 0
        %864 = vmatprep.subr.bf16.mxu0 0
        %865 = vmatpush1.bf16.msra.mxu0 0
        %866 = vmatprep.mubr.bf16.mxu0 0
        %867 = vmatmul.mubr.bf16.gmra.mrb[0].mxu0 %v683
        %v868 = vpop.f32.mrb[0].mxu0
        %v869 = vadd.f32 %v784, %v868
        %v870 = vpop.f32.mrb[0].mxu0
        %v871 = vpop.f32.mrb[0].mxu0
        %v872 = vadd.f32 %v784, %v871
        %v873 = vpop.f32.mrb[0].mxu0
        %874 = vmatprep.mubr.bf16.mxu0 0
        %875 = vmatmul.mubr.bf16.gmra.mrb[0].mxu0 %v684
        %v876 = vpop.f32.mrb[0].mxu0
        %v877 = vadd.f32 %v784, %v876
        %v878 = vpop.f32.mrb[0].mxu0
        %v879 = vpop.f32.mrb[0].mxu0
        %v880 = vadd.f32 %v784, %v879
        %v881 = vpop.f32.mrb[0].mxu0
        %882 = vmatprep.mubr.bf16.mxu0 0
        %883 = vmatmul.mubr.bf16.gmra.mrb[0].mxu0 %v685
        %v884 = vpop.f32.mrb[0].mxu0
        %v885 = vadd.f32 %v784, %v884
        %v886 = vpop.f32.mrb[0].mxu0
        %v887 = vpop.f32.mrb[0].mxu0
        %v888 = vadd.f32 %v784, %v887
        %v889 = vpop.f32.mrb[0].mxu0
        %890 = vmatprep.mubr.bf16.mxu0 0
        %891 = vmatmul.mubr.bf16.gmra.mrb[0].mxu0 %v686
        %v892 = vpop.f32.mrb[0].mxu0
        %v893 = vadd.f32 %v784, %v892
        %v894 = vpop.f32.mrb[0].mxu0
        %v895 = vpop.f32.mrb[0].mxu0
        %v896 = vadd.f32 %v784, %v895
        %v897 = vpop.f32.mrb[0].mxu0
        %898 = vmatprep.mubr.bf16.mxu0 0
        %899 = vmatmul.mubr.bf16.gmra.mrb[0].mxu0 %v687
        %v900 = vpop.f32.mrb[0].mxu0
        %v901 = vadd.f32 %v784, %v900
        %v902 = vpop.f32.mrb[0].mxu0
        %v903 = vpop.f32.mrb[0].mxu0
        %v904 = vadd.f32 %v784, %v903
        %v905 = vpop.f32.mrb[0].mxu0
        %906 = vmatprep.mubr.bf16.mxu0 0
        %907 = vmatmul.mubr.bf16.gmra.mrb[0].mxu0 %v688
        %v908 = vpop.f32.mrb[0].mxu0
        %v909 = vadd.f32 %v784, %v908
        %v910 = vpop.f32.mrb[0].mxu0
        %v911 = vpop.f32.mrb[0].mxu0
        %v912 = vadd.f32 %v784, %v911
        %v913 = vpop.f32.mrb[0].mxu0
        %914 = vmatprep.mubr.bf16.mxu0 0
        %915 = vmatmul.mubr.bf16.gmra.mrb[0].mxu0 %v689
        %v916 = vpop.f32.mrb[0].mxu0
        %v917 = vadd.f32 %v784, %v916
        %v918 = vpop.f32.mrb[0].mxu0
        %v919 = vpop.f32.mrb[0].mxu0
        %v920 = vadd.f32 %v784, %v919
        %v921 = vpop.f32.mrb[0].mxu0
        %922 = vmatprep.mubr.bf16.mxu0 0
        %923 = vmatmul.mubr.bf16.gmra.mrb[0].mxu0 %v690
        %v924 = vpop.f32.mrb[0].mxu0
        %v925 = vadd.f32 %v784, %v924
        %v926 = vpop.f32.mrb[0].mxu0
        %v927 = vpop.f32.mrb[0].mxu0
        %v928 = vadd.f32 %v784, %v927
        %v929 = vpop.f32.mrb[0].mxu0
        %930 = vdwg.mxu0
        %931 = vst [vmem:[%s334] sm:$0xff] %v869
        %932 = vst [vmem:[%s334 + $0x8] sm:$0xff] %v872
        %933 = vst [vmem:[%s334 + $0x10] sm:$0xff] %v877
        %934 = vst [vmem:[%s334 + $0x18] sm:$0xff] %v880
        %935 = vst [vmem:[%s334 + $0x20] sm:$0xff] %v885
        %936 = vst [vmem:[%s334 + $0x28] sm:$0xff] %v888
        %937 = vst [vmem:[%s334 + $0x30] sm:$0xff] %v893
        %938 = vst [vmem:[%s334 + $0x38] sm:$0xff] %v896
        %939 = vst [vmem:[%s334 + $0x40] sm:$0xff] %v901
        %940 = vst [vmem:[%s334 + $0x48] sm:$0xff] %v904
        %941 = vst [vmem:[%s334 + $0x50] sm:$0xff] %v909
        %942 = vst [vmem:[%s334 + $0x58] sm:$0xff] %v912
        %943 = vst [vmem:[%s334 + $0x60] sm:$0xff] %v917
        %944 = vst [vmem:[%s334 + $0x68] sm:$0xff] %v920
        %945 = vst [vmem:[%s334 + $0x70] sm:$0xff] %v925
        %946 = vst [vmem:[%s334 + $0x78] sm:$0xff] %v928
        %s947 = sand.u32 %s147, 1
        %s948 = scalar_lea.sflag [#allocation4], %s947
        %s949 = sand.u32 %s147, 1
        %s950 = smul.addr %s949, 64
        %s951 = scalar_lea.vmem [#allocation11], %s950
        %s952 = sand.u32 %s173, 1
        %s953 = scalar_lea.sflag [#allocation13], %s952
        %s954 = sand.u32 %s173, 1
        %s955 = smul.addr %s954, 128
        %s956 = scalar_lea.vmem [#allocation12], %s955
        // Predicated region
        $region61: #{_forward_impl.4} parent=39 // pred_check
          %p957 = pneg %p157
        $region62: #{_forward_impl.4} parent=39 // pred_check_branch
          %959 = sbr.rel (%p957) target = $region64
        $region63: #{_forward_impl.4} parent=39 // pred_region
          %s960 = smul.u32 16, %s29
          %s962 = ssub.s32 1024, 1024
          %963 = vsyncadd %s948, %s962
          %s964 = smul.addr %s960, 64
          %s965 = scalar_lea.hbm %s5, %s964
          %s966 = sshll.u32 %s951, 4
          %s967 = int_to_ptr.vmem [resolvable:$true] %s966
          %972 = dma.vmem_to_hbm [thread:$0]  %s967, 1024, %s965, %s948, 64, 64, 4
        $region64: #{_forward_impl.4} parent=39 // pred_fallthru
          _
        // Predicated region
        $region65: #{_forward_impl.4} parent=39 // pred_check
          %p973 = pneg %p183
        $region66: #{_forward_impl.4} parent=39 // pred_check_branch
          %975 = sbr.rel (%p973) target = $region68
        $region67: #{_forward_impl.4} parent=39 // pred_region
          %s976 = smul.u32 16, %s29
          %s978 = ssub.s32 2048, 2048
          %979 = vsyncadd %s953, %s978
          %s980 = smul.addr %s976, 128
          %s981 = scalar_lea.hbm %s6, %s980
          %s982 = sshll.u32 %s956, 4
          %s983 = int_to_ptr.vmem [resolvable:$true] %s982
          %988 = dma.vmem_to_hbm [thread:$0]  %s983, 2048, %s981, %s953, 128, 128, 8
        $region68: #{_forward_impl.4} parent=39 // pred_fallthru
          _
      $region40: #{_forward_impl.4} parent=5 // pred_fallthru
        _
      %p989 = scmp.le.s32.totalorder 2, %s24
      // Predicated region
      $region69: #{_forward_impl.4} parent=5 // pred_check
        %p990 = pneg %p989
      $region70: #{_forward_impl.4} parent=5 // pred_check_branch
        %992 = sbr.rel (%p990) target = $region72
      $region71: #{_forward_impl.4} parent=5 // pred_region
        %s993 = ssub.s32 %s24, 2
        // Predicated region
        $region73: #{_forward_impl.4} parent=71 // pred_check
          %p994 = pneg %p163
        $region74: #{_forward_impl.4} parent=71 // pred_check_branch
          %996 = sbr.rel (%p994) target = $region76
        $region75: #{_forward_impl.4} parent=71 // pred_region
          %s997 = sand.u32 %s148, 1
          %s998 = scalar_lea.sflag [#allocation4], %s997
          %s999 = sand.u32 %s148, 1
          %s1000 = smul.addr %s999, 64
          %s1001 = scalar_lea.vmem [#allocation11], %s1000
          %1002 = dma.done %s998, 1024
        $region76: #{_forward_impl.4} parent=71 // pred_fallthru
          _
        // Predicated region
        $region77: #{_forward_impl.4} parent=71 // pred_check
          %p1003 = pneg %p189
        $region78: #{_forward_impl.4} parent=71 // pred_check_branch
          %1005 = sbr.rel (%p1003) target = $region80
        $region79: #{_forward_impl.4} parent=71 // pred_region
          %s1006 = sand.u32 %s174, 1
          %s1007 = scalar_lea.sflag [#allocation13], %s1006
          %s1008 = sand.u32 %s174, 1
          %s1009 = smul.addr %s1008, 128
          %s1010 = scalar_lea.vmem [#allocation12], %s1009
          %1011 = dma.done %s1007, 2048
        $region80: #{_forward_impl.4} parent=71 // pred_fallthru
          _
      $region72: #{_forward_impl.4} parent=5 // pred_fallthru
        _
    $region6: #{_forward_impl.4} parent=1 // loop_footer
      %s28 = sadd.s32 1, %s24
    $region7: #{_forward_impl.4} parent=1 // loop_footer_branch
      %23 = sbr.rel target = $region3
    $region8: #{_forward_impl.4} parent=1 // loop_exit
      _
    %1012 = vsyncpa [#allocation3], 1
    %s1013 = scalar_lea.sflag [#allocation3], 1
    %1014 = vsyncpa %s1013, 1
    %1015 = vsyncpa [#allocation6], 1
    %1016 = vsyncpa [#allocation9], 1
    %1017 = vsyncpa [#allocation4], 1
    %s1018 = scalar_lea.sflag [#allocation4], 1
    %1019 = vsyncpa %s1018, 1
    %1020 = vsyncpa [#allocation13], 1
    %s1021 = scalar_lea.sflag [#allocation13], 1
    %1022 = vsyncpa %s1021, 1

// kernel: _forward_impl.3
$region0: #{_forward_impl.3}
  #allocation0 [shape = 'u32[]', space=smem, size = 0x4, offset = 0x4, fixed_abs, tag = 'smem constant byte address 0x4 - core index']
  #allocation1 [shape = 'u32[144,128]{1,0:T(1,128)}', space=vmem, size = 0x12000, scoped, tag = 'internal scratch']
  %s0 = inlined_call_operand.hbm [shape: bf16[1024,4], index: 0, kind: input, shape index: {}]
  %s1 = inlined_call_operand.hbm [shape: bf16[4,128], index: 1, kind: input, shape index: {}]
  %s2 = inlined_call_operand.hbm [shape: f32[1,128], index: 2, kind: input, shape index: {}]
  %s3 = inlined_call_operand.hbm [shape: bf16[128,128], index: 3, kind: input, shape index: {}]
  %s4 = inlined_call_operand.hbm [shape: f32[1,128], index: 4, kind: input, shape index: {}]
  %s5 = inlined_call_operand.hbm [shape: bf16[1024,128], index: 5, kind: output, shape index: {0}]
  %s6 = inlined_call_operand.hbm [shape: f32[1024,128], index: 6, kind: output, shape index: {1}]
  %7 = xla_tuple %s5, %s6
  %s8 = sld [smem:[#allocation0]]
  $region81: #{_forward_impl.3} parent=0
    _
  %s10 = ssub.s32 1, %s8
  %s11 = scalar_select 0, %s10, %s8
  $region1: #{_forward_impl.3} parent=0
    #allocation2 [shape = 'u8[262144]{0}', space=vmem, size = 0x40000, scoped, tag = 'input window, operand 0']
    #allocation3 [shape = 's32[2]{0}', space=sflag, size = 0x8, scoped, tag = 'scoped memory for _forward_impl.3']
    #allocation4 [shape = 's32[2]{0}', space=sflag, size = 0x8, scoped, tag = 'scoped memory for _forward_impl.3']
    #allocation5 [shape = 'u8[1024]{0}', space=vmem, size = 0x400, scoped, tag = 'input window, operand 1, single buffered']
    #allocation6 [shape = 's32[1]{0}', space=sflag, size = 0x4, scoped, tag = 'scoped memory for _forward_impl.3']
    #allocation7 [shape = 'u8[512]{0}', space=vmem, size = 0x400, scoped, tag = 'input window, operand 2, single buffered']
    #allocation8 [shape = 'u8[32768]{0}', space=vmem, size = 0x8000, scoped, tag = 'input window, operand 3, single buffered']
    #allocation9 [shape = 's32[1]{0}', space=sflag, size = 0x4, scoped, tag = 'scoped memory for _forward_impl.3']
    #allocation10 [shape = 'u8[512]{0}', space=vmem, size = 0x400, scoped, tag = 'input window, operand 4, single buffered']
    #allocation11 [shape = 'u8[262144]{0}', space=vmem, size = 0x40000, scoped, tag = 'output window, operand 0']
    #allocation12 [shape = 'u8[524288]{0}', space=vmem, size = 0x80000, scoped, tag = 'output window, operand 1']
    #allocation13 [shape = 's32[2]{0}', space=sflag, size = 0x8, scoped, tag = 'scoped memory for _forward_impl.3']
    %12 = vsyncpa [#allocation3], 0
    %s13 = scalar_lea.sflag [#allocation3], 1
    %14 = vsyncpa %s13, 0
    %15 = vsyncpa [#allocation6], 0
    %16 = vsyncpa [#allocation9], 0
    %17 = vsyncpa [#allocation4], 0
    %s18 = scalar_lea.sflag [#allocation4], 1
    %19 = vsyncpa %s18, 0
    %20 = vsyncpa [#allocation13], 0
    %s21 = scalar_lea.sflag [#allocation13], 1
    %22 = vsyncpa %s21, 0
    loop: start=0, step=1, limit=4
    $region2: #{_forward_impl.3} parent=1 // loop_pre_header
      _
    $region3: #{_forward_impl.3} parent=1 // loop_header
      %s24 = sphi 0, %s28
      %p25 = scmp.ge.s32.totalorder %s24, 4
      %s34 = sphi 0, %s36
      %s37 = sphi 0, %s34
      %s38 = sphi 0, %s37
      %s54 = sphi 0, %s38
      %s58 = sphi 0, %s58
      %s60 = sphi 0, %s58
      %s61 = sphi 0, %s60
      %s75 = sphi 0, %s61
      %s79 = sphi 0, %s79
      %s81 = sphi 0, %s79
      %s82 = sphi 0, %s81
      %s96 = sphi 0, %s82
      %s100 = sphi 0, %s100
      %s102 = sphi 0, %s100
      %s103 = sphi 0, %s102
      %s117 = sphi 0, %s103
      %s121 = sphi 0, %s121
      %s123 = sphi 0, %s121
      %s124 = sphi 0, %s123
      %s138 = sphi 0, %s124
      %s144 = sphi 0, %s146
      %s147 = sphi 0, %s144
      %s148 = sphi 0, %s147
      %s164 = sphi 0, %s148
      %s170 = sphi 0, %s172
      %s173 = sphi 0, %s170
      %s174 = sphi 0, %s173
      %s190 = sphi 0, %s174
    $region4: #{_forward_impl.3} parent=1 // loop_header_branch
      %27 = sbr.rel (%p25) target = $region8
    $region5: #{_forward_impl.3} parent=1 // loop_body
      %s29 = ssub.s32 %s24, 1
      %s30 = ssub.s32 %s24, 2
      %s31 = sadd.s32 %s24, 1
      %s32 = ssub.s32 %s24, %s31
      %p33 = scmp.eq.s32.totalorder %s32, 0
      %s35 = sadd.s32 %s34, 1
      %s36 = scalar_select %p33, %s34, %s35
      %p39 = pneg %p33
      %p40 = scmp.eq.s32.totalorder %s24, 1
      %p41 = por %p39, %p40
      %p42 = scmp.ne.s32.totalorder %s34, %s37
      %p43 = scmp.eq.s32.totalorder %s24, 0
      %p44 = por %p42, %p43
      %p45 = scmp.ne.s32.totalorder %s34, %s37
      %p46 = scmp.eq.s32.totalorder %s29, 1
      %p47 = por %p45, %p46
      %p48 = scmp.ne.s32.totalorder %s37, %s38
      %p49 = scmp.eq.s32.totalorder %s29, 0
      %p50 = por %p48, %p49
      %p51 = scmp.ne.s32.totalorder %s37, %s38
      %p52 = scmp.eq.s32.totalorder %s30, 1
      %p53 = por %p51, %p52
      %p55 = scmp.ne.s32.totalorder %s38, %s54
      %p56 = scmp.eq.s32.totalorder %s30, 0
      %p57 = por %p55, %p56
      %s59 = sadd.s32 %s58, 1
      %p62 = scmp.eq.s32.totalorder %s24, 1
      %p63 = scmp.ne.s32.totalorder %s58, %s60
      %p64 = scmp.eq.s32.totalorder %s24, 0
      %p65 = por %p63, %p64
      %p66 = scmp.ne.s32.totalorder %s58, %s60
      %p67 = scmp.eq.s32.totalorder %s29, 1
      %p68 = por %p66, %p67
      %p69 = scmp.ne.s32.totalorder %s60, %s61
      %p70 = scmp.eq.s32.totalorder %s29, 0
      %p71 = por %p69, %p70
      %p72 = scmp.ne.s32.totalorder %s60, %s61
      %p73 = scmp.eq.s32.totalorder %s30, 1
      %p74 = por %p72, %p73
      %p76 = scmp.ne.s32.totalorder %s61, %s75
      %p77 = scmp.eq.s32.totalorder %s30, 0
      %p78 = por %p76, %p77
      %s80 = sadd.s32 %s79, 1
      %p83 = scmp.eq.s32.totalorder %s24, 1
      %p84 = scmp.ne.s32.totalorder %s79, %s81
      %p85 = scmp.eq.s32.totalorder %s24, 0
      %p86 = por %p84, %p85
      %p87 = scmp.ne.s32.totalorder %s79, %s81
      %p88 = scmp.eq.s32.totalorder %s29, 1
      %p89 = por %p87, %p88
      %p90 = scmp.ne.s32.totalorder %s81, %s82
      %p91 = scmp.eq.s32.totalorder %s29, 0
      %p92 = por %p90, %p91
      %p93 = scmp.ne.s32.totalorder %s81, %s82
      %p94 = scmp.eq.s32.totalorder %s30, 1
      %p95 = por %p93, %p94
      %p97 = scmp.ne.s32.totalorder %s82, %s96
      %p98 = scmp.eq.s32.totalorder %s30, 0
      %p99 = por %p97, %p98
      %s101 = sadd.s32 %s100, 1
      %p104 = scmp.eq.s32.totalorder %s24, 1
      %p105 = scmp.ne.s32.totalorder %s100, %s102
      %p106 = scmp.eq.s32.totalorder %s24, 0
      %p107 = por %p105, %p106
      %p108 = scmp.ne.s32.totalorder %s100, %s102
      %p109 = scmp.eq.s32.totalorder %s29, 1
      %p110 = por %p108, %p109
      %p111 = scmp.ne.s32.totalorder %s102, %s103
      %p112 = scmp.eq.s32.totalorder %s29, 0
      %p113 = por %p111, %p112
      %p114 = scmp.ne.s32.totalorder %s102, %s103
      %p115 = scmp.eq.s32.totalorder %s30, 1
      %p116 = por %p114, %p115
      %p118 = scmp.ne.s32.totalorder %s103, %s117
      %p119 = scmp.eq.s32.totalorder %s30, 0
      %p120 = por %p118, %p119
      %s122 = sadd.s32 %s121, 1
      %p125 = scmp.eq.s32.totalorder %s24, 1
      %p126 = scmp.ne.s32.totalorder %s121, %s123
      %p127 = scmp.eq.s32.totalorder %s24, 0
      %p128 = por %p126, %p127
      %p129 = scmp.ne.s32.totalorder %s121, %s123
      %p130 = scmp.eq.s32.totalorder %s29, 1
      %p131 = por %p129, %p130
      %p132 = scmp.ne.s32.totalorder %s123, %s124
      %p133 = scmp.eq.s32.totalorder %s29, 0
      %p134 = por %p132, %p133
      %p135 = scmp.ne.s32.totalorder %s123, %s124
      %p136 = scmp.eq.s32.totalorder %s30, 1
      %p137 = por %p135, %p136
      %p139 = scmp.ne.s32.totalorder %s124, %s138
      %p140 = scmp.eq.s32.totalorder %s30, 0
      %p141 = por %p139, %p140
      %s142 = ssub.s32 %s24, %s31
      %p143 = scmp.eq.s32.totalorder %s142, 0
      %s145 = sadd.s32 %s144, 1
      %s146 = scalar_select %p143, %s144, %s145
      %p149 = pneg %p143
      %p150 = scmp.eq.s32.totalorder %s24, 1
      %p151 = por %p149, %p150
      %p152 = scmp.ne.s32.totalorder %s144, %s147
      %p153 = scmp.eq.s32.totalorder %s24, 0
      %p154 = por %p152, %p153
      %p155 = scmp.ne.s32.totalorder %s144, %s147
      %p156 = scmp.eq.s32.totalorder %s29, 1
      %p157 = por %p155, %p156
      %p158 = scmp.ne.s32.totalorder %s147, %s148
      %p159 = scmp.eq.s32.totalorder %s29, 0
      %p160 = por %p158, %p159
      %p161 = scmp.ne.s32.totalorder %s147, %s148
      %p162 = scmp.eq.s32.totalorder %s30, 1
      %p163 = por %p161, %p162
      %p165 = scmp.ne.s32.totalorder %s148, %s164
      %p166 = scmp.eq.s32.totalorder %s30, 0
      %p167 = por %p165, %p166
      %s168 = ssub.s32 %s24, %s31
      %p169 = scmp.eq.s32.totalorder %s168, 0
      %s171 = sadd.s32 %s170, 1
      %s172 = scalar_select %p169, %s170, %s171
      %p175 = pneg %p169
      %p176 = scmp.eq.s32.totalorder %s24, 1
      %p177 = por %p175, %p176
      %p178 = scmp.ne.s32.totalorder %s170, %s173
      %p179 = scmp.eq.s32.totalorder %s24, 0
      %p180 = por %p178, %p179
      %p181 = scmp.ne.s32.totalorder %s170, %s173
      %p182 = scmp.eq.s32.totalorder %s29, 1
      %p183 = por %p181, %p182
      %p184 = scmp.ne.s32.totalorder %s173, %s174
      %p185 = scmp.eq.s32.totalorder %s29, 0
      %p186 = por %p184, %p185
      %p187 = scmp.ne.s32.totalorder %s173, %s174
      %p188 = scmp.eq.s32.totalorder %s30, 1
      %p189 = por %p187, %p188
      %p191 = scmp.ne.s32.totalorder %s174, %s190
      %p192 = scmp.eq.s32.totalorder %s30, 0
      %p193 = por %p191, %p192
      %p194 = scmp.le.s32.totalorder 1, %s24
      %p195 = scmp.lt.s32.totalorder %s24, 3
      %p196 = pnand %p194, %p195
      %p197 = pneg %p196
      // Predicated region
      $region9: #{_forward_impl.3} parent=5 // pred_check
        _
      $region10: #{_forward_impl.3} parent=5 // pred_check_branch
        %199 = sbr.rel (%p196) target = $region12
      $region11: #{_forward_impl.3} parent=5 // pred_region
        %s200 = ssub.s32 %s24, 1
        // Predicated region
        $region13: #{_forward_impl.3} parent=11 // pred_check
          %p201 = pneg %p71
        $region14: #{_forward_impl.3} parent=11 // pred_check_branch
          %203 = sbr.rel (%p201) target = $region16
        $region15: #{_forward_impl.3} parent=11 // pred_region
          %s205 = ssub.s32 32, 32
          %206 = vsyncadd [#allocation6], %s205
          %s208 = sshll.u32 [#allocation5], 4
          %s209 = int_to_ptr.vmem [resolvable:$true] %s208
          %211 = dma.hbm_to_vmem [thread:$0]  %s1, 32, %s209, [#allocation6]
        $region16: #{_forward_impl.3} parent=11 // pred_fallthru
          _
        // Predicated region
        $region17: #{_forward_impl.3} parent=11 // pred_check
          %p212 = pneg %p92
        $region18: #{_forward_impl.3} parent=11 // pred_check_branch
          %214 = sbr.rel (%p212) target = $region20
        $region19: #{_forward_impl.3} parent=11 // pred_region
          %s216 = ssub.s32 16, 16
          %217 = vsyncadd [#allocation6], %s216
          %s219 = sshll.u32 [#allocation7], 4
          %s220 = int_to_ptr.vmem [resolvable:$true] %s219
          %222 = dma.hbm_to_vmem [thread:$0]  %s2, 16, %s220, [#allocation6]
        $region20: #{_forward_impl.3} parent=11 // pred_fallthru
          _
        // Predicated region
        $region21: #{_forward_impl.3} parent=11 // pred_check
          %p223 = pneg %p113
        $region22: #{_forward_impl.3} parent=11 // pred_check_branch
          %225 = sbr.rel (%p223) target = $region24
        $region23: #{_forward_impl.3} parent=11 // pred_region
          %s227 = ssub.s32 1024, 1024
          %228 = vsyncadd [#allocation9], %s227
          %s229 = sshll.u32 [#allocation8], 4
          %s230 = int_to_ptr.vmem [resolvable:$true] %s229
          %235 = dma.hbm_to_vmem [thread:$0]  %s3, 1024, %s230, [#allocation9], 64, 64, 4
        $region24: #{_forward_impl.3} parent=11 // pred_fallthru
          _
        // Predicated region
        $region25: #{_forward_impl.3} parent=11 // pred_check
          %p236 = pneg %p134
        $region26: #{_forward_impl.3} parent=11 // pred_check_branch
          %238 = sbr.rel (%p236) target = $region28
        $region27: #{_forward_impl.3} parent=11 // pred_region
          %s240 = ssub.s32 16, 16
          %241 = vsyncadd [#allocation9], %s240
          %s243 = sshll.u32 [#allocation10], 4
          %s244 = int_to_ptr.vmem [resolvable:$true] %s243
          %246 = dma.hbm_to_vmem [thread:$0]  %s4, 16, %s244, [#allocation9]
        $region28: #{_forward_impl.3} parent=11 // pred_fallthru
          _
      $region12: #{_forward_impl.3} parent=5 // pred_fallthru
        _
      %p247 = scmp.lt.s32.totalorder %s24, 2
      // Predicated region
      $region29: #{_forward_impl.3} parent=5 // pred_check
        %p248 = pneg %p247
      $region30: #{_forward_impl.3} parent=5 // pred_check_branch
        %250 = sbr.rel (%p248) target = $region32
      $region31: #{_forward_impl.3} parent=5 // pred_region
        // Predicated region
        $region33: #{_forward_impl.3} parent=31 // pred_check
          %p251 = pneg %p44
        $region34: #{_forward_impl.3} parent=31 // pred_check_branch
          %253 = sbr.rel (%p251) target = $region36
        $region35: #{_forward_impl.3} parent=31 // pred_region
          %s254 = sand.u32 %s34, 1
          %s255 = scalar_lea.sflag [#allocation3], %s254
          %s256 = sand.u32 %s34, 1
          %s257 = smul.addr %s256, 256
          %s258 = scalar_lea.vmem [#allocation2], %s257
          %s259 = smul.u32 64, %s24
          %s261 = ssub.s32 4096, 4096
          %262 = vsyncadd %s255, %s261
          %s263 = smul.addr %s259, 64
          %s264 = scalar_lea.hbm %s0, %s263
          %s265 = sshll.u32 %s258, 4
          %s266 = int_to_ptr.vmem [resolvable:$true] %s265
          %271 = dma.hbm_to_vmem [thread:$0]  %s264, 4096, %s266, %s255, 64, 64, 4
        $region36: #{_forward_impl.3} parent=31 // pred_fallthru
          _
      $region32: #{_forward_impl.3} parent=5 // pred_fallthru
        _
      %p272 = scmp.le.s32.totalorder 1, %s24
      %p273 = scmp.lt.s32.totalorder %s24, 3
      %p274 = pnand %p272, %p273
      %p275 = pneg %p274
      // Predicated region
      $region37: #{_forward_impl.3} parent=5 // pred_check
        _
      $region38: #{_forward_impl.3} parent=5 // pred_check_branch
        %277 = sbr.rel (%p274) target = $region40
      $region39: #{_forward_impl.3} parent=5 // pred_region
        %s278 = ssub.s32 %s24, 1
        %s279 = sand.u32 %s37, 1
        %s280 = scalar_lea.sflag [#allocation3], %s279
        %s281 = sand.u32 %s37, 1
        %s282 = smul.addr %s281, 256
        %s283 = scalar_lea.vmem [#allocation2], %s282
        // Predicated region
        $region41: #{_forward_impl.3} parent=39 // pred_check
          %p284 = pneg %p50
        $region42: #{_forward_impl.3} parent=39 // pred_check_branch
          %286 = sbr.rel (%p284) target = $region44
        $region43: #{_forward_impl.3} parent=39 // pred_region
          %287 = dma.done %s280, 4096
        $region44: #{_forward_impl.3} parent=39 // pred_fallthru
          _
        // Predicated region
        $region45: #{_forward_impl.3} parent=39 // pred_check
          %p288 = pneg %p71
        $region46: #{_forward_impl.3} parent=39 // pred_check_branch
          %290 = sbr.rel (%p288) target = $region48
        $region47: #{_forward_impl.3} parent=39 // pred_region
          %291 = dma.done [#allocation6], 32
        $region48: #{_forward_impl.3} parent=39 // pred_fallthru
          _
        // Predicated region
        $region49: #{_forward_impl.3} parent=39 // pred_check
          %p292 = pneg %p92
        $region50: #{_forward_impl.3} parent=39 // pred_check_branch
          %294 = sbr.rel (%p292) target = $region52
        $region51: #{_forward_impl.3} parent=39 // pred_region
          %295 = dma.done [#allocation6], 16
        $region52: #{_forward_impl.3} parent=39 // pred_fallthru
          _
        // Predicated region
        $region53: #{_forward_impl.3} parent=39 // pred_check
          %p296 = pneg %p113
        $region54: #{_forward_impl.3} parent=39 // pred_check_branch
          %298 = sbr.rel (%p296) target = $region56
        $region55: #{_forward_impl.3} parent=39 // pred_region
          %299 = dma.done [#allocation9], 1024
        $region56: #{_forward_impl.3} parent=39 // pred_fallthru
          _
        // Predicated region
        $region57: #{_forward_impl.3} parent=39 // pred_check
          %p300 = pneg %p134
        $region58: #{_forward_impl.3} parent=39 // pred_check_branch
          %302 = sbr.rel (%p300) target = $region60
        $region59: #{_forward_impl.3} parent=39 // pred_region
          %303 = dma.done [#allocation9], 16
        $region60: #{_forward_impl.3} parent=39 // pred_fallthru
          _
        %s304 = sand.u32 %s37, 1
        %s305 = scalar_lea.sflag [#allocation3], %s304
        %s306 = sand.u32 %s37, 1
        %s307 = smul.addr %s306, 256
        %s308 = scalar_lea.vmem [#allocation2], %s307
        %p309 = pneg %p50
        %p310 = pneg %p47
        %p311 = pneg %p71
        %p312 = pneg %p68
        %p313 = pneg %p92
        %p314 = pneg %p89
        %p315 = pneg %p113
        %p316 = pneg %p110
        %p317 = pneg %p134
        %p318 = pneg %p131
        %p319 = pneg %p160
        %p320 = pneg %p157
        %s321 = sand.u32 %s147, 1
        %s322 = scalar_lea.sflag [#allocation4], %s321
        %s323 = sand.u32 %s147, 1
        %s324 = smul.addr %s323, 256
        %s325 = scalar_lea.vmem [#allocation11], %s324
        %p326 = pneg %p186
        %p327 = pneg %p183
        %s328 = sand.u32 %s173, 1
        %s329 = scalar_lea.sflag [#allocation13], %s328
        %s330 = sand.u32 %s173, 1
        %s331 = smul.addr %s330, 512
        %s332 = scalar_lea.vmem [#allocation12], %s331
        %s333 = smul.u32 64, %s29
        %s334 = smul.u32 64, %s29
        %s335 = smul.u32 64, %s29
        %v337 = vld [vmem:[%s283] sm:$0xf]
        %v338 = vld [vmem:[%s283 + $0x4] sm:$0xf]
        %v339 = vld [vmem:[%s283 + $0x8] sm:$0xf]
        %v340 = vld [vmem:[%s283 + $0xc] sm:$0xf]
        %v341 = vld [vmem:[%s283 + $0x10] sm:$0xf]
        %v342 = vld [vmem:[%s283 + $0x14] sm:$0xf]
        %v343 = vld [vmem:[%s283 + $0x18] sm:$0xf]
        %v344 = vld [vmem:[%s283 + $0x1c] sm:$0xf]
        %v345 = vld [vmem:[%s283 + $0x20] sm:$0xf]
        %v346 = vld [vmem:[%s283 + $0x24] sm:$0xf]
        %v347 = vld [vmem:[%s283 + $0x28] sm:$0xf]
        %v348 = vld [vmem:[%s283 + $0x2c] sm:$0xf]
        %v349 = vld [vmem:[%s283 + $0x30] sm:$0xf]
        %v350 = vld [vmem:[%s283 + $0x34] sm:$0xf]
        %v351 = vld [vmem:[%s283 + $0x38] sm:$0xf]
        %v352 = vld [vmem:[%s283 + $0x3c] sm:$0xf]
        %v353 = vld [vmem:[%s283 + $0x40] sm:$0xf]
        %v354 = vld [vmem:[%s283 + $0x44] sm:$0xf]
        %v355 = vld [vmem:[%s283 + $0x48] sm:$0xf]
        %v356 = vld [vmem:[%s283 + $0x4c] sm:$0xf]
        %v357 = vld [vmem:[%s283 + $0x50] sm:$0xf]
        %v358 = vld [vmem:[%s283 + $0x54] sm:$0xf]
        %v359 = vld [vmem:[%s283 + $0x58] sm:$0xf]
        %v360 = vld [vmem:[%s283 + $0x5c] sm:$0xf]
        %v361 = vld [vmem:[%s283 + $0x60] sm:$0xf]
        %v362 = vld [vmem:[%s283 + $0x64] sm:$0xf]
        %v363 = vld [vmem:[%s283 + $0x68] sm:$0xf]
        %v364 = vld [vmem:[%s283 + $0x6c] sm:$0xf]
        %v365 = vld [vmem:[%s283 + $0x70] sm:$0xf]
        %v366 = vld [vmem:[%s283 + $0x74] sm:$0xf]
        %v367 = vld [vmem:[%s283 + $0x78] sm:$0xf]
        %v368 = vld [vmem:[%s283 + $0x7c] sm:$0xf]
        %v369 = vld [vmem:[%s283 + $0x80] sm:$0xf]
        %v370 = vld [vmem:[%s283 + $0x84] sm:$0xf]
        %v371 = vld [vmem:[%s283 + $0x88] sm:$0xf]
        %v372 = vld [vmem:[%s283 + $0x8c] sm:$0xf]
        %v373 = vld [vmem:[%s283 + $0x90] sm:$0xf]
        %v374 = vld [vmem:[%s283 + $0x94] sm:$0xf]
        %v375 = vld [vmem:[%s283 + $0x98] sm:$0xf]
        %v376 = vld [vmem:[%s283 + $0x9c] sm:$0xf]
        %v377 = vld [vmem:[%s283 + $0xa0] sm:$0xf]
        %v378 = vld [vmem:[%s283 + $0xa4] sm:$0xf]
        %v379 = vld [vmem:[%s283 + $0xa8] sm:$0xf]
        %v380 = vld [vmem:[%s283 + $0xac] sm:$0xf]
        %v381 = vld [vmem:[%s283 + $0xb0] sm:$0xf]
        %v382 = vld [vmem:[%s283 + $0xb4] sm:$0xf]
        %v383 = vld [vmem:[%s283 + $0xb8] sm:$0xf]
        %v384 = vld [vmem:[%s283 + $0xbc] sm:$0xf]
        %v385 = vld [vmem:[%s283 + $0xc0] sm:$0xf]
        %v386 = vld [vmem:[%s283 + $0xc4] sm:$0xf]
        %v387 = vld [vmem:[%s283 + $0xc8] sm:$0xf]
        %v388 = vld [vmem:[%s283 + $0xcc] sm:$0xf]
        %v389 = vld [vmem:[%s283 + $0xd0] sm:$0xf]
        %v390 = vld [vmem:[%s283 + $0xd4] sm:$0xf]
        %v391 = vld [vmem:[%s283 + $0xd8] sm:$0xf]
        %v392 = vld [vmem:[%s283 + $0xdc] sm:$0xf]
        %v393 = vld [vmem:[%s283 + $0xe0] sm:$0xf]
        %v394 = vld [vmem:[%s283 + $0xe4] sm:$0xf]
        %v395 = vld [vmem:[%s283 + $0xe8] sm:$0xf]
        %v396 = vld [vmem:[%s283 + $0xec] sm:$0xf]
        %v397 = vld [vmem:[%s283 + $0xf0] sm:$0xf]
        %v398 = vld [vmem:[%s283 + $0xf4] sm:$0xf]
        %v399 = vld [vmem:[%s283 + $0xf8] sm:$0xf]
        %v400 = vld [vmem:[%s283 + $0xfc] sm:$0xf]
        %v401 = vld [vmem:[#allocation5] sm:$0x3]
        %v402 = vld [vmem:[#allocation7] sm:$0x1]
        %v404 = vlaneseq
        %v405 = vshrl.u32 %v404, 7
        %v406 = vsub.s32 0, %v405
        %v407 = vrot.slane %v402, %v406
        %v473 = vunpack.c.l.b16 %v337
        %v474 = vunpack.c.l.b16 %v338
        %v475 = vunpack.c.l.b16 %v339
        %v476 = vunpack.c.l.b16 %v340
        %v477 = vunpack.c.l.b16 %v341
        %v478 = vunpack.c.l.b16 %v342
        %v479 = vunpack.c.l.b16 %v343
        %v480 = vunpack.c.l.b16 %v344
        %v481 = vunpack.c.l.b16 %v345
        %v482 = vunpack.c.l.b16 %v346
        %v483 = vunpack.c.l.b16 %v347
        %v484 = vunpack.c.l.b16 %v348
        %v485 = vunpack.c.l.b16 %v349
        %v486 = vunpack.c.l.b16 %v350
        %v487 = vunpack.c.l.b16 %v351
        %v488 = vunpack.c.l.b16 %v352
        %v489 = vunpack.c.l.b16 %v353
        %v490 = vunpack.c.l.b16 %v354
        %v491 = vunpack.c.l.b16 %v355
        %v492 = vunpack.c.l.b16 %v356
        %v493 = vunpack.c.l.b16 %v357
        %v494 = vunpack.c.l.b16 %v358
        %v495 = vunpack.c.l.b16 %v359
        %v496 = vunpack.c.l.b16 %v360
        %v497 = vunpack.c.l.b16 %v361
        %v498 = vunpack.c.l.b16 %v362
        %v499 = vunpack.c.l.b16 %v363
        %v500 = vunpack.c.l.b16 %v364
        %v501 = vunpack.c.l.b16 %v365
        %v502 = vunpack.c.l.b16 %v366
        %v503 = vunpack.c.l.b16 %v367
        %v504 = vunpack.c.l.b16 %v368
        %v505 = vunpack.c.l.b16 %v369
        %v506 = vunpack.c.l.b16 %v370
        %v507 = vunpack.c.l.b16 %v371
        %v508 = vunpack.c.l.b16 %v372
        %v509 = vunpack.c.l.b16 %v373
        %v510 = vunpack.c.l.b16 %v374
        %v511 = vunpack.c.l.b16 %v375
        %v512 = vunpack.c.l.b16 %v376
        %v513 = vunpack.c.l.b16 %v377
        %v514 = vunpack.c.l.b16 %v378
        %v515 = vunpack.c.l.b16 %v379
        %v516 = vunpack.c.l.b16 %v380
        %v517 = vunpack.c.l.b16 %v381
        %v518 = vunpack.c.l.b16 %v382
        %v519 = vunpack.c.l.b16 %v383
        %v520 = vunpack.c.l.b16 %v384
        %v521 = vunpack.c.l.b16 %v385
        %v522 = vunpack.c.l.b16 %v386
        %v523 = vunpack.c.l.b16 %v387
        %v524 = vunpack.c.l.b16 %v388
        %v525 = vunpack.c.l.b16 %v389
        %v526 = vunpack.c.l.b16 %v390
        %v527 = vunpack.c.l.b16 %v391
        %v528 = vunpack.c.l.b16 %v392
        %v529 = vunpack.c.l.b16 %v393
        %v530 = vunpack.c.l.b16 %v394
        %v531 = vunpack.c.l.b16 %v395
        %v532 = vunpack.c.l.b16 %v396
        %v533 = vunpack.c.l.b16 %v397
        %v534 = vunpack.c.l.b16 %v398
        %v535 = vunpack.c.l.b16 %v399
        %v536 = vunpack.c.l.b16 %v400
        %v537 = vpack.c.b16 %v474, %v473
        %v538 = vpack.c.b16 %v476, %v475
        %v539 = vpack.c.b16 %v478, %v477
        %v540 = vpack.c.b16 %v480, %v479
        %v541 = vpack.c.b16 %v482, %v481
        %v542 = vpack.c.b16 %v484, %v483
        %v543 = vpack.c.b16 %v486, %v485
        %v544 = vpack.c.b16 %v488, %v487
        %v545 = vpack.c.b16 %v490, %v489
        %v546 = vpack.c.b16 %v492, %v491
        %v547 = vpack.c.b16 %v494, %v493
        %v548 = vpack.c.b16 %v496, %v495
        %v549 = vpack.c.b16 %v498, %v497
        %v550 = vpack.c.b16 %v500, %v499
        %v551 = vpack.c.b16 %v502, %v501
        %v552 = vpack.c.b16 %v504, %v503
        %v553 = vpack.c.b16 %v506, %v505
        %v554 = vpack.c.b16 %v508, %v507
        %v555 = vpack.c.b16 %v510, %v509
        %v556 = vpack.c.b16 %v512, %v511
        %v557 = vpack.c.b16 %v514, %v513
        %v558 = vpack.c.b16 %v516, %v515
        %v559 = vpack.c.b16 %v518, %v517
        %v560 = vpack.c.b16 %v520, %v519
        %v561 = vpack.c.b16 %v522, %v521
        %v562 = vpack.c.b16 %v524, %v523
        %v563 = vpack.c.b16 %v526, %v525
        %v564 = vpack.c.b16 %v528, %v527
        %v565 = vpack.c.b16 %v530, %v529
        %v566 = vpack.c.b16 %v532, %v531
        %v567 = vpack.c.b16 %v534, %v533
        %v568 = vpack.c.b16 %v536, %v535
        %vm569 = vcmask 31744
        %v571 = vsel %vm569, %v537, 0
        %v574 = vsel %vm569, %v538, 0
        %v577 = vsel %vm569, %v539, 0
        %v580 = vsel %vm569, %v540, 0
        %v583 = vsel %vm569, %v541, 0
        %v586 = vsel %vm569, %v542, 0
        %v589 = vsel %vm569, %v543, 0
        %v592 = vsel %vm569, %v544, 0
        %v595 = vsel %vm569, %v545, 0
        %v598 = vsel %vm569, %v546, 0
        %v601 = vsel %vm569, %v547, 0
        %v604 = vsel %vm569, %v548, 0
        %v607 = vsel %vm569, %v549, 0
        %v610 = vsel %vm569, %v550, 0
        %v613 = vsel %vm569, %v551, 0
        %v616 = vsel %vm569, %v552, 0
        %v619 = vsel %vm569, %v553, 0
        %v622 = vsel %vm569, %v554, 0
        %v625 = vsel %vm569, %v555, 0
        %v628 = vsel %vm569, %v556, 0
        %v631 = vsel %vm569, %v557, 0
        %v634 = vsel %vm569, %v558, 0
        %v637 = vsel %vm569, %v559, 0
        %v640 = vsel %vm569, %v560, 0
        %v643 = vsel %vm569, %v561, 0
        %v646 = vsel %vm569, %v562, 0
        %v649 = vsel %vm569, %v563, 0
        %v652 = vsel %vm569, %v564, 0
        %v655 = vsel %vm569, %v565, 0
        %v658 = vsel %vm569, %v566, 0
        %v661 = vsel %vm569, %v567, 0
        %v664 = vsel %vm569, %v568, 0
        %vm666 = vcmask 1041408
        %v668 = vsel %vm666, %v401, 0
        %670 = vmatprep.subr.bf16.mxu0 0
        %671 = vmatpush1.bf16.msra.mxu0 %v668
        %672 = vmatprep.subr.bf16.mxu0 0
        %673 = vmatpush1.bf16.msra.mxu0 0
        %674 = vmatprep.subr.bf16.mxu0 0
        %675 = vmatpush1.bf16.msra.mxu0 0
        %676 = vmatprep.subr.bf16.mxu0 0
        %677 = vmatpush1.bf16.msra.mxu0 0
        %678 = vmatprep.subr.bf16.mxu0 0
        %679 = vmatpush1.bf16.msra.mxu0 0
        %680 = vmatprep.subr.bf16.mxu0 0
        %681 = vmatpush1.bf16.msra.mxu0 0
        %682 = vmatprep.subr.bf16.mxu0 0
        %683 = vmatpush1.bf16.msra.mxu0 0
        %684 = vmatprep.subr.bf16.mxu0 0
        %685 = vmatpush1.bf16.msra.mxu0 0
        %686 = vmatprep.subr.bf16.mxu0 0
        %687 = vmatpush1.bf16.msra.mxu0 0
        %688 = vmatprep.subr.bf16.mxu0 0
        %689 = vmatpush1.bf16.msra.mxu0 0
        %690 = vmatprep.subr.bf16.mxu0 0
        %691 = vmatpush1.bf16.msra.mxu0 0
        %692 = vmatprep.subr.bf16.mxu0 0
        %693 = vmatpush1.bf16.msra.mxu0 0
        %694 = vmatprep.subr.bf16.mxu0 0
        %695 = vmatpush1.bf16.msra.mxu0 0
        %696 = vmatprep.subr.bf16.mxu0 0
        %697 = vmatpush1.bf16.msra.mxu0 0
        %698 = vmatprep.subr.bf16.mxu0 0
        %699 = vmatpush1.bf16.msra.mxu0 0
        %700 = vmatprep.subr.bf16.mxu0 0
        %701 = vmatpush1.bf16.msra.mxu0 0
        %702 = vmatprep.mubr.bf16.mxu0 0
        %703 = vmatmul.mubr.bf16.gmra.mrb[0].mxu0 %v571
        %v704 = vpop.f32.mrb[0].mxu0
        %v705 = vadd.f32 %v407, %v704
        %v706 = vpop.f32.mrb[0].mxu0
        %v707 = vpop.f32.mrb[0].mxu0
        %v708 = vadd.f32 %v407, %v707
        %v709 = vpop.f32.mrb[0].mxu0
        %710 = vmatprep.mubr.bf16.mxu0 0
        %711 = vmatmul.mubr.bf16.gmra.mrb[0].mxu0 %v574
        %v712 = vpop.f32.mrb[0].mxu0
        %v713 = vadd.f32 %v407, %v712
        %v714 = vpop.f32.mrb[0].mxu0
        %v715 = vpop.f32.mrb[0].mxu0
        %v716 = vadd.f32 %v407, %v715
        %v717 = vpop.f32.mrb[0].mxu0
        %718 = vmatprep.mubr.bf16.mxu0 0
        %719 = vmatmul.mubr.bf16.gmra.mrb[0].mxu0 %v577
        %v720 = vpop.f32.mrb[0].mxu0
        %v721 = vadd.f32 %v407, %v720
        %v722 = vpop.f32.mrb[0].mxu0
        %v723 = vpop.f32.mrb[0].mxu0
        %v724 = vadd.f32 %v407, %v723
        %v725 = vpop.f32.mrb[0].mxu0
        %726 = vmatprep.mubr.bf16.mxu0 0
        %727 = vmatmul.mubr.bf16.gmra.mrb[0].mxu0 %v580
        %v728 = vpop.f32.mrb[0].mxu0
        %v729 = vadd.f32 %v407, %v728
        %v730 = vpop.f32.mrb[0].mxu0
        %v731 = vpop.f32.mrb[0].mxu0
        %v732 = vadd.f32 %v407, %v731
        %v733 = vpop.f32.mrb[0].mxu0
        %734 = vmatprep.mubr.bf16.mxu0 0
        %735 = vmatmul.mubr.bf16.gmra.mrb[0].mxu0 %v583
        %v736 = vpop.f32.mrb[0].mxu0
        %v737 = vadd.f32 %v407, %v736
        %v738 = vpop.f32.mrb[0].mxu0
        %v739 = vpop.f32.mrb[0].mxu0
        %v740 = vadd.f32 %v407, %v739
        %v741 = vpop.f32.mrb[0].mxu0
        %742 = vmatprep.mubr.bf16.mxu0 0
        %743 = vmatmul.mubr.bf16.gmra.mrb[0].mxu0 %v586
        %v744 = vpop.f32.mrb[0].mxu0
        %v745 = vadd.f32 %v407, %v744
        %v746 = vpop.f32.mrb[0].mxu0
        %v747 = vpop.f32.mrb[0].mxu0
        %v748 = vadd.f32 %v407, %v747
        %v749 = vpop.f32.mrb[0].mxu0
        %750 = vmatprep.mubr.bf16.mxu0 0
        %751 = vmatmul.mubr.bf16.gmra.mrb[0].mxu0 %v589
        %v752 = vpop.f32.mrb[0].mxu0
        %v753 = vadd.f32 %v407, %v752
        %v754 = vpop.f32.mrb[0].mxu0
        %v755 = vpop.f32.mrb[0].mxu0
        %v756 = vadd.f32 %v407, %v755
        %v757 = vpop.f32.mrb[0].mxu0
        %758 = vmatprep.mubr.bf16.mxu0 0
        %759 = vmatmul.mubr.bf16.gmra.mrb[0].mxu0 %v592
        %v760 = vpop.f32.mrb[0].mxu0
        %v761 = vadd.f32 %v407, %v760
        %v762 = vpop.f32.mrb[0].mxu0
        %v763 = vpop.f32.mrb[0].mxu0
        %v764 = vadd.f32 %v407, %v763
        %v765 = vpop.f32.mrb[0].mxu0
        %766 = vmatprep.mubr.bf16.mxu0 0
        %767 = vmatmul.mubr.bf16.gmra.mrb[0].mxu0 %v595
        %v768 = vpop.f32.mrb[0].mxu0
        %v769 = vadd.f32 %v407, %v768
        %v770 = vpop.f32.mrb[0].mxu0
        %v771 = vpop.f32.mrb[0].mxu0
        %v772 = vadd.f32 %v407, %v771
        %v773 = vpop.f32.mrb[0].mxu0
        %774 = vmatprep.mubr.bf16.mxu0 0
        %775 = vmatmul.mubr.bf16.gmra.mrb[0].mxu0 %v598
        %v776 = vpop.f32.mrb[0].mxu0
        %v777 = vadd.f32 %v407, %v776
        %v778 = vpop.f32.mrb[0].mxu0
        %v779 = vpop.f32.mrb[0].mxu0
        %v780 = vadd.f32 %v407, %v779
        %v781 = vpop.f32.mrb[0].mxu0
        %782 = vmatprep.mubr.bf16.mxu0 0
        %783 = vmatmul.mubr.bf16.gmra.mrb[0].mxu0 %v601
        %v784 = vpop.f32.mrb[0].mxu0
        %v785 = vadd.f32 %v407, %v784
        %v786 = vpop.f32.mrb[0].mxu0
        %v787 = vpop.f32.mrb[0].mxu0
        %v788 = vadd.f32 %v407, %v787
        %v789 = vpop.f32.mrb[0].mxu0
        %790 = vmatprep.mubr.bf16.mxu0 0
        %791 = vmatmul.mubr.bf16.gmra.mrb[0].mxu0 %v604
        %v792 = vpop.f32.mrb[0].mxu0
        %v793 = vadd.f32 %v407, %v792
        %v794 = vpop.f32.mrb[0].mxu0
        %v795 = vpop.f32.mrb[0].mxu0
        %v796 = vadd.f32 %v407, %v795
        %v797 = vpop.f32.mrb[0].mxu0
        %798 = vmatprep.mubr.bf16.mxu0 0
        %799 = vmatmul.mubr.bf16.gmra.mrb[0].mxu0 %v607
        %v800 = vpop.f32.mrb[0].mxu0
        %v801 = vadd.f32 %v407, %v800
        %v802 = vpop.f32.mrb[0].mxu0
        %v803 = vpop.f32.mrb[0].mxu0
        %v804 = vadd.f32 %v407, %v803
        %v805 = vpop.f32.mrb[0].mxu0
        %806 = vmatprep.mubr.bf16.mxu0 0
        %807 = vmatmul.mubr.bf16.gmra.mrb[0].mxu0 %v610
        %v808 = vpop.f32.mrb[0].mxu0
        %v809 = vadd.f32 %v407, %v808
        %v810 = vpop.f32.mrb[0].mxu0
        %v811 = vpop.f32.mrb[0].mxu0
        %v812 = vadd.f32 %v407, %v811
        %v813 = vpop.f32.mrb[0].mxu0
        %814 = vmatprep.mubr.bf16.mxu0 0
        %815 = vmatmul.mubr.bf16.gmra.mrb[0].mxu0 %v613
        %v816 = vpop.f32.mrb[0].mxu0
        %v817 = vadd.f32 %v407, %v816
        %v818 = vpop.f32.mrb[0].mxu0
        %v819 = vpop.f32.mrb[0].mxu0
        %v820 = vadd.f32 %v407, %v819
        %v821 = vpop.f32.mrb[0].mxu0
        %822 = vmatprep.mubr.bf16.mxu0 0
        %823 = vmatmul.mubr.bf16.gmra.mrb[0].mxu0 %v616
        %v824 = vpop.f32.mrb[0].mxu0
        %v825 = vadd.f32 %v407, %v824
        %v826 = vpop.f32.mrb[0].mxu0
        %v827 = vpop.f32.mrb[0].mxu0
        %v828 = vadd.f32 %v407, %v827
        %v829 = vpop.f32.mrb[0].mxu0
        %830 = vmatprep.mubr.bf16.mxu0 0
        %831 = vmatmul.mubr.bf16.gmra.mrb[0].mxu0 %v619
        %v832 = vpop.f32.mrb[0].mxu0
        %v833 = vadd.f32 %v407, %v832
        %v834 = vpop.f32.mrb[0].mxu0
        %v835 = vpop.f32.mrb[0].mxu0
        %v836 = vadd.f32 %v407, %v835
        %v837 = vpop.f32.mrb[0].mxu0
        %838 = vmatprep.mubr.bf16.mxu0 0
        %839 = vmatmul.mubr.bf16.gmra.mrb[0].mxu0 %v622
        %v840 = vpop.f32.mrb[0].mxu0
        %v841 = vadd.f32 %v407, %v840
        %v842 = vpop.f32.mrb[0].mxu0
        %v843 = vpop.f32.mrb[0].mxu0
        %v844 = vadd.f32 %v407, %v843
        %v845 = vpop.f32.mrb[0].mxu0
        %846 = vmatprep.mubr.bf16.mxu0 0
        %847 = vmatmul.mubr.bf16.gmra.mrb[0].mxu0 %v625
        %v848 = vpop.f32.mrb[0].mxu0
        %v849 = vadd.f32 %v407, %v848
        %v850 = vpop.f32.mrb[0].mxu0
        %v851 = vpop.f32.mrb[0].mxu0
        %v852 = vadd.f32 %v407, %v851
        %v853 = vpop.f32.mrb[0].mxu0
        %854 = vmatprep.mubr.bf16.mxu0 0
        %855 = vmatmul.mubr.bf16.gmra.mrb[0].mxu0 %v628
        %v856 = vpop.f32.mrb[0].mxu0
        %v857 = vadd.f32 %v407, %v856
        %v858 = vpop.f32.mrb[0].mxu0
        %v859 = vpop.f32.mrb[0].mxu0
        %v860 = vadd.f32 %v407, %v859
        %v861 = vpop.f32.mrb[0].mxu0
        %862 = vmatprep.mubr.bf16.mxu0 0
        %863 = vmatmul.mubr.bf16.gmra.mrb[0].mxu0 %v631
        %v864 = vpop.f32.mrb[0].mxu0
        %v865 = vadd.f32 %v407, %v864
        %v866 = vpop.f32.mrb[0].mxu0
        %v867 = vpop.f32.mrb[0].mxu0
        %v868 = vadd.f32 %v407, %v867
        %v869 = vpop.f32.mrb[0].mxu0
        %870 = vmatprep.mubr.bf16.mxu0 0
        %871 = vmatmul.mubr.bf16.gmra.mrb[0].mxu0 %v634
        %v872 = vpop.f32.mrb[0].mxu0
        %v873 = vadd.f32 %v407, %v872
        %v874 = vpop.f32.mrb[0].mxu0
        %v875 = vpop.f32.mrb[0].mxu0
        %v876 = vadd.f32 %v407, %v875
        %v877 = vpop.f32.mrb[0].mxu0
        %878 = vmatprep.mubr.bf16.mxu0 0
        %879 = vmatmul.mubr.bf16.gmra.mrb[0].mxu0 %v637
        %v880 = vpop.f32.mrb[0].mxu0
        %v881 = vadd.f32 %v407, %v880
        %v882 = vpop.f32.mrb[0].mxu0
        %v883 = vpop.f32.mrb[0].mxu0
        %v884 = vadd.f32 %v407, %v883
        %v885 = vpop.f32.mrb[0].mxu0
        %886 = vmatprep.mubr.bf16.mxu0 0
        %887 = vmatmul.mubr.bf16.gmra.mrb[0].mxu0 %v640
        %v888 = vpop.f32.mrb[0].mxu0
        %v889 = vadd.f32 %v407, %v888
        %v890 = vpop.f32.mrb[0].mxu0
        %v891 = vpop.f32.mrb[0].mxu0
        %v892 = vadd.f32 %v407, %v891
        %v893 = vpop.f32.mrb[0].mxu0
        %894 = vmatprep.mubr.bf16.mxu0 0
        %895 = vmatmul.mubr.bf16.gmra.mrb[0].mxu0 %v643
        %v896 = vpop.f32.mrb[0].mxu0
        %v897 = vadd.f32 %v407, %v896
        %v898 = vpop.f32.mrb[0].mxu0
        %v899 = vpop.f32.mrb[0].mxu0
        %v900 = vadd.f32 %v407, %v899
        %v901 = vpop.f32.mrb[0].mxu0
        %902 = vmatprep.mubr.bf16.mxu0 0
        %903 = vmatmul.mubr.bf16.gmra.mrb[0].mxu0 %v646
        %v904 = vpop.f32.mrb[0].mxu0
        %v905 = vadd.f32 %v407, %v904
        %v906 = vpop.f32.mrb[0].mxu0
        %v907 = vpop.f32.mrb[0].mxu0
        %v908 = vadd.f32 %v407, %v907
        %v909 = vpop.f32.mrb[0].mxu0
        %910 = vmatprep.mubr.bf16.mxu0 0
        %911 = vmatmul.mubr.bf16.gmra.mrb[0].mxu0 %v649
        %v912 = vpop.f32.mrb[0].mxu0
        %v913 = vadd.f32 %v407, %v912
        %v914 = vpop.f32.mrb[0].mxu0
        %v915 = vpop.f32.mrb[0].mxu0
        %v916 = vadd.f32 %v407, %v915
        %v917 = vpop.f32.mrb[0].mxu0
        %918 = vmatprep.mubr.bf16.mxu0 0
        %919 = vmatmul.mubr.bf16.gmra.mrb[0].mxu0 %v652
        %v920 = vpop.f32.mrb[0].mxu0
        %v921 = vadd.f32 %v407, %v920
        %v922 = vpop.f32.mrb[0].mxu0
        %v923 = vpop.f32.mrb[0].mxu0
        %v924 = vadd.f32 %v407, %v923
        %v925 = vpop.f32.mrb[0].mxu0
        %926 = vmatprep.mubr.bf16.mxu0 0
        %927 = vmatmul.mubr.bf16.gmra.mrb[0].mxu0 %v655
        %v928 = vpop.f32.mrb[0].mxu0
        %v929 = vadd.f32 %v407, %v928
        %v930 = vpop.f32.mrb[0].mxu0
        %v931 = vpop.f32.mrb[0].mxu0
        %v932 = vadd.f32 %v407, %v931
        %v933 = vpop.f32.mrb[0].mxu0
        %934 = vmatprep.mubr.bf16.mxu0 0
        %935 = vmatmul.mubr.bf16.gmra.mrb[0].mxu0 %v658
        %v936 = vpop.f32.mrb[0].mxu0
        %v937 = vadd.f32 %v407, %v936
        %v938 = vpop.f32.mrb[0].mxu0
        %v939 = vpop.f32.mrb[0].mxu0
        %v940 = vadd.f32 %v407, %v939
        %v941 = vpop.f32.mrb[0].mxu0
        %942 = vmatprep.mubr.bf16.mxu0 0
        %943 = vmatmul.mubr.bf16.gmra.mrb[0].mxu0 %v661
        %v944 = vpop.f32.mrb[0].mxu0
        %v945 = vadd.f32 %v407, %v944
        %v946 = vpop.f32.mrb[0].mxu0
        %v947 = vpop.f32.mrb[0].mxu0
        %v948 = vadd.f32 %v407, %v947
        %v949 = vpop.f32.mrb[0].mxu0
        %950 = vmatprep.mubr.bf16.mxu0 0
        %951 = vmatmul.mubr.bf16.gmra.mrb[0].mxu0 %v664
        %v952 = vpop.f32.mrb[0].mxu0
        %v953 = vadd.f32 %v407, %v952
        %v954 = vpop.f32.mrb[0].mxu0
        %v955 = vpop.f32.mrb[0].mxu0
        %v956 = vadd.f32 %v407, %v955
        %v957 = vpop.f32.mrb[0].mxu0
        %958 = vdwg.mxu0
        %v959 = vxor.u32 %v705, 2147483648
        %v960 = vxor.u32 %v708, 2147483648
        %v961 = vxor.u32 %v713, 2147483648
        %v962 = vxor.u32 %v716, 2147483648
        %v963 = vxor.u32 %v721, 2147483648
        %v964 = vxor.u32 %v724, 2147483648
        %v965 = vxor.u32 %v729, 2147483648
        %v966 = vxor.u32 %v732, 2147483648
        %v967 = vxor.u32 %v737, 2147483648
        %v968 = vxor.u32 %v740, 2147483648
        %v969 = vxor.u32 %v745, 2147483648
        %v970 = vxor.u32 %v748, 2147483648
        %v971 = vxor.u32 %v753, 2147483648
        %v972 = vxor.u32 %v756, 2147483648
        %v973 = vxor.u32 %v761, 2147483648
        %v974 = vxor.u32 %v764, 2147483648
        %v975 = vxor.u32 %v769, 2147483648
        %v976 = vxor.u32 %v772, 2147483648
        %v977 = vxor.u32 %v777, 2147483648
        %v978 = vxor.u32 %v780, 2147483648
        %v979 = vxor.u32 %v785, 2147483648
        %v980 = vxor.u32 %v788, 2147483648
        %v981 = vxor.u32 %v793, 2147483648
        %v982 = vxor.u32 %v796, 2147483648
        %v983 = vxor.u32 %v801, 2147483648
        %v984 = vxor.u32 %v804, 2147483648
        %v985 = vxor.u32 %v809, 2147483648
        %v986 = vxor.u32 %v812, 2147483648
        %v987 = vxor.u32 %v817, 2147483648
        %v988 = vxor.u32 %v820, 2147483648
        %v989 = vxor.u32 %v825, 2147483648
        %v990 = vxor.u32 %v828, 2147483648
        %v991 = vxor.u32 %v833, 2147483648
        %v992 = vxor.u32 %v836, 2147483648
        %v993 = vxor.u32 %v841, 2147483648
        %v994 = vxor.u32 %v844, 2147483648
        %v995 = vxor.u32 %v849, 2147483648
        %v996 = vxor.u32 %v852, 2147483648
        %v997 = vxor.u32 %v857, 2147483648
        %v998 = vxor.u32 %v860, 2147483648
        %v999 = vxor.u32 %v865, 2147483648
        %v1000 = vxor.u32 %v868, 2147483648
        %v1001 = vxor.u32 %v873, 2147483648
        %v1002 = vxor.u32 %v876, 2147483648
        %v1003 = vxor.u32 %v881, 2147483648
        %v1004 = vxor.u32 %v884, 2147483648
        %v1005 = vxor.u32 %v889, 2147483648
        %v1006 = vxor.u32 %v892, 2147483648
        %v1007 = vxor.u32 %v897, 2147483648
        %v1008 = vxor.u32 %v900, 2147483648
        %v1009 = vxor.u32 %v905, 2147483648
        %v1010 = vxor.u32 %v908, 2147483648
        %v1011 = vxor.u32 %v913, 2147483648
        %v1012 = vxor.u32 %v916, 2147483648
        %v1013 = vxor.u32 %v921, 2147483648
        %v1014 = vxor.u32 %v924, 2147483648
        %v1015 = vxor.u32 %v929, 2147483648
        %v1016 = vxor.u32 %v932, 2147483648
        %v1017 = vxor.u32 %v937, 2147483648
        %v1018 = vxor.u32 %v940, 2147483648
        %v1019 = vxor.u32 %v945, 2147483648
        %v1020 = vxor.u32 %v948, 2147483648
        %v1021 = vxor.u32 %v953, 2147483648
        %v1022 = vxor.u32 %v956, 2147483648
        %v1023 = vmul.f32 %v959, 1.442695
        %v1024 = vpow.pop %v1023
        %v1025 = vmul.f32 %v960, 1.442695
        %v1026 = vpow.pop %v1025
        %v1027 = vmul.f32 %v961, 1.442695
        %v1028 = vpow.pop %v1027
        %v1029 = vmul.f32 %v962, 1.442695
        %v1030 = vpow.pop %v1029
        %v1031 = vmul.f32 %v963, 1.442695
        %v1032 = vpow.pop %v1031
        %v1033 = vmul.f32 %v964, 1.442695
        %v1034 = vpow.pop %v1033
        %v1035 = vmul.f32 %v965, 1.442695
        %v1036 = vpow.pop %v1035
        %v1037 = vmul.f32 %v966, 1.442695
        %v1038 = vpow.pop %v1037
        %v1039 = vmul.f32 %v967, 1.442695
        %v1040 = vpow.pop %v1039
        %v1041 = vmul.f32 %v968, 1.442695
        %v1042 = vpow.pop %v1041
        %v1043 = vmul.f32 %v969, 1.442695
        %v1044 = vpow.pop %v1043
        %v1045 = vmul.f32 %v970, 1.442695
        %v1046 = vpow.pop %v1045
        %v1047 = vmul.f32 %v971, 1.442695
        %v1048 = vpow.pop %v1047
        %v1049 = vmul.f32 %v972, 1.442695
        %v1050 = vpow.pop %v1049
        %v1051 = vmul.f32 %v973, 1.442695
        %v1052 = vpow.pop %v1051
        %v1053 = vmul.f32 %v974, 1.442695
        %v1054 = vpow.pop %v1053
        %v1055 = vmul.f32 %v975, 1.442695
        %v1056 = vpow.pop %v1055
        %v1057 = vmul.f32 %v976, 1.442695
        %v1058 = vpow.pop %v1057
        %v1059 = vmul.f32 %v977, 1.442695
        %v1060 = vpow.pop %v1059
        %v1061 = vmul.f32 %v978, 1.442695
        %v1062 = vpow.pop %v1061
        %v1063 = vmul.f32 %v979, 1.442695
        %v1064 = vpow.pop %v1063
        %v1065 = vmul.f32 %v980, 1.442695
        %v1066 = vpow.pop %v1065
        %v1067 = vmul.f32 %v981, 1.442695
        %v1068 = vpow.pop %v1067
        %v1069 = vmul.f32 %v982, 1.442695
        %v1070 = vpow.pop %v1069
        %v1071 = vmul.f32 %v983, 1.442695
        %v1072 = vpow.pop %v1071
        %v1073 = vmul.f32 %v984, 1.442695
        %v1074 = vpow.pop %v1073
        %v1075 = vmul.f32 %v985, 1.442695
        %v1076 = vpow.pop %v1075
        %v1077 = vmul.f32 %v986, 1.442695
        %v1078 = vpow.pop %v1077
        %v1079 = vmul.f32 %v987, 1.442695
        %v1080 = vpow.pop %v1079
        %v1081 = vmul.f32 %v988, 1.442695
        %v1082 = vpow.pop %v1081
        %v1083 = vmul.f32 %v989, 1.442695
        %v1084 = vpow.pop %v1083
        %v1085 = vmul.f32 %v990, 1.442695
        %v1086 = vpow.pop %v1085
        %v1087 = vmul.f32 %v991, 1.442695
        %v1088 = vpow.pop %v1087
        %v1089 = vmul.f32 %v992, 1.442695
        %v1090 = vpow.pop %v1089
        %v1091 = vmul.f32 %v993, 1.442695
        %v1092 = vpow.pop %v1091
        %v1093 = vmul.f32 %v994, 1.442695
        %v1094 = vpow.pop %v1093
        %v1095 = vmul.f32 %v995, 1.442695
        %v1096 = vpow.pop %v1095
        %v1097 = vmul.f32 %v996, 1.442695
        %v1098 = vpow.pop %v1097
        %v1099 = vmul.f32 %v997, 1.442695
        %v1100 = vpow.pop %v1099
        %v1101 = vmul.f32 %v998, 1.442695
        %v1102 = vpow.pop %v1101
        %v1103 = vmul.f32 %v999, 1.442695
        %v1104 = vpow.pop %v1103
        %v1105 = vmul.f32 %v1000, 1.442695
        %v1106 = vpow.pop %v1105
        %v1107 = vmul.f32 %v1001, 1.442695
        %v1108 = vpow.pop %v1107
        %v1109 = vmul.f32 %v1002, 1.442695
        %v1110 = vpow.pop %v1109
        %v1111 = vmul.f32 %v1003, 1.442695
        %v1112 = vpow.pop %v1111
        %v1113 = vmul.f32 %v1004, 1.442695
        %v1114 = vpow.pop %v1113
        %v1115 = vmul.f32 %v1005, 1.442695
        %v1116 = vpow.pop %v1115
        %v1117 = vmul.f32 %v1006, 1.442695
        %v1118 = vpow.pop %v1117
        %v1119 = vmul.f32 %v1007, 1.442695
        %v1120 = vpow.pop %v1119
        %v1121 = vmul.f32 %v1008, 1.442695
        %v1122 = vpow.pop %v1121
        %v1123 = vmul.f32 %v1009, 1.442695
        %v1124 = vpow.pop %v1123
        %v1125 = vmul.f32 %v1010, 1.442695
        %v1126 = vpow.pop %v1125
        %v1127 = vmul.f32 %v1011, 1.442695
        %v1128 = vpow.pop %v1127
        %v1129 = vmul.f32 %v1012, 1.442695
        %v1130 = vpow.pop %v1129
        %v1131 = vmul.f32 %v1013, 1.442695
        %v1132 = vpow.pop %v1131
        %v1133 = vmul.f32 %v1014, 1.442695
        %v1134 = vpow.pop %v1133
        %v1135 = vmul.f32 %v1015, 1.442695
        %v1136 = vpow.pop %v1135
        %v1137 = vmul.f32 %v1016, 1.442695
        %v1138 = vpow.pop %v1137
        %v1139 = vmul.f32 %v1017, 1.442695
        %v1140 = vpow.pop %v1139
        %v1141 = vmul.f32 %v1018, 1.442695
        %v1142 = vpow.pop %v1141
        %v1143 = vmul.f32 %v1019, 1.442695
        %v1144 = vpow.pop %v1143
        %v1145 = vmul.f32 %v1020, 1.442695
        %v1146 = vpow.pop %v1145
        %v1147 = vmul.f32 %v1021, 1.442695
        %v1148 = vpow.pop %v1147
        %v1149 = vmul.f32 %v1022, 1.442695
        %v1150 = vpow.pop %v1149
        %v1151 = vadd.f32 %v1024, 1.0
        %v1152 = vadd.f32 %v1026, 1.0
        %v1153 = vadd.f32 %v1028, 1.0
        %v1154 = vadd.f32 %v1030, 1.0
        %v1155 = vadd.f32 %v1032, 1.0
        %v1156 = vadd.f32 %v1034, 1.0
        %v1157 = vadd.f32 %v1036, 1.0
        %v1158 = vadd.f32 %v1038, 1.0
        %v1159 = vadd.f32 %v1040, 1.0
        %v1160 = vadd.f32 %v1042, 1.0
        %v1161 = vadd.f32 %v1044, 1.0
        %v1162 = vadd.f32 %v1046, 1.0
        %v1163 = vadd.f32 %v1048, 1.0
        %v1164 = vadd.f32 %v1050, 1.0
        %v1165 = vadd.f32 %v1052, 1.0
        %v1166 = vadd.f32 %v1054, 1.0
        %v1167 = vadd.f32 %v1056, 1.0
        %v1168 = vadd.f32 %v1058, 1.0
        %v1169 = vadd.f32 %v1060, 1.0
        %v1170 = vadd.f32 %v1062, 1.0
        %v1171 = vadd.f32 %v1064, 1.0
        %v1172 = vadd.f32 %v1066, 1.0
        %v1173 = vadd.f32 %v1068, 1.0
        %v1174 = vadd.f32 %v1070, 1.0
        %v1175 = vadd.f32 %v1072, 1.0
        %v1176 = vadd.f32 %v1074, 1.0
        %v1177 = vadd.f32 %v1076, 1.0
        %v1178 = vadd.f32 %v1078, 1.0
        %v1179 = vadd.f32 %v1080, 1.0
        %v1180 = vadd.f32 %v1082, 1.0
        %v1181 = vadd.f32 %v1084, 1.0
        %v1182 = vadd.f32 %v1086, 1.0
        %v1183 = vadd.f32 %v1088, 1.0
        %v1184 = vadd.f32 %v1090, 1.0
        %v1185 = vadd.f32 %v1092, 1.0
        %v1186 = vadd.f32 %v1094, 1.0
        %v1187 = vadd.f32 %v1096, 1.0
        %v1188 = vadd.f32 %v1098, 1.0
        %v1189 = vadd.f32 %v1100, 1.0
        %v1190 = vadd.f32 %v1102, 1.0
        %v1191 = vadd.f32 %v1104, 1.0
        %v1192 = vadd.f32 %v1106, 1.0
        %v1193 = vadd.f32 %v1108, 1.0
        %v1194 = vadd.f32 %v1110, 1.0
        %v1195 = vadd.f32 %v1112, 1.0
        %v1196 = vadd.f32 %v1114, 1.0
        %v1197 = vadd.f32 %v1116, 1.0
        %v1198 = vadd.f32 %v1118, 1.0
        %v1199 = vadd.f32 %v1120, 1.0
        %v1200 = vadd.f32 %v1122, 1.0
        %v1201 = vadd.f32 %v1124, 1.0
        %v1202 = vadd.f32 %v1126, 1.0
        %v1203 = vadd.f32 %v1128, 1.0
        %v1204 = vadd.f32 %v1130, 1.0
        %v1205 = vadd.f32 %v1132, 1.0
        %v1206 = vadd.f32 %v1134, 1.0
        %v1207 = vadd.f32 %v1136, 1.0
        %v1208 = vadd.f32 %v1138, 1.0
        %v1209 = vadd.f32 %v1140, 1.0
        %v1210 = vadd.f32 %v1142, 1.0
        %v1211 = vadd.f32 %v1144, 1.0
        %v1212 = vadd.f32 %v1146, 1.0
        %v1213 = vadd.f32 %v1148, 1.0
        %v1214 = vadd.f32 %v1150, 1.0
        %v1215 = vrcp.pop %v1151
        %v1216 = vmul.f32 1.0, %v1215
        %v1217 = vrcp.pop %v1152
        %v1218 = vmul.f32 1.0, %v1217
        %v1219 = vrcp.pop %v1153
        %v1220 = vmul.f32 1.0, %v1219
        %v1221 = vrcp.pop %v1154
        %v1222 = vmul.f32 1.0, %v1221
        %v1223 = vrcp.pop %v1155
        %v1224 = vmul.f32 1.0, %v1223
        %v1225 = vrcp.pop %v1156
        %v1226 = vmul.f32 1.0, %v1225
        %v1227 = vrcp.pop %v1157
        %v1228 = vmul.f32 1.0, %v1227
        %v1229 = vrcp.pop %v1158
        %v1230 = vmul.f32 1.0, %v1229
        %v1231 = vrcp.pop %v1159
        %v1232 = vmul.f32 1.0, %v1231
        %v1233 = vrcp.pop %v1160
        %v1234 = vmul.f32 1.0, %v1233
        %v1235 = vrcp.pop %v1161
        %v1236 = vmul.f32 1.0, %v1235
        %v1237 = vrcp.pop %v1162
        %v1238 = vmul.f32 1.0, %v1237
        %v1239 = vrcp.pop %v1163
        %v1240 = vmul.f32 1.0, %v1239
        %v1241 = vrcp.pop %v1164
        %v1242 = vmul.f32 1.0, %v1241
        %v1243 = vrcp.pop %v1165
        %v1244 = vmul.f32 1.0, %v1243
        %v1245 = vrcp.pop %v1166
        %v1246 = vmul.f32 1.0, %v1245
        %v1247 = vrcp.pop %v1167
        %v1248 = vmul.f32 1.0, %v1247
        %v1249 = vrcp.pop %v1168
        %v1250 = vmul.f32 1.0, %v1249
        %v1251 = vrcp.pop %v1169
        %v1252 = vmul.f32 1.0, %v1251
        %v1253 = vrcp.pop %v1170
        %v1254 = vmul.f32 1.0, %v1253
        %v1255 = vrcp.pop %v1171
        %v1256 = vmul.f32 1.0, %v1255
        %v1257 = vrcp.pop %v1172
        %v1258 = vmul.f32 1.0, %v1257
        %v1259 = vrcp.pop %v1173
        %v1260 = vmul.f32 1.0, %v1259
        %v1261 = vrcp.pop %v1174
        %v1262 = vmul.f32 1.0, %v1261
        %v1263 = vrcp.pop %v1175
        %v1264 = vmul.f32 1.0, %v1263
        %v1265 = vrcp.pop %v1176
        %v1266 = vmul.f32 1.0, %v1265
        %v1267 = vrcp.pop %v1177
        %v1268 = vmul.f32 1.0, %v1267
        %v1269 = vrcp.pop %v1178
        %v1270 = vmul.f32 1.0, %v1269
        %v1271 = vrcp.pop %v1179
        %v1272 = vmul.f32 1.0, %v1271
        %v1273 = vrcp.pop %v1180
        %v1274 = vmul.f32 1.0, %v1273
        %v1275 = vrcp.pop %v1181
        %v1276 = vmul.f32 1.0, %v1275
        %v1277 = vrcp.pop %v1182
        %v1278 = vmul.f32 1.0, %v1277
        %v1279 = vrcp.pop %v1183
        %v1280 = vmul.f32 1.0, %v1279
        %v1281 = vrcp.pop %v1184
        %v1282 = vmul.f32 1.0, %v1281
        %v1283 = vrcp.pop %v1185
        %v1284 = vmul.f32 1.0, %v1283
        %v1285 = vrcp.pop %v1186
        %v1286 = vmul.f32 1.0, %v1285
        %v1287 = vrcp.pop %v1187
        %v1288 = vmul.f32 1.0, %v1287
        %v1289 = vrcp.pop %v1188
        %v1290 = vmul.f32 1.0, %v1289
        %v1291 = vrcp.pop %v1189
        %v1292 = vmul.f32 1.0, %v1291
        %v1293 = vrcp.pop %v1190
        %v1294 = vmul.f32 1.0, %v1293
        %v1295 = vrcp.pop %v1191
        %v1296 = vmul.f32 1.0, %v1295
        %v1297 = vrcp.pop %v1192
        %v1298 = vmul.f32 1.0, %v1297
        %v1299 = vrcp.pop %v1193
        %v1300 = vmul.f32 1.0, %v1299
        %v1301 = vrcp.pop %v1194
        %v1302 = vmul.f32 1.0, %v1301
        %v1303 = vrcp.pop %v1195
        %v1304 = vmul.f32 1.0, %v1303
        %v1305 = vrcp.pop %v1196
        %v1306 = vmul.f32 1.0, %v1305
        %v1307 = vrcp.pop %v1197
        %v1308 = vmul.f32 1.0, %v1307
        %v1309 = vrcp.pop %v1198
        %v1310 = vmul.f32 1.0, %v1309
        %v1311 = vrcp.pop %v1199
        %v1312 = vmul.f32 1.0, %v1311
        %v1313 = vrcp.pop %v1200
        %v1314 = vmul.f32 1.0, %v1313
        %v1315 = vrcp.pop %v1201
        %v1316 = vmul.f32 1.0, %v1315
        %v1317 = vrcp.pop %v1202
        %v1318 = vmul.f32 1.0, %v1317
        %v1319 = vrcp.pop %v1203
        %v1320 = vmul.f32 1.0, %v1319
        %v1321 = vrcp.pop %v1204
        %v1322 = vmul.f32 1.0, %v1321
        %v1323 = vrcp.pop %v1205
        %v1324 = vmul.f32 1.0, %v1323
        %v1325 = vrcp.pop %v1206
        %v1326 = vmul.f32 1.0, %v1325
        %v1327 = vrcp.pop %v1207
        %v1328 = vmul.f32 1.0, %v1327
        %v1329 = vrcp.pop %v1208
        %v1330 = vmul.f32 1.0, %v1329
        %v1331 = vrcp.pop %v1209
        %v1332 = vmul.f32 1.0, %v1331
        %v1333 = vrcp.pop %v1210
        %v1334 = vmul.f32 1.0, %v1333
        %v1335 = vrcp.pop %v1211
        %v1336 = vmul.f32 1.0, %v1335
        %v1337 = vrcp.pop %v1212
        %v1338 = vmul.f32 1.0, %v1337
        %v1339 = vrcp.pop %v1213
        %v1340 = vmul.f32 1.0, %v1339
        %v1341 = vrcp.pop %v1214
        %v1342 = vmul.f32 1.0, %v1341
        %v1343 = vmul.f32 %v705, %v1216
        %v1344 = vmul.f32 %v708, %v1218
        %v1345 = vmul.f32 %v713, %v1220
        %v1346 = vmul.f32 %v716, %v1222
        %v1347 = vmul.f32 %v721, %v1224
        %v1348 = vmul.f32 %v724, %v1226
        %v1349 = vmul.f32 %v729, %v1228
        %v1350 = vmul.f32 %v732, %v1230
        %v1351 = vmul.f32 %v737, %v1232
        %v1352 = vmul.f32 %v740, %v1234
        %v1353 = vmul.f32 %v745, %v1236
        %v1354 = vmul.f32 %v748, %v1238
        %v1355 = vmul.f32 %v753, %v1240
        %v1356 = vmul.f32 %v756, %v1242
        %v1357 = vmul.f32 %v761, %v1244
        %v1358 = vmul.f32 %v764, %v1246
        %v1359 = vmul.f32 %v769, %v1248
        %v1360 = vmul.f32 %v772, %v1250
        %v1361 = vmul.f32 %v777, %v1252
        %v1362 = vmul.f32 %v780, %v1254
        %v1363 = vmul.f32 %v785, %v1256
        %v1364 = vmul.f32 %v788, %v1258
        %v1365 = vmul.f32 %v793, %v1260
        %v1366 = vmul.f32 %v796, %v1262
        %v1367 = vmul.f32 %v801, %v1264
        %v1368 = vmul.f32 %v804, %v1266
        %v1369 = vmul.f32 %v809, %v1268
        %v1370 = vmul.f32 %v812, %v1270
        %v1371 = vmul.f32 %v817, %v1272
        %v1372 = vmul.f32 %v820, %v1274
        %v1373 = vmul.f32 %v825, %v1276
        %v1374 = vmul.f32 %v828, %v1278
        %v1375 = vmul.f32 %v833, %v1280
        %v1376 = vmul.f32 %v836, %v1282
        %v1377 = vmul.f32 %v841, %v1284
        %v1378 = vmul.f32 %v844, %v1286
        %v1379 = vmul.f32 %v849, %v1288
        %v1380 = vmul.f32 %v852, %v1290
        %v1381 = vmul.f32 %v857, %v1292
        %v1382 = vmul.f32 %v860, %v1294
        %v1383 = vmul.f32 %v865, %v1296
        %v1384 = vmul.f32 %v868, %v1298
        %v1385 = vmul.f32 %v873, %v1300
        %v1386 = vmul.f32 %v876, %v1302
        %v1387 = vmul.f32 %v881, %v1304
        %v1388 = vmul.f32 %v884, %v1306
        %v1389 = vmul.f32 %v889, %v1308
        %v1390 = vmul.f32 %v892, %v1310
        %v1391 = vmul.f32 %v897, %v1312
        %v1392 = vmul.f32 %v900, %v1314
        %v1393 = vmul.f32 %v905, %v1316
        %v1394 = vmul.f32 %v908, %v1318
        %v1395 = vmul.f32 %v913, %v1320
        %v1396 = vmul.f32 %v916, %v1322
        %v1397 = vmul.f32 %v921, %v1324
        %v1398 = vmul.f32 %v924, %v1326
        %v1399 = vmul.f32 %v929, %v1328
        %v1400 = vmul.f32 %v932, %v1330
        %v1401 = vmul.f32 %v937, %v1332
        %v1402 = vmul.f32 %v940, %v1334
        %v1403 = vmul.f32 %v945, %v1336
        %v1404 = vmul.f32 %v948, %v1338
        %v1405 = vmul.f32 %v953, %v1340
        %v1406 = vmul.f32 %v956, %v1342
        %v1407 = vpack.c.bf16 %v1344, %v1343
        %v1408 = vpack.c.bf16 %v1346, %v1345
        %v1409 = vpack.c.bf16 %v1348, %v1347
        %v1410 = vpack.c.bf16 %v1350, %v1349
        %v1411 = vpack.c.bf16 %v1352, %v1351
        %v1412 = vpack.c.bf16 %v1354, %v1353
        %v1413 = vpack.c.bf16 %v1356, %v1355
        %v1414 = vpack.c.bf16 %v1358, %v1357
        %v1415 = vpack.c.bf16 %v1360, %v1359
        %v1416 = vpack.c.bf16 %v1362, %v1361
        %v1417 = vpack.c.bf16 %v1364, %v1363
        %v1418 = vpack.c.bf16 %v1366, %v1365
        %v1419 = vpack.c.bf16 %v1368, %v1367
        %v1420 = vpack.c.bf16 %v1370, %v1369
        %v1421 = vpack.c.bf16 %v1372, %v1371
        %v1422 = vpack.c.bf16 %v1374, %v1373
        %v1423 = vpack.c.bf16 %v1376, %v1375
        %v1424 = vpack.c.bf16 %v1378, %v1377
        %v1425 = vpack.c.bf16 %v1380, %v1379
        %v1426 = vpack.c.bf16 %v1382, %v1381
        %v1427 = vpack.c.bf16 %v1384, %v1383
        %v1428 = vpack.c.bf16 %v1386, %v1385
        %v1429 = vpack.c.bf16 %v1388, %v1387
        %v1430 = vpack.c.bf16 %v1390, %v1389
        %v1431 = vpack.c.bf16 %v1392, %v1391
        %v1432 = vpack.c.bf16 %v1394, %v1393
        %v1433 = vpack.c.bf16 %v1396, %v1395
        %v1434 = vpack.c.bf16 %v1398, %v1397
        %v1435 = vpack.c.bf16 %v1400, %v1399
        %v1436 = vpack.c.bf16 %v1402, %v1401
        %v1437 = vpack.c.bf16 %v1404, %v1403
        %v1438 = vpack.c.bf16 %v1406, %v1405
        %v1471 = vunpack.c.l.b16 %v1407
        %v1472 = vunpack.c.h.b16 %v1407
        %v1473 = vunpack.c.l.b16 %v1408
        %v1474 = vunpack.c.h.b16 %v1408
        %v1475 = vunpack.c.l.b16 %v1409
        %v1476 = vunpack.c.h.b16 %v1409
        %v1477 = vunpack.c.l.b16 %v1410
        %v1478 = vunpack.c.h.b16 %v1410
        %v1479 = vunpack.c.l.b16 %v1411
        %v1480 = vunpack.c.h.b16 %v1411
        %v1481 = vunpack.c.l.b16 %v1412
        %v1482 = vunpack.c.h.b16 %v1412
        %v1483 = vunpack.c.l.b16 %v1413
        %v1484 = vunpack.c.h.b16 %v1413
        %v1485 = vunpack.c.l.b16 %v1414
        %v1486 = vunpack.c.h.b16 %v1414
        %v1487 = vunpack.c.l.b16 %v1415
        %v1488 = vunpack.c.h.b16 %v1415
        %v1489 = vunpack.c.l.b16 %v1416
        %v1490 = vunpack.c.h.b16 %v1416
        %v1491 = vunpack.c.l.b16 %v1417
        %v1492 = vunpack.c.h.b16 %v1417
        %v1493 = vunpack.c.l.b16 %v1418
        %v1494 = vunpack.c.h.b16 %v1418
        %v1495 = vunpack.c.l.b16 %v1419
        %v1496 = vunpack.c.h.b16 %v1419
        %v1497 = vunpack.c.l.b16 %v1420
        %v1498 = vunpack.c.h.b16 %v1420
        %v1499 = vunpack.c.l.b16 %v1421
        %v1500 = vunpack.c.h.b16 %v1421
        %v1501 = vunpack.c.l.b16 %v1422
        %v1502 = vunpack.c.h.b16 %v1422
        %v1503 = vunpack.c.l.b16 %v1423
        %v1504 = vunpack.c.h.b16 %v1423
        %v1505 = vunpack.c.l.b16 %v1424
        %v1506 = vunpack.c.h.b16 %v1424
        %v1507 = vunpack.c.l.b16 %v1425
        %v1508 = vunpack.c.h.b16 %v1425
        %v1509 = vunpack.c.l.b16 %v1426
        %v1510 = vunpack.c.h.b16 %v1426
        %v1511 = vunpack.c.l.b16 %v1427
        %v1512 = vunpack.c.h.b16 %v1427
        %v1513 = vunpack.c.l.b16 %v1428
        %v1514 = vunpack.c.h.b16 %v1428
        %v1515 = vunpack.c.l.b16 %v1429
        %v1516 = vunpack.c.h.b16 %v1429
        %v1517 = vunpack.c.l.b16 %v1430
        %v1518 = vunpack.c.h.b16 %v1430
        %v1519 = vunpack.c.l.b16 %v1431
        %v1520 = vunpack.c.h.b16 %v1431
        %v1521 = vunpack.c.l.b16 %v1432
        %v1522 = vunpack.c.h.b16 %v1432
        %v1523 = vunpack.c.l.b16 %v1433
        %v1524 = vunpack.c.h.b16 %v1433
        %v1525 = vunpack.c.l.b16 %v1434
        %v1526 = vunpack.c.h.b16 %v1434
        %v1527 = vunpack.c.l.b16 %v1435
        %v1528 = vunpack.c.h.b16 %v1435
        %v1529 = vunpack.c.l.b16 %v1436
        %v1530 = vunpack.c.h.b16 %v1436
        %v1531 = vunpack.c.l.b16 %v1437
        %v1532 = vunpack.c.h.b16 %v1437
        %v1533 = vunpack.c.l.b16 %v1438
        %v1534 = vunpack.c.h.b16 %v1438
        %v1535 = vpack.c.b16 %v1471, %v1471
        %v1536 = vpack.c.b16 %v1472, %v1472
        %v1537 = vpack.c.b16 %v1473, %v1473
        %v1538 = vpack.c.b16 %v1474, %v1474
        %v1539 = vpack.c.b16 %v1475, %v1475
        %v1540 = vpack.c.b16 %v1476, %v1476
        %v1541 = vpack.c.b16 %v1477, %v1477
        %v1542 = vpack.c.b16 %v1478, %v1478
        %v1543 = vpack.c.b16 %v1479, %v1479
        %v1544 = vpack.c.b16 %v1480, %v1480
        %v1545 = vpack.c.b16 %v1481, %v1481
        %v1546 = vpack.c.b16 %v1482, %v1482
        %v1547 = vpack.c.b16 %v1483, %v1483
        %v1548 = vpack.c.b16 %v1484, %v1484
        %v1549 = vpack.c.b16 %v1485, %v1485
        %v1550 = vpack.c.b16 %v1486, %v1486
        %v1551 = vpack.c.b16 %v1487, %v1487
        %v1552 = vpack.c.b16 %v1488, %v1488
        %v1553 = vpack.c.b16 %v1489, %v1489
        %v1554 = vpack.c.b16 %v1490, %v1490
        %v1555 = vpack.c.b16 %v1491, %v1491
        %v1556 = vpack.c.b16 %v1492, %v1492
        %v1557 = vpack.c.b16 %v1493, %v1493
        %v1558 = vpack.c.b16 %v1494, %v1494
        %v1559 = vpack.c.b16 %v1495, %v1495
        %v1560 = vpack.c.b16 %v1496, %v1496
        %v1561 = vpack.c.b16 %v1497, %v1497
        %v1562 = vpack.c.b16 %v1498, %v1498
        %v1563 = vpack.c.b16 %v1499, %v1499
        %v1564 = vpack.c.b16 %v1500, %v1500
        %v1565 = vpack.c.b16 %v1501, %v1501
        %v1566 = vpack.c.b16 %v1502, %v1502
        %v1567 = vpack.c.b16 %v1503, %v1503
        %v1568 = vpack.c.b16 %v1504, %v1504
        %v1569 = vpack.c.b16 %v1505, %v1505
        %v1570 = vpack.c.b16 %v1506, %v1506
        %v1571 = vpack.c.b16 %v1507, %v1507
        %v1572 = vpack.c.b16 %v1508, %v1508
        %v1573 = vpack.c.b16 %v1509, %v1509
        %v1574 = vpack.c.b16 %v1510, %v1510
        %v1575 = vpack.c.b16 %v1511, %v1511
        %v1576 = vpack.c.b16 %v1512, %v1512
        %v1577 = vpack.c.b16 %v1513, %v1513
        %v1578 = vpack.c.b16 %v1514, %v1514
        %v1579 = vpack.c.b16 %v1515, %v1515
        %v1580 = vpack.c.b16 %v1516, %v1516
        %v1581 = vpack.c.b16 %v1517, %v1517
        %v1582 = vpack.c.b16 %v1518, %v1518
        %v1583 = vpack.c.b16 %v1519, %v1519
        %v1584 = vpack.c.b16 %v1520, %v1520
        %v1585 = vpack.c.b16 %v1521, %v1521
        %v1586 = vpack.c.b16 %v1522, %v1522
        %v1587 = vpack.c.b16 %v1523, %v1523
        %v1588 = vpack.c.b16 %v1524, %v1524
        %v1589 = vpack.c.b16 %v1525, %v1525
        %v1590 = vpack.c.b16 %v1526, %v1526
        %v1591 = vpack.c.b16 %v1527, %v1527
        %v1592 = vpack.c.b16 %v1528, %v1528
        %v1593 = vpack.c.b16 %v1529, %v1529
        %v1594 = vpack.c.b16 %v1530, %v1530
        %v1595 = vpack.c.b16 %v1531, %v1531
        %v1596 = vpack.c.b16 %v1532, %v1532
        %v1597 = vpack.c.b16 %v1533, %v1533
        %v1598 = vpack.c.b16 %v1534, %v1534
        %1663 = vst [vmem:[%s325] sm:$0xf] %v1535
        %1664 = vst [vmem:[%s325 + $0x4] sm:$0xf] %v1536
        %1665 = vst [vmem:[%s325 + $0x8] sm:$0xf] %v1537
        %1666 = vst [vmem:[%s325 + $0xc] sm:$0xf] %v1538
        %1667 = vst [vmem:[%s325 + $0x10] sm:$0xf] %v1539
        %1668 = vst [vmem:[%s325 + $0x14] sm:$0xf] %v1540
        %1669 = vst [vmem:[%s325 + $0x18] sm:$0xf] %v1541
        %1670 = vst [vmem:[%s325 + $0x1c] sm:$0xf] %v1542
        %1671 = vst [vmem:[%s325 + $0x20] sm:$0xf] %v1543
        %1672 = vst [vmem:[%s325 + $0x24] sm:$0xf] %v1544
        %1673 = vst [vmem:[%s325 + $0x28] sm:$0xf] %v1545
        %1674 = vst [vmem:[%s325 + $0x2c] sm:$0xf] %v1546
        %1675 = vst [vmem:[%s325 + $0x30] sm:$0xf] %v1547
        %1676 = vst [vmem:[%s325 + $0x34] sm:$0xf] %v1548
        %1677 = vst [vmem:[%s325 + $0x38] sm:$0xf] %v1549
        %1678 = vst [vmem:[%s325 + $0x3c] sm:$0xf] %v1550
        %1679 = vst [vmem:[%s325 + $0x40] sm:$0xf] %v1551
        %1680 = vst [vmem:[%s325 + $0x44] sm:$0xf] %v1552
        %1681 = vst [vmem:[%s325 + $0x48] sm:$0xf] %v1553
        %1682 = vst [vmem:[%s325 + $0x4c] sm:$0xf] %v1554
        %1683 = vst [vmem:[%s325 + $0x50] sm:$0xf] %v1555
        %1684 = vst [vmem:[%s325 + $0x54] sm:$0xf] %v1556
        %1685 = vst [vmem:[%s325 + $0x58] sm:$0xf] %v1557
        %1686 = vst [vmem:[%s325 + $0x5c] sm:$0xf] %v1558
        %1687 = vst [vmem:[%s325 + $0x60] sm:$0xf] %v1559
        %1688 = vst [vmem:[%s325 + $0x64] sm:$0xf] %v1560
        %1689 = vst [vmem:[%s325 + $0x68] sm:$0xf] %v1561
        %1690 = vst [vmem:[%s325 + $0x6c] sm:$0xf] %v1562
        %1691 = vst [vmem:[%s325 + $0x70] sm:$0xf] %v1563
        %1692 = vst [vmem:[%s325 + $0x74] sm:$0xf] %v1564
        %1693 = vst [vmem:[%s325 + $0x78] sm:$0xf] %v1565
        %1694 = vst [vmem:[%s325 + $0x7c] sm:$0xf] %v1566
        %1695 = vst [vmem:[%s325 + $0x80] sm:$0xf] %v1567
        %1696 = vst [vmem:[%s325 + $0x84] sm:$0xf] %v1568
        %1697 = vst [vmem:[%s325 + $0x88] sm:$0xf] %v1569
        %1698 = vst [vmem:[%s325 + $0x8c] sm:$0xf] %v1570
        %1699 = vst [vmem:[%s325 + $0x90] sm:$0xf] %v1571
        %1700 = vst [vmem:[%s325 + $0x94] sm:$0xf] %v1572
        %1701 = vst [vmem:[%s325 + $0x98] sm:$0xf] %v1573
        %1702 = vst [vmem:[%s325 + $0x9c] sm:$0xf] %v1574
        %1703 = vst [vmem:[%s325 + $0xa0] sm:$0xf] %v1575
        %1704 = vst [vmem:[%s325 + $0xa4] sm:$0xf] %v1576
        %1705 = vst [vmem:[%s325 + $0xa8] sm:$0xf] %v1577
        %1706 = vst [vmem:[%s325 + $0xac] sm:$0xf] %v1578
        %1707 = vst [vmem:[%s325 + $0xb0] sm:$0xf] %v1579
        %1708 = vst [vmem:[%s325 + $0xb4] sm:$0xf] %v1580
        %1709 = vst [vmem:[%s325 + $0xb8] sm:$0xf] %v1581
        %1710 = vst [vmem:[%s325 + $0xbc] sm:$0xf] %v1582
        %1711 = vst [vmem:[%s325 + $0xc0] sm:$0xf] %v1583
        %1712 = vst [vmem:[%s325 + $0xc4] sm:$0xf] %v1584
        %1713 = vst [vmem:[%s325 + $0xc8] sm:$0xf] %v1585
        %1714 = vst [vmem:[%s325 + $0xcc] sm:$0xf] %v1586
        %1715 = vst [vmem:[%s325 + $0xd0] sm:$0xf] %v1587
        %1716 = vst [vmem:[%s325 + $0xd4] sm:$0xf] %v1588
        %1717 = vst [vmem:[%s325 + $0xd8] sm:$0xf] %v1589
        %1718 = vst [vmem:[%s325 + $0xdc] sm:$0xf] %v1590
        %1719 = vst [vmem:[%s325 + $0xe0] sm:$0xf] %v1591
        %1720 = vst [vmem:[%s325 + $0xe4] sm:$0xf] %v1592
        %1721 = vst [vmem:[%s325 + $0xe8] sm:$0xf] %v1593
        %1722 = vst [vmem:[%s325 + $0xec] sm:$0xf] %v1594
        %1723 = vst [vmem:[%s325 + $0xf0] sm:$0xf] %v1595
        %1724 = vst [vmem:[%s325 + $0xf4] sm:$0xf] %v1596
        %1725 = vst [vmem:[%s325 + $0xf8] sm:$0xf] %v1597
        %1726 = vst [vmem:[%s325 + $0xfc] sm:$0xf] %v1598
        %v1727 = vld [vmem:[#allocation8] sm:$0xf]
        %v1728 = vld [vmem:[#allocation8 + $0x4] sm:$0xf]
        %v1729 = vld [vmem:[#allocation8 + $0x8] sm:$0xf]
        %v1730 = vld [vmem:[#allocation8 + $0xc] sm:$0xf]
        %v1731 = vld [vmem:[#allocation8 + $0x10] sm:$0xf]
        %v1732 = vld [vmem:[#allocation8 + $0x14] sm:$0xf]
        %v1733 = vld [vmem:[#allocation8 + $0x18] sm:$0xf]
        %v1734 = vld [vmem:[#allocation8 + $0x1c] sm:$0xf]
        %v1735 = vld [vmem:[#allocation8 + $0x20] sm:$0xf]
        %v1736 = vld [vmem:[#allocation8 + $0x24] sm:$0xf]
        %v1737 = vld [vmem:[#allocation8 + $0x28] sm:$0xf]
        %v1738 = vld [vmem:[#allocation8 + $0x2c] sm:$0xf]
        %v1739 = vld [vmem:[#allocation8 + $0x30] sm:$0xf]
        %v1740 = vld [vmem:[#allocation8 + $0x34] sm:$0xf]
        %v1741 = vld [vmem:[#allocation8 + $0x38] sm:$0xf]
        %v1742 = vld [vmem:[#allocation8 + $0x3c] sm:$0xf]
        %v1743 = vld [vmem:[#allocation10] sm:$0x1]
        %v1745 = vlaneseq
        %v1746 = vshrl.u32 %v1745, 7
        %v1747 = vsub.s32 0, %v1746
        %v1748 = vrot.slane %v1743, %v1747
        %v1766 = vunpack.c.l.b16 %v1727
        %v1767 = vunpack.c.l.b16 %v1728
        %v1768 = vunpack.c.l.b16 %v1729
        %v1769 = vunpack.c.l.b16 %v1730
        %v1770 = vunpack.c.l.b16 %v1731
        %v1771 = vunpack.c.l.b16 %v1732
        %v1772 = vunpack.c.l.b16 %v1733
        %v1773 = vunpack.c.l.b16 %v1734
        %v1774 = vunpack.c.l.b16 %v1735
        %v1775 = vunpack.c.l.b16 %v1736
        %v1776 = vunpack.c.l.b16 %v1737
        %v1777 = vunpack.c.l.b16 %v1738
        %v1778 = vunpack.c.l.b16 %v1739
        %v1779 = vunpack.c.l.b16 %v1740
        %v1780 = vunpack.c.l.b16 %v1741
        %v1781 = vunpack.c.l.b16 %v1742
        %v1782 = vpack.c.b16 %v1767, %v1766
        %v1783 = vpack.c.b16 %v1769, %v1768
        %v1784 = vpack.c.b16 %v1771, %v1770
        %v1785 = vpack.c.b16 %v1773, %v1772
        %v1786 = vpack.c.b16 %v1775, %v1774
        %v1787 = vpack.c.b16 %v1777, %v1776
        %v1788 = vpack.c.b16 %v1779, %v1778
        %v1789 = vpack.c.b16 %v1781, %v1780
        %1798 = vmatprep.subr.bf16.mxu0 0
        %1799 = vmatpush1.bf16.msra.mxu0 %v1782
        %1800 = vmatprep.subr.bf16.mxu0 0
        %1801 = vmatpush1.bf16.msra.mxu0 %v1783
        %1802 = vmatprep.subr.bf16.mxu0 0
        %1803 = vmatpush1.bf16.msra.mxu0 %v1784
        %1804 = vmatprep.subr.bf16.mxu0 0
        %1805 = vmatpush1.bf16.msra.mxu0 %v1785
        %1806 = vmatprep.subr.bf16.mxu0 0
        %1807 = vmatpush1.bf16.msra.mxu0 %v1786
        %1808 = vmatprep.subr.bf16.mxu0 0
        %1809 = vmatpush1.bf16.msra.mxu0 %v1787
        %1810 = vmatprep.subr.bf16.mxu0 0
        %1811 = vmatpush1.bf16.msra.mxu0 %v1788
        %1812 = vmatprep.subr.bf16.mxu0 0
        %1813 = vmatpush1.bf16.msra.mxu0 %v1789
        %1814 = vmatprep.subr.bf16.mxu0 0
        %1815 = vmatpush1.bf16.msra.mxu0 0
        %1816 = vmatprep.subr.bf16.mxu0 0
        %1817 = vmatpush1.bf16.msra.mxu0 0
        %1818 = vmatprep.subr.bf16.mxu0 0
        %1819 = vmatpush1.bf16.msra.mxu0 0
        %1820 = vmatprep.subr.bf16.mxu0 0
        %1821 = vmatpush1.bf16.msra.mxu0 0
        %1822 = vmatprep.subr.bf16.mxu0 0
        %1823 = vmatpush1.bf16.msra.mxu0 0
        %1824 = vmatprep.subr.bf16.mxu0 0
        %1825 = vmatpush1.bf16.msra.mxu0 0
        %1826 = vmatprep.subr.bf16.mxu0 0
        %1827 = vmatpush1.bf16.msra.mxu0 0
        %1828 = vmatprep.subr.bf16.mxu0 0
        %1829 = vmatpush1.bf16.msra.mxu0 0
        %1830 = vmatprep.mubr.bf16.mxu0 0
        %1831 = vmatmul.mubr.bf16.gmra.mrb[0].mxu0 %v1407
        %v1832 = vpop.f32.mrb[0].mxu0
        %v1833 = vadd.f32 %v1748, %v1832
        %v1834 = vpop.f32.mrb[0].mxu0
        %v1835 = vpop.f32.mrb[0].mxu0
        %v1836 = vadd.f32 %v1748, %v1835
        %v1837 = vpop.f32.mrb[0].mxu0
        %1838 = vmatprep.mubr.bf16.mxu0 0
        %1839 = vmatmul.mubr.bf16.gmra.mrb[0].mxu0 %v1408
        %v1840 = vpop.f32.mrb[0].mxu0
        %v1841 = vadd.f32 %v1748, %v1840
        %v1842 = vpop.f32.mrb[0].mxu0
        %v1843 = vpop.f32.mrb[0].mxu0
        %v1844 = vadd.f32 %v1748, %v1843
        %v1845 = vpop.f32.mrb[0].mxu0
        %1846 = vmatprep.mubr.bf16.mxu0 0
        %1847 = vmatmul.mubr.bf16.gmra.mrb[0].mxu0 %v1409
        %v1848 = vpop.f32.mrb[0].mxu0
        %v1849 = vadd.f32 %v1748, %v1848
        %v1850 = vpop.f32.mrb[0].mxu0
        %v1851 = vpop.f32.mrb[0].mxu0
        %v1852 = vadd.f32 %v1748, %v1851
        %v1853 = vpop.f32.mrb[0].mxu0
        %1854 = vmatprep.mubr.bf16.mxu0 0
        %1855 = vmatmul.mubr.bf16.gmra.mrb[0].mxu0 %v1410
        %v1856 = vpop.f32.mrb[0].mxu0
        %v1857 = vadd.f32 %v1748, %v1856
        %v1858 = vpop.f32.mrb[0].mxu0
        %v1859 = vpop.f32.mrb[0].mxu0
        %v1860 = vadd.f32 %v1748, %v1859
        %v1861 = vpop.f32.mrb[0].mxu0
        %1862 = vmatprep.mubr.bf16.mxu0 0
        %1863 = vmatmul.mubr.bf16.gmra.mrb[0].mxu0 %v1411
        %v1864 = vpop.f32.mrb[0].mxu0
        %v1865 = vadd.f32 %v1748, %v1864
        %v1866 = vpop.f32.mrb[0].mxu0
        %v1867 = vpop.f32.mrb[0].mxu0
        %v1868 = vadd.f32 %v1748, %v1867
        %v1869 = vpop.f32.mrb[0].mxu0
        %1870 = vmatprep.mubr.bf16.mxu0 0
        %1871 = vmatmul.mubr.bf16.gmra.mrb[0].mxu0 %v1412
        %v1872 = vpop.f32.mrb[0].mxu0
        %v1873 = vadd.f32 %v1748, %v1872
        %v1874 = vpop.f32.mrb[0].mxu0
        %v1875 = vpop.f32.mrb[0].mxu0
        %v1876 = vadd.f32 %v1748, %v1875
        %v1877 = vpop.f32.mrb[0].mxu0
        %1878 = vmatprep.mubr.bf16.mxu0 0
        %1879 = vmatmul.mubr.bf16.gmra.mrb[0].mxu0 %v1413
        %v1880 = vpop.f32.mrb[0].mxu0
        %v1881 = vadd.f32 %v1748, %v1880
        %v1882 = vpop.f32.mrb[0].mxu0
        %v1883 = vpop.f32.mrb[0].mxu0
        %v1884 = vadd.f32 %v1748, %v1883
        %v1885 = vpop.f32.mrb[0].mxu0
        %1886 = vmatprep.mubr.bf16.mxu0 0
        %1887 = vmatmul.mubr.bf16.gmra.mrb[0].mxu0 %v1414
        %v1888 = vpop.f32.mrb[0].mxu0
        %v1889 = vadd.f32 %v1748, %v1888
        %v1890 = vpop.f32.mrb[0].mxu0
        %v1891 = vpop.f32.mrb[0].mxu0
        %v1892 = vadd.f32 %v1748, %v1891
        %v1893 = vpop.f32.mrb[0].mxu0
        %1894 = vmatprep.mubr.bf16.mxu0 0
        %1895 = vmatmul.mubr.bf16.gmra.mrb[0].mxu0 %v1415
        %v1896 = vpop.f32.mrb[0].mxu0
        %v1897 = vadd.f32 %v1748, %v1896
        %v1898 = vpop.f32.mrb[0].mxu0
        %v1899 = vpop.f32.mrb[0].mxu0
        %v1900 = vadd.f32 %v1748, %v1899
        %v1901 = vpop.f32.mrb[0].mxu0
        %1902 = vmatprep.mubr.bf16.mxu0 0
        %1903 = vmatmul.mubr.bf16.gmra.mrb[0].mxu0 %v1416
        %v1904 = vpop.f32.mrb[0].mxu0
        %v1905 = vadd.f32 %v1748, %v1904
        %v1906 = vpop.f32.mrb[0].mxu0
        %v1907 = vpop.f32.mrb[0].mxu0
        %v1908 = vadd.f32 %v1748, %v1907
        %v1909 = vpop.f32.mrb[0].mxu0
        %1910 = vmatprep.mubr.bf16.mxu0 0
        %1911 = vmatmul.mubr.bf16.gmra.mrb[0].mxu0 %v1417
        %v1912 = vpop.f32.mrb[0].mxu0
        %v1913 = vadd.f32 %v1748, %v1912
        %v1914 = vpop.f32.mrb[0].mxu0
        %v1915 = vpop.f32.mrb[0].mxu0
        %v1916 = vadd.f32 %v1748, %v1915
        %v1917 = vpop.f32.mrb[0].mxu0
        %1918 = vmatprep.mubr.bf16.mxu0 0
        %1919 = vmatmul.mubr.bf16.gmra.mrb[0].mxu0 %v1418
        %v1920 = vpop.f32.mrb[0].mxu0
        %v1921 = vadd.f32 %v1748, %v1920
        %v1922 = vpop.f32.mrb[0].mxu0
        %v1923 = vpop.f32.mrb[0].mxu0
        %v1924 = vadd.f32 %v1748, %v1923
        %v1925 = vpop.f32.mrb[0].mxu0
        %1926 = vmatprep.mubr.bf16.mxu0 0
        %1927 = vmatmul.mubr.bf16.gmra.mrb[0].mxu0 %v1419
        %v1928 = vpop.f32.mrb[0].mxu0
        %v1929 = vadd.f32 %v1748, %v1928
        %v1930 = vpop.f32.mrb[0].mxu0
        %v1931 = vpop.f32.mrb[0].mxu0
        %v1932 = vadd.f32 %v1748, %v1931
        %v1933 = vpop.f32.mrb[0].mxu0
        %1934 = vmatprep.mubr.bf16.mxu0 0
        %1935 = vmatmul.mubr.bf16.gmra.mrb[0].mxu0 %v1420
        %v1936 = vpop.f32.mrb[0].mxu0
        %v1937 = vadd.f32 %v1748, %v1936
        %v1938 = vpop.f32.mrb[0].mxu0
        %v1939 = vpop.f32.mrb[0].mxu0
        %v1940 = vadd.f32 %v1748, %v1939
        %v1941 = vpop.f32.mrb[0].mxu0
        %1942 = vmatprep.mubr.bf16.mxu0 0
        %1943 = vmatmul.mubr.bf16.gmra.mrb[0].mxu0 %v1421
        %v1944 = vpop.f32.mrb[0].mxu0
        %v1945 = vadd.f32 %v1748, %v1944
        %v1946 = vpop.f32.mrb[0].mxu0
        %v1947 = vpop.f32.mrb[0].mxu0
        %v1948 = vadd.f32 %v1748, %v1947
        %v1949 = vpop.f32.mrb[0].mxu0
        %1950 = vmatprep.mubr.bf16.mxu0 0
        %1951 = vmatmul.mubr.bf16.gmra.mrb[0].mxu0 %v1422
        %v1952 = vpop.f32.mrb[0].mxu0
        %v1953 = vadd.f32 %v1748, %v1952
        %v1954 = vpop.f32.mrb[0].mxu0
        %v1955 = vpop.f32.mrb[0].mxu0
        %v1956 = vadd.f32 %v1748, %v1955
        %v1957 = vpop.f32.mrb[0].mxu0
        %1958 = vmatprep.mubr.bf16.mxu0 0
        %1959 = vmatmul.mubr.bf16.gmra.mrb[0].mxu0 %v1423
        %v1960 = vpop.f32.mrb[0].mxu0
        %v1961 = vadd.f32 %v1748, %v1960
        %v1962 = vpop.f32.mrb[0].mxu0
        %v1963 = vpop.f32.mrb[0].mxu0
        %v1964 = vadd.f32 %v1748, %v1963
        %v1965 = vpop.f32.mrb[0].mxu0
        %1966 = vmatprep.mubr.bf16.mxu0 0
        %1967 = vmatmul.mubr.bf16.gmra.mrb[0].mxu0 %v1424
        %v1968 = vpop.f32.mrb[0].mxu0
        %v1969 = vadd.f32 %v1748, %v1968
        %v1970 = vpop.f32.mrb[0].mxu0
        %v1971 = vpop.f32.mrb[0].mxu0
        %v1972 = vadd.f32 %v1748, %v1971
        %v1973 = vpop.f32.mrb[0].mxu0
        %1974 = vmatprep.mubr.bf16.mxu0 0
        %1975 = vmatmul.mubr.bf16.gmra.mrb[0].mxu0 %v1425
        %v1976 = vpop.f32.mrb[0].mxu0
        %v1977 = vadd.f32 %v1748, %v1976
        %v1978 = vpop.f32.mrb[0].mxu0
        %v1979 = vpop.f32.mrb[0].mxu0
        %v1980 = vadd.f32 %v1748, %v1979
        %v1981 = vpop.f32.mrb[0].mxu0
        %1982 = vmatprep.mubr.bf16.mxu0 0
        %1983 = vmatmul.mubr.bf16.gmra.mrb[0].mxu0 %v1426
        %v1984 = vpop.f32.mrb[0].mxu0
        %v1985 = vadd.f32 %v1748, %v1984
        %v1986 = vpop.f32.mrb[0].mxu0
        %v1987 = vpop.f32.mrb[0].mxu0
        %v1988 = vadd.f32 %v1748, %v1987
        %v1989 = vpop.f32.mrb[0].mxu0
        %1990 = vmatprep.mubr.bf16.mxu0 0
        %1991 = vmatmul.mubr.bf16.gmra.mrb[0].mxu0 %v1427
        %v1992 = vpop.f32.mrb[0].mxu0
        %v1993 = vadd.f32 %v1748, %v1992
        %v1994 = vpop.f32.mrb[0].mxu0
        %v1995 = vpop.f32.mrb[0].mxu0
        %v1996 = vadd.f32 %v1748, %v1995
        %v1997 = vpop.f32.mrb[0].mxu0
        %1998 = vmatprep.mubr.bf16.mxu0 0
        %1999 = vmatmul.mubr.bf16.gmra.mrb[0].mxu0 %v1428
        %v2000 = vpop.f32.mrb[0].mxu0
        %v2001 = vadd.f32 %v1748, %v2000
        %v2002 = vpop.f32.mrb[0].mxu0
        %v2003 = vpop.f32.mrb[0].mxu0
        %v2004 = vadd.f32 %v1748, %v2003
        %v2005 = vpop.f32.mrb[0].mxu0
        %2006 = vmatprep.mubr.bf16.mxu0 0
        %2007 = vmatmul.mubr.bf16.gmra.mrb[0].mxu0 %v1429
        %v2008 = vpop.f32.mrb[0].mxu0
        %v2009 = vadd.f32 %v1748, %v2008
        %v2010 = vpop.f32.mrb[0].mxu0
        %v2011 = vpop.f32.mrb[0].mxu0
        %v2012 = vadd.f32 %v1748, %v2011
        %v2013 = vpop.f32.mrb[0].mxu0
        %2014 = vmatprep.mubr.bf16.mxu0 0
        %2015 = vmatmul.mubr.bf16.gmra.mrb[0].mxu0 %v1430
        %v2016 = vpop.f32.mrb[0].mxu0
        %v2017 = vadd.f32 %v1748, %v2016
        %v2018 = vpop.f32.mrb[0].mxu0
        %v2019 = vpop.f32.mrb[0].mxu0
        %v2020 = vadd.f32 %v1748, %v2019
        %v2021 = vpop.f32.mrb[0].mxu0
        %2022 = vmatprep.mubr.bf16.mxu0 0
        %2023 = vmatmul.mubr.bf16.gmra.mrb[0].mxu0 %v1431
        %v2024 = vpop.f32.mrb[0].mxu0
        %v2025 = vadd.f32 %v1748, %v2024
        %v2026 = vpop.f32.mrb[0].mxu0
        %v2027 = vpop.f32.mrb[0].mxu0
        %v2028 = vadd.f32 %v1748, %v2027
        %v2029 = vpop.f32.mrb[0].mxu0
        %2030 = vmatprep.mubr.bf16.mxu0 0
        %2031 = vmatmul.mubr.bf16.gmra.mrb[0].mxu0 %v1432
        %v2032 = vpop.f32.mrb[0].mxu0
        %v2033 = vadd.f32 %v1748, %v2032
        %v2034 = vpop.f32.mrb[0].mxu0
        %v2035 = vpop.f32.mrb[0].mxu0
        %v2036 = vadd.f32 %v1748, %v2035
        %v2037 = vpop.f32.mrb[0].mxu0
        %2038 = vmatprep.mubr.bf16.mxu0 0
        %2039 = vmatmul.mubr.bf16.gmra.mrb[0].mxu0 %v1433
        %v2040 = vpop.f32.mrb[0].mxu0
        %v2041 = vadd.f32 %v1748, %v2040
        %v2042 = vpop.f32.mrb[0].mxu0
        %v2043 = vpop.f32.mrb[0].mxu0
        %v2044 = vadd.f32 %v1748, %v2043
        %v2045 = vpop.f32.mrb[0].mxu0
        %2046 = vmatprep.mubr.bf16.mxu0 0
        %2047 = vmatmul.mubr.bf16.gmra.mrb[0].mxu0 %v1434
        %v2048 = vpop.f32.mrb[0].mxu0
        %v2049 = vadd.f32 %v1748, %v2048
        %v2050 = vpop.f32.mrb[0].mxu0
        %v2051 = vpop.f32.mrb[0].mxu0
        %v2052 = vadd.f32 %v1748, %v2051
        %v2053 = vpop.f32.mrb[0].mxu0
        %2054 = vmatprep.mubr.bf16.mxu0 0
        %2055 = vmatmul.mubr.bf16.gmra.mrb[0].mxu0 %v1435
        %v2056 = vpop.f32.mrb[0].mxu0
        %v2057 = vadd.f32 %v1748, %v2056
        %v2058 = vpop.f32.mrb[0].mxu0
        %v2059 = vpop.f32.mrb[0].mxu0
        %v2060 = vadd.f32 %v1748, %v2059
        %v2061 = vpop.f32.mrb[0].mxu0
        %2062 = vmatprep.mubr.bf16.mxu0 0
        %2063 = vmatmul.mubr.bf16.gmra.mrb[0].mxu0 %v1436
        %v2064 = vpop.f32.mrb[0].mxu0
        %v2065 = vadd.f32 %v1748, %v2064
        %v2066 = vpop.f32.mrb[0].mxu0
        %v2067 = vpop.f32.mrb[0].mxu0
        %v2068 = vadd.f32 %v1748, %v2067
        %v2069 = vpop.f32.mrb[0].mxu0
        %2070 = vmatprep.mubr.bf16.mxu0 0
        %2071 = vmatmul.mubr.bf16.gmra.mrb[0].mxu0 %v1437
        %v2072 = vpop.f32.mrb[0].mxu0
        %v2073 = vadd.f32 %v1748, %v2072
        %v2074 = vpop.f32.mrb[0].mxu0
        %v2075 = vpop.f32.mrb[0].mxu0
        %v2076 = vadd.f32 %v1748, %v2075
        %v2077 = vpop.f32.mrb[0].mxu0
        %2078 = vmatprep.mubr.bf16.mxu0 0
        %2079 = vmatmul.mubr.bf16.gmra.mrb[0].mxu0 %v1438
        %v2080 = vpop.f32.mrb[0].mxu0
        %v2081 = vadd.f32 %v1748, %v2080
        %v2082 = vpop.f32.mrb[0].mxu0
        %v2083 = vpop.f32.mrb[0].mxu0
        %v2084 = vadd.f32 %v1748, %v2083
        %v2085 = vpop.f32.mrb[0].mxu0
        %2086 = vdwg.mxu0
        %2087 = vst [vmem:[%s332] sm:$0xff] %v1833
        %2088 = vst [vmem:[%s332 + $0x8] sm:$0xff] %v1836
        %2089 = vst [vmem:[%s332 + $0x10] sm:$0xff] %v1841
        %2090 = vst [vmem:[%s332 + $0x18] sm:$0xff] %v1844
        %2091 = vst [vmem:[%s332 + $0x20] sm:$0xff] %v1849
        %2092 = vst [vmem:[%s332 + $0x28] sm:$0xff] %v1852
        %2093 = vst [vmem:[%s332 + $0x30] sm:$0xff] %v1857
        %2094 = vst [vmem:[%s332 + $0x38] sm:$0xff] %v1860
        %2095 = vst [vmem:[%s332 + $0x40] sm:$0xff] %v1865
        %2096 = vst [vmem:[%s332 + $0x48] sm:$0xff] %v1868
        %2097 = vst [vmem:[%s332 + $0x50] sm:$0xff] %v1873
        %2098 = vst [vmem:[%s332 + $0x58] sm:$0xff] %v1876
        %2099 = vst [vmem:[%s332 + $0x60] sm:$0xff] %v1881
        %2100 = vst [vmem:[%s332 + $0x68] sm:$0xff] %v1884
        %2101 = vst [vmem:[%s332 + $0x70] sm:$0xff] %v1889
        %2102 = vst [vmem:[%s332 + $0x78] sm:$0xff] %v1892
        %2103 = vst [vmem:[%s332 + $0x80] sm:$0xff] %v1897
        %2104 = vst [vmem:[%s332 + $0x88] sm:$0xff] %v1900
        %2105 = vst [vmem:[%s332 + $0x90] sm:$0xff] %v1905
        %2106 = vst [vmem:[%s332 + $0x98] sm:$0xff] %v1908
        %2107 = vst [vmem:[%s332 + $0xa0] sm:$0xff] %v1913
        %2108 = vst [vmem:[%s332 + $0xa8] sm:$0xff] %v1916
        %2109 = vst [vmem:[%s332 + $0xb0] sm:$0xff] %v1921
        %2110 = vst [vmem:[%s332 + $0xb8] sm:$0xff] %v1924
        %2111 = vst [vmem:[%s332 + $0xc0] sm:$0xff] %v1929
        %2112 = vst [vmem:[%s332 + $0xc8] sm:$0xff] %v1932
        %2113 = vst [vmem:[%s332 + $0xd0] sm:$0xff] %v1937
        %2114 = vst [vmem:[%s332 + $0xd8] sm:$0xff] %v1940
        %2115 = vst [vmem:[%s332 + $0xe0] sm:$0xff] %v1945
        %2116 = vst [vmem:[%s332 + $0xe8] sm:$0xff] %v1948
        %2117 = vst [vmem:[%s332 + $0xf0] sm:$0xff] %v1953
        %2118 = vst [vmem:[%s332 + $0xf8] sm:$0xff] %v1956
        %2119 = vst [vmem:[%s332 + $0x100] sm:$0xff] %v1961
        %2120 = vst [vmem:[%s332 + $0x108] sm:$0xff] %v1964
        %2121 = vst [vmem:[%s332 + $0x110] sm:$0xff] %v1969
        %2122 = vst [vmem:[%s332 + $0x118] sm:$0xff] %v1972
        %2123 = vst [vmem:[%s332 + $0x120] sm:$0xff] %v1977
        %2124 = vst [vmem:[%s332 + $0x128] sm:$0xff] %v1980
        %2125 = vst [vmem:[%s332 + $0x130] sm:$0xff] %v1985
        %2126 = vst [vmem:[%s332 + $0x138] sm:$0xff] %v1988
        %2127 = vst [vmem:[%s332 + $0x140] sm:$0xff] %v1993
        %2128 = vst [vmem:[%s332 + $0x148] sm:$0xff] %v1996
        %2129 = vst [vmem:[%s332 + $0x150] sm:$0xff] %v2001
        %2130 = vst [vmem:[%s332 + $0x158] sm:$0xff] %v2004
        %2131 = vst [vmem:[%s332 + $0x160] sm:$0xff] %v2009
        %2132 = vst [vmem:[%s332 + $0x168] sm:$0xff] %v2012
        %2133 = vst [vmem:[%s332 + $0x170] sm:$0xff] %v2017
        %2134 = vst [vmem:[%s332 + $0x178] sm:$0xff] %v2020
        %2135 = vst [vmem:[%s332 + $0x180] sm:$0xff] %v2025
        %2136 = vst [vmem:[%s332 + $0x188] sm:$0xff] %v2028
        %2137 = vst [vmem:[%s332 + $0x190] sm:$0xff] %v2033
        %2138 = vst [vmem:[%s332 + $0x198] sm:$0xff] %v2036
        %2139 = vst [vmem:[%s332 + $0x1a0] sm:$0xff] %v2041
        %2140 = vst [vmem:[%s332 + $0x1a8] sm:$0xff] %v2044
        %2141 = vst [vmem:[%s332 + $0x1b0] sm:$0xff] %v2049
        %2142 = vst [vmem:[%s332 + $0x1b8] sm:$0xff] %v2052
        %2143 = vst [vmem:[%s332 + $0x1c0] sm:$0xff] %v2057
        %2144 = vst [vmem:[%s332 + $0x1c8] sm:$0xff] %v2060
        %2145 = vst [vmem:[%s332 + $0x1d0] sm:$0xff] %v2065
        %2146 = vst [vmem:[%s332 + $0x1d8] sm:$0xff] %v2068
        %2147 = vst [vmem:[%s332 + $0x1e0] sm:$0xff] %v2073
        %2148 = vst [vmem:[%s332 + $0x1e8] sm:$0xff] %v2076
        %2149 = vst [vmem:[%s332 + $0x1f0] sm:$0xff] %v2081
        %2150 = vst [vmem:[%s332 + $0x1f8] sm:$0xff] %v2084
        %s2151 = sand.u32 %s147, 1
        %s2152 = scalar_lea.sflag [#allocation4], %s2151
        %s2153 = sand.u32 %s147, 1
        %s2154 = smul.addr %s2153, 256
        %s2155 = scalar_lea.vmem [#allocation11], %s2154
        %s2156 = sand.u32 %s173, 1
        %s2157 = scalar_lea.sflag [#allocation13], %s2156
        %s2158 = sand.u32 %s173, 1
        %s2159 = smul.addr %s2158, 512
        %s2160 = scalar_lea.vmem [#allocation12], %s2159
        // Predicated region
        $region61: #{_forward_impl.3} parent=39 // pred_check
          %p2161 = pneg %p157
        $region62: #{_forward_impl.3} parent=39 // pred_check_branch
          %2163 = sbr.rel (%p2161) target = $region64
        $region63: #{_forward_impl.3} parent=39 // pred_region
          %s2164 = smul.u32 64, %s29
          %s2166 = ssub.s32 4096, 4096
          %2167 = vsyncadd %s2152, %s2166
          %s2168 = smul.addr %s2164, 64
          %s2169 = scalar_lea.hbm %s5, %s2168
          %s2170 = sshll.u32 %s2155, 4
          %s2171 = int_to_ptr.vmem [resolvable:$true] %s2170
          %2176 = dma.vmem_to_hbm [thread:$0]  %s2171, 4096, %s2169, %s2152, 64, 64, 4
        $region64: #{_forward_impl.3} parent=39 // pred_fallthru
          _
        // Predicated region
        $region65: #{_forward_impl.3} parent=39 // pred_check
          %p2177 = pneg %p183
        $region66: #{_forward_impl.3} parent=39 // pred_check_branch
          %2179 = sbr.rel (%p2177) target = $region68
        $region67: #{_forward_impl.3} parent=39 // pred_region
          %s2180 = smul.u32 64, %s29
          %s2182 = ssub.s32 8192, 8192
          %2183 = vsyncadd %s2157, %s2182
          %s2184 = smul.addr %s2180, 128
          %s2185 = scalar_lea.hbm %s6, %s2184
          %s2186 = sshll.u32 %s2160, 4
          %s2187 = int_to_ptr.vmem [resolvable:$true] %s2186
          %2192 = dma.vmem_to_hbm [thread:$0]  %s2187, 8192, %s2185, %s2157, 128, 128, 8
        $region68: #{_forward_impl.3} parent=39 // pred_fallthru
          _
      $region40: #{_forward_impl.3} parent=5 // pred_fallthru
        _
      %p2193 = scmp.le.s32.totalorder 2, %s24
      // Predicated region
      $region69: #{_forward_impl.3} parent=5 // pred_check
        %p2194 = pneg %p2193
      $region70: #{_forward_impl.3} parent=5 // pred_check_branch
        %2196 = sbr.rel (%p2194) target = $region72
      $region71: #{_forward_impl.3} parent=5 // pred_region
        %s2197 = ssub.s32 %s24, 2
        // Predicated region
        $region73: #{_forward_impl.3} parent=71 // pred_check
          %p2198 = pneg %p163
        $region74: #{_forward_impl.3} parent=71 // pred_check_branch
          %2200 = sbr.rel (%p2198) target = $region76
        $region75: #{_forward_impl.3} parent=71 // pred_region
          %s2201 = sand.u32 %s148, 1
          %s2202 = scalar_lea.sflag [#allocation4], %s2201
          %s2203 = sand.u32 %s148, 1
          %s2204 = smul.addr %s2203, 256
          %s2205 = scalar_lea.vmem [#allocation11], %s2204
          %2206 = dma.done %s2202, 4096
        $region76: #{_forward_impl.3} parent=71 // pred_fallthru
          _
        // Predicated region
        $region77: #{_forward_impl.3} parent=71 // pred_check
          %p2207 = pneg %p189
        $region78: #{_forward_impl.3} parent=71 // pred_check_branch
          %2209 = sbr.rel (%p2207) target = $region80
        $region79: #{_forward_impl.3} parent=71 // pred_region
          %s2210 = sand.u32 %s174, 1
          %s2211 = scalar_lea.sflag [#allocation13], %s2210
          %s2212 = sand.u32 %s174, 1
          %s2213 = smul.addr %s2212, 512
          %s2214 = scalar_lea.vmem [#allocation12], %s2213
          %2215 = dma.done %s2211, 8192
        $region80: #{_forward_impl.3} parent=71 // pred_fallthru
          _
      $region72: #{_forward_impl.3} parent=5 // pred_fallthru
        _
    $region6: #{_forward_impl.3} parent=1 // loop_footer
      %s28 = sadd.s32 1, %s24
    $region7: #{_forward_impl.3} parent=1 // loop_footer_branch
      %23 = sbr.rel target = $region3
    $region8: #{_forward_impl.3} parent=1 // loop_exit
      _
    %2216 = vsyncpa [#allocation3], 1
    %s2217 = scalar_lea.sflag [#allocation3], 1
    %2218 = vsyncpa %s2217, 1
    %2219 = vsyncpa [#allocation6], 1
    %2220 = vsyncpa [#allocation9], 1
    %2221 = vsyncpa [#allocation4], 1
    %s2222 = scalar_lea.sflag [#allocation4], 1
    %2223 = vsyncpa %s2222, 1
    %2224 = vsyncpa [#allocation13], 1
    %s2225 = scalar_lea.sflag [#allocation13], 1
    %2226 = vsyncpa %s2225, 1

// kernel: _forward_impl.5
$region0: #{_forward_impl.5}
  #allocation0 [shape = 'u32[]', space=smem, size = 0x4, offset = 0x4, fixed_abs, tag = 'smem constant byte address 0x4 - core index']
  #allocation1 [shape = 'u32[144,128]{1,0:T(1,128)}', space=vmem, size = 0x12000, scoped, tag = 'internal scratch']
  %s0 = inlined_call_operand.hbm [shape: bf16[64,128], index: 0, kind: input, shape index: {}]
  %s1 = inlined_call_operand.hbm [shape: bf16[128,128], index: 1, kind: input, shape index: {}]
  %s2 = inlined_call_operand.hbm [shape: f32[1,128], index: 2, kind: input, shape index: {}]
  %s3 = inlined_call_operand.hbm [shape: bf16[128,128], index: 3, kind: input, shape index: {}]
  %s4 = inlined_call_operand.hbm [shape: f32[1,128], index: 4, kind: input, shape index: {}]
  %s5 = inlined_call_operand.hbm [shape: bf16[64,128], index: 5, kind: output, shape index: {0}]
  %s6 = inlined_call_operand.hbm [shape: f32[64,128], index: 6, kind: output, shape index: {1}]
  %7 = xla_tuple %s5, %s6
  %s8 = sld [smem:[#allocation0]]
  $region81: #{_forward_impl.5} parent=0
    _
  %s10 = ssub.s32 1, %s8
  %s11 = scalar_select 0, %s10, %s8
  $region1: #{_forward_impl.5} parent=0
    #allocation2 [shape = 'u8[16384]{0}', space=vmem, size = 0x4000, scoped, tag = 'input window, operand 0']
    #allocation3 [shape = 's32[2]{0}', space=sflag, size = 0x8, scoped, tag = 'scoped memory for _forward_impl.5']
    #allocation4 [shape = 's32[2]{0}', space=sflag, size = 0x8, scoped, tag = 'scoped memory for _forward_impl.5']
    #allocation5 [shape = 'u8[32768]{0}', space=vmem, size = 0x8000, scoped, tag = 'input window, operand 1, single buffered']
    #allocation6 [shape = 's32[1]{0}', space=sflag, size = 0x4, scoped, tag = 'scoped memory for _forward_impl.5']
    #allocation7 [shape = 'u8[512]{0}', space=vmem, size = 0x400, scoped, tag = 'input window, operand 2, single buffered']
    #allocation8 [shape = 'u8[32768]{0}', space=vmem, size = 0x8000, scoped, tag = 'input window, operand 3, single buffered']
    #allocation9 [shape = 's32[1]{0}', space=sflag, size = 0x4, scoped, tag = 'scoped memory for _forward_impl.5']
    #allocation10 [shape = 'u8[512]{0}', space=vmem, size = 0x400, scoped, tag = 'input window, operand 4, single buffered']
    #allocation11 [shape = 'u8[16384]{0}', space=vmem, size = 0x4000, scoped, tag = 'output window, operand 0']
    #allocation12 [shape = 'u8[32768]{0}', space=vmem, size = 0x8000, scoped, tag = 'output window, operand 1']
    #allocation13 [shape = 's32[2]{0}', space=sflag, size = 0x8, scoped, tag = 'scoped memory for _forward_impl.5']
    %12 = vsyncpa [#allocation3], 0
    %s13 = scalar_lea.sflag [#allocation3], 1
    %14 = vsyncpa %s13, 0
    %15 = vsyncpa [#allocation6], 0
    %16 = vsyncpa [#allocation9], 0
    %17 = vsyncpa [#allocation4], 0
    %s18 = scalar_lea.sflag [#allocation4], 1
    %19 = vsyncpa %s18, 0
    %20 = vsyncpa [#allocation13], 0
    %s21 = scalar_lea.sflag [#allocation13], 1
    %22 = vsyncpa %s21, 0
    loop: start=0, step=1, limit=4
    $region2: #{_forward_impl.5} parent=1 // loop_pre_header
      _
    $region3: #{_forward_impl.5} parent=1 // loop_header
      %s24 = sphi 0, %s28
      %p25 = scmp.ge.s32.totalorder %s24, 4
      %s34 = sphi 0, %s36
      %s37 = sphi 0, %s34
      %s38 = sphi 0, %s37
      %s54 = sphi 0, %s38
      %s58 = sphi 0, %s58
      %s60 = sphi 0, %s58
      %s61 = sphi 0, %s60
      %s75 = sphi 0, %s61
      %s79 = sphi 0, %s79
      %s81 = sphi 0, %s79
      %s82 = sphi 0, %s81
      %s96 = sphi 0, %s82
      %s100 = sphi 0, %s100
      %s102 = sphi 0, %s100
      %s103 = sphi 0, %s102
      %s117 = sphi 0, %s103
      %s121 = sphi 0, %s121
      %s123 = sphi 0, %s121
      %s124 = sphi 0, %s123
      %s138 = sphi 0, %s124
      %s144 = sphi 0, %s146
      %s147 = sphi 0, %s144
      %s148 = sphi 0, %s147
      %s164 = sphi 0, %s148
      %s170 = sphi 0, %s172
      %s173 = sphi 0, %s170
      %s174 = sphi 0, %s173
      %s190 = sphi 0, %s174
    $region4: #{_forward_impl.5} parent=1 // loop_header_branch
      %27 = sbr.rel (%p25) target = $region8
    $region5: #{_forward_impl.5} parent=1 // loop_body
      %s29 = ssub.s32 %s24, 1
      %s30 = ssub.s32 %s24, 2
      %s31 = sadd.s32 %s24, 1
      %s32 = ssub.s32 %s24, %s31
      %p33 = scmp.eq.s32.totalorder %s32, 0
      %s35 = sadd.s32 %s34, 1
      %s36 = scalar_select %p33, %s34, %s35
      %p39 = pneg %p33
      %p40 = scmp.eq.s32.totalorder %s24, 1
      %p41 = por %p39, %p40
      %p42 = scmp.ne.s32.totalorder %s34, %s37
      %p43 = scmp.eq.s32.totalorder %s24, 0
      %p44 = por %p42, %p43
      %p45 = scmp.ne.s32.totalorder %s34, %s37
      %p46 = scmp.eq.s32.totalorder %s29, 1
      %p47 = por %p45, %p46
      %p48 = scmp.ne.s32.totalorder %s37, %s38
      %p49 = scmp.eq.s32.totalorder %s29, 0
      %p50 = por %p48, %p49
      %p51 = scmp.ne.s32.totalorder %s37, %s38
      %p52 = scmp.eq.s32.totalorder %s30, 1
      %p53 = por %p51, %p52
      %p55 = scmp.ne.s32.totalorder %s38, %s54
      %p56 = scmp.eq.s32.totalorder %s30, 0
      %p57 = por %p55, %p56
      %s59 = sadd.s32 %s58, 1
      %p62 = scmp.eq.s32.totalorder %s24, 1
      %p63 = scmp.ne.s32.totalorder %s58, %s60
      %p64 = scmp.eq.s32.totalorder %s24, 0
      %p65 = por %p63, %p64
      %p66 = scmp.ne.s32.totalorder %s58, %s60
      %p67 = scmp.eq.s32.totalorder %s29, 1
      %p68 = por %p66, %p67
      %p69 = scmp.ne.s32.totalorder %s60, %s61
      %p70 = scmp.eq.s32.totalorder %s29, 0
      %p71 = por %p69, %p70
      %p72 = scmp.ne.s32.totalorder %s60, %s61
      %p73 = scmp.eq.s32.totalorder %s30, 1
      %p74 = por %p72, %p73
      %p76 = scmp.ne.s32.totalorder %s61, %s75
      %p77 = scmp.eq.s32.totalorder %s30, 0
      %p78 = por %p76, %p77
      %s80 = sadd.s32 %s79, 1
      %p83 = scmp.eq.s32.totalorder %s24, 1
      %p84 = scmp.ne.s32.totalorder %s79, %s81
      %p85 = scmp.eq.s32.totalorder %s24, 0
      %p86 = por %p84, %p85
      %p87 = scmp.ne.s32.totalorder %s79, %s81
      %p88 = scmp.eq.s32.totalorder %s29, 1
      %p89 = por %p87, %p88
      %p90 = scmp.ne.s32.totalorder %s81, %s82
      %p91 = scmp.eq.s32.totalorder %s29, 0
      %p92 = por %p90, %p91
      %p93 = scmp.ne.s32.totalorder %s81, %s82
      %p94 = scmp.eq.s32.totalorder %s30, 1
      %p95 = por %p93, %p94
      %p97 = scmp.ne.s32.totalorder %s82, %s96
      %p98 = scmp.eq.s32.totalorder %s30, 0
      %p99 = por %p97, %p98
      %s101 = sadd.s32 %s100, 1
      %p104 = scmp.eq.s32.totalorder %s24, 1
      %p105 = scmp.ne.s32.totalorder %s100, %s102
      %p106 = scmp.eq.s32.totalorder %s24, 0
      %p107 = por %p105, %p106
      %p108 = scmp.ne.s32.totalorder %s100, %s102
      %p109 = scmp.eq.s32.totalorder %s29, 1
      %p110 = por %p108, %p109
      %p111 = scmp.ne.s32.totalorder %s102, %s103
      %p112 = scmp.eq.s32.totalorder %s29, 0
      %p113 = por %p111, %p112
      %p114 = scmp.ne.s32.totalorder %s102, %s103
      %p115 = scmp.eq.s32.totalorder %s30, 1
      %p116 = por %p114, %p115
      %p118 = scmp.ne.s32.totalorder %s103, %s117
      %p119 = scmp.eq.s32.totalorder %s30, 0
      %p120 = por %p118, %p119
      %s122 = sadd.s32 %s121, 1
      %p125 = scmp.eq.s32.totalorder %s24, 1
      %p126 = scmp.ne.s32.totalorder %s121, %s123
      %p127 = scmp.eq.s32.totalorder %s24, 0
      %p128 = por %p126, %p127
      %p129 = scmp.ne.s32.totalorder %s121, %s123
      %p130 = scmp.eq.s32.totalorder %s29, 1
      %p131 = por %p129, %p130
      %p132 = scmp.ne.s32.totalorder %s123, %s124
      %p133 = scmp.eq.s32.totalorder %s29, 0
      %p134 = por %p132, %p133
      %p135 = scmp.ne.s32.totalorder %s123, %s124
      %p136 = scmp.eq.s32.totalorder %s30, 1
      %p137 = por %p135, %p136
      %p139 = scmp.ne.s32.totalorder %s124, %s138
      %p140 = scmp.eq.s32.totalorder %s30, 0
      %p141 = por %p139, %p140
      %s142 = ssub.s32 %s24, %s31
      %p143 = scmp.eq.s32.totalorder %s142, 0
      %s145 = sadd.s32 %s144, 1
      %s146 = scalar_select %p143, %s144, %s145
      %p149 = pneg %p143
      %p150 = scmp.eq.s32.totalorder %s24, 1
      %p151 = por %p149, %p150
      %p152 = scmp.ne.s32.totalorder %s144, %s147
      %p153 = scmp.eq.s32.totalorder %s24, 0
      %p154 = por %p152, %p153
      %p155 = scmp.ne.s32.totalorder %s144, %s147
      %p156 = scmp.eq.s32.totalorder %s29, 1
      %p157 = por %p155, %p156
      %p158 = scmp.ne.s32.totalorder %s147, %s148
      %p159 = scmp.eq.s32.totalorder %s29, 0
      %p160 = por %p158, %p159
      %p161 = scmp.ne.s32.totalorder %s147, %s148
      %p162 = scmp.eq.s32.totalorder %s30, 1
      %p163 = por %p161, %p162
      %p165 = scmp.ne.s32.totalorder %s148, %s164
      %p166 = scmp.eq.s32.totalorder %s30, 0
      %p167 = por %p165, %p166
      %s168 = ssub.s32 %s24, %s31
      %p169 = scmp.eq.s32.totalorder %s168, 0
      %s171 = sadd.s32 %s170, 1
      %s172 = scalar_select %p169, %s170, %s171
      %p175 = pneg %p169
      %p176 = scmp.eq.s32.totalorder %s24, 1
      %p177 = por %p175, %p176
      %p178 = scmp.ne.s32.totalorder %s170, %s173
      %p179 = scmp.eq.s32.totalorder %s24, 0
      %p180 = por %p178, %p179
      %p181 = scmp.ne.s32.totalorder %s170, %s173
      %p182 = scmp.eq.s32.totalorder %s29, 1
      %p183 = por %p181, %p182
      %p184 = scmp.ne.s32.totalorder %s173, %s174
      %p185 = scmp.eq.s32.totalorder %s29, 0
      %p186 = por %p184, %p185
      %p187 = scmp.ne.s32.totalorder %s173, %s174
      %p188 = scmp.eq.s32.totalorder %s30, 1
      %p189 = por %p187, %p188
      %p191 = scmp.ne.s32.totalorder %s174, %s190
      %p192 = scmp.eq.s32.totalorder %s30, 0
      %p193 = por %p191, %p192
      %p194 = scmp.le.s32.totalorder 1, %s24
      %p195 = scmp.lt.s32.totalorder %s24, 3
      %p196 = pnand %p194, %p195
      %p197 = pneg %p196
      // Predicated region
      $region9: #{_forward_impl.5} parent=5 // pred_check
        _
      $region10: #{_forward_impl.5} parent=5 // pred_check_branch
        %199 = sbr.rel (%p196) target = $region12
      $region11: #{_forward_impl.5} parent=5 // pred_region
        %s200 = ssub.s32 %s24, 1
        // Predicated region
        $region13: #{_forward_impl.5} parent=11 // pred_check
          %p201 = pneg %p71
        $region14: #{_forward_impl.5} parent=11 // pred_check_branch
          %203 = sbr.rel (%p201) target = $region16
        $region15: #{_forward_impl.5} parent=11 // pred_region
          %s205 = ssub.s32 1024, 1024
          %206 = vsyncadd [#allocation6], %s205
          %s207 = sshll.u32 [#allocation5], 4
          %s208 = int_to_ptr.vmem [resolvable:$true] %s207
          %213 = dma.hbm_to_vmem [thread:$0]  %s1, 1024, %s208, [#allocation6], 64, 64, 4
        $region16: #{_forward_impl.5} parent=11 // pred_fallthru
          _
        // Predicated region
        $region17: #{_forward_impl.5} parent=11 // pred_check
          %p214 = pneg %p92
        $region18: #{_forward_impl.5} parent=11 // pred_check_branch
          %216 = sbr.rel (%p214) target = $region20
        $region19: #{_forward_impl.5} parent=11 // pred_region
          %s218 = ssub.s32 16, 16
          %219 = vsyncadd [#allocation6], %s218
          %s221 = sshll.u32 [#allocation7], 4
          %s222 = int_to_ptr.vmem [resolvable:$true] %s221
          %224 = dma.hbm_to_vmem [thread:$0]  %s2, 16, %s222, [#allocation6]
        $region20: #{_forward_impl.5} parent=11 // pred_fallthru
          _
        // Predicated region
        $region21: #{_forward_impl.5} parent=11 // pred_check
          %p225 = pneg %p113
        $region22: #{_forward_impl.5} parent=11 // pred_check_branch
          %227 = sbr.rel (%p225) target = $region24
        $region23: #{_forward_impl.5} parent=11 // pred_region
          %s229 = ssub.s32 1024, 1024
          %230 = vsyncadd [#allocation9], %s229
          %s231 = sshll.u32 [#allocation8], 4
          %s232 = int_to_ptr.vmem [resolvable:$true] %s231
          %237 = dma.hbm_to_vmem [thread:$0]  %s3, 1024, %s232, [#allocation9], 64, 64, 4
        $region24: #{_forward_impl.5} parent=11 // pred_fallthru
          _
        // Predicated region
        $region25: #{_forward_impl.5} parent=11 // pred_check
          %p238 = pneg %p134
        $region26: #{_forward_impl.5} parent=11 // pred_check_branch
          %240 = sbr.rel (%p238) target = $region28
        $region27: #{_forward_impl.5} parent=11 // pred_region
          %s242 = ssub.s32 16, 16
          %243 = vsyncadd [#allocation9], %s242
          %s245 = sshll.u32 [#allocation10], 4
          %s246 = int_to_ptr.vmem [resolvable:$true] %s245
          %248 = dma.hbm_to_vmem [thread:$0]  %s4, 16, %s246, [#allocation9]
        $region28: #{_forward_impl.5} parent=11 // pred_fallthru
          _
      $region12: #{_forward_impl.5} parent=5 // pred_fallthru
        _
      %p249 = scmp.lt.s32.totalorder %s24, 2
      // Predicated region
      $region29: #{_forward_impl.5} parent=5 // pred_check
        %p250 = pneg %p249
      $region30: #{_forward_impl.5} parent=5 // pred_check_branch
        %252 = sbr.rel (%p250) target = $region32
      $region31: #{_forward_impl.5} parent=5 // pred_region
        // Predicated region
        $region33: #{_forward_impl.5} parent=31 // pred_check
          %p253 = pneg %p44
        $region34: #{_forward_impl.5} parent=31 // pred_check_branch
          %255 = sbr.rel (%p253) target = $region36
        $region35: #{_forward_impl.5} parent=31 // pred_region
          %s256 = sand.u32 %s34, 1
          %s257 = scalar_lea.sflag [#allocation3], %s256
          %s258 = sand.u32 %s34, 1
          %s259 = smul.addr %s258, 16
          %s260 = scalar_lea.vmem [#allocation2], %s259
          %s261 = smul.u32 4, %s24
          %s263 = ssub.s32 256, 256
          %264 = vsyncadd %s257, %s263
          %s265 = smul.addr %s261, 64
          %s266 = scalar_lea.hbm %s0, %s265
          %s267 = sshll.u32 %s260, 4
          %s268 = int_to_ptr.vmem [resolvable:$true] %s267
          %273 = dma.hbm_to_vmem [thread:$0]  %s266, 256, %s268, %s257, 64, 64, 4
        $region36: #{_forward_impl.5} parent=31 // pred_fallthru
          _
      $region32: #{_forward_impl.5} parent=5 // pred_fallthru
        _
      %p274 = scmp.le.s32.totalorder 1, %s24
      %p275 = scmp.lt.s32.totalorder %s24, 3
      %p276 = pnand %p274, %p275
      %p277 = pneg %p276
      // Predicated region
      $region37: #{_forward_impl.5} parent=5 // pred_check
        _
      $region38: #{_forward_impl.5} parent=5 // pred_check_branch
        %279 = sbr.rel (%p276) target = $region40
      $region39: #{_forward_impl.5} parent=5 // pred_region
        %s280 = ssub.s32 %s24, 1
        %s281 = sand.u32 %s37, 1
        %s282 = scalar_lea.sflag [#allocation3], %s281
        %s283 = sand.u32 %s37, 1
        %s284 = smul.addr %s283, 16
        %s285 = scalar_lea.vmem [#allocation2], %s284
        // Predicated region
        $region41: #{_forward_impl.5} parent=39 // pred_check
          %p286 = pneg %p50
        $region42: #{_forward_impl.5} parent=39 // pred_check_branch
          %288 = sbr.rel (%p286) target = $region44
        $region43: #{_forward_impl.5} parent=39 // pred_region
          %289 = dma.done %s282, 256
        $region44: #{_forward_impl.5} parent=39 // pred_fallthru
          _
        // Predicated region
        $region45: #{_forward_impl.5} parent=39 // pred_check
          %p290 = pneg %p71
        $region46: #{_forward_impl.5} parent=39 // pred_check_branch
          %292 = sbr.rel (%p290) target = $region48
        $region47: #{_forward_impl.5} parent=39 // pred_region
          %293 = dma.done [#allocation6], 1024
        $region48: #{_forward_impl.5} parent=39 // pred_fallthru
          _
        // Predicated region
        $region49: #{_forward_impl.5} parent=39 // pred_check
          %p294 = pneg %p92
        $region50: #{_forward_impl.5} parent=39 // pred_check_branch
          %296 = sbr.rel (%p294) target = $region52
        $region51: #{_forward_impl.5} parent=39 // pred_region
          %297 = dma.done [#allocation6], 16
        $region52: #{_forward_impl.5} parent=39 // pred_fallthru
          _
        // Predicated region
        $region53: #{_forward_impl.5} parent=39 // pred_check
          %p298 = pneg %p113
        $region54: #{_forward_impl.5} parent=39 // pred_check_branch
          %300 = sbr.rel (%p298) target = $region56
        $region55: #{_forward_impl.5} parent=39 // pred_region
          %301 = dma.done [#allocation9], 1024
        $region56: #{_forward_impl.5} parent=39 // pred_fallthru
          _
        // Predicated region
        $region57: #{_forward_impl.5} parent=39 // pred_check
          %p302 = pneg %p134
        $region58: #{_forward_impl.5} parent=39 // pred_check_branch
          %304 = sbr.rel (%p302) target = $region60
        $region59: #{_forward_impl.5} parent=39 // pred_region
          %305 = dma.done [#allocation9], 16
        $region60: #{_forward_impl.5} parent=39 // pred_fallthru
          _
        %s306 = sand.u32 %s37, 1
        %s307 = scalar_lea.sflag [#allocation3], %s306
        %s308 = sand.u32 %s37, 1
        %s309 = smul.addr %s308, 16
        %s310 = scalar_lea.vmem [#allocation2], %s309
        %p311 = pneg %p50
        %p312 = pneg %p47
        %p313 = pneg %p71
        %p314 = pneg %p68
        %p315 = pneg %p92
        %p316 = pneg %p89
        %p317 = pneg %p113
        %p318 = pneg %p110
        %p319 = pneg %p134
        %p320 = pneg %p131
        %p321 = pneg %p160
        %p322 = pneg %p157
        %s323 = sand.u32 %s147, 1
        %s324 = scalar_lea.sflag [#allocation4], %s323
        %s325 = sand.u32 %s147, 1
        %s326 = smul.addr %s325, 16
        %s327 = scalar_lea.vmem [#allocation11], %s326
        %p328 = pneg %p186
        %p329 = pneg %p183
        %s330 = sand.u32 %s173, 1
        %s331 = scalar_lea.sflag [#allocation13], %s330
        %s332 = sand.u32 %s173, 1
        %s333 = smul.addr %s332, 32
        %s334 = scalar_lea.vmem [#allocation12], %s333
        %s335 = smul.u32 4, %s29
        %s336 = smul.u32 4, %s29
        %s337 = smul.u32 4, %s29
        %v339 = vld [vmem:[%s285] sm:$0xf]
        %v340 = vld [vmem:[%s285 + $0x4] sm:$0xf]
        %v341 = vld [vmem:[%s285 + $0x8] sm:$0xf]
        %v342 = vld [vmem:[%s285 + $0xc] sm:$0xf]
        %v343 = vld [vmem:[#allocation5] sm:$0xf]
        %v344 = vld [vmem:[#allocation5 + $0x4] sm:$0xf]
        %v345 = vld [vmem:[#allocation5 + $0x8] sm:$0xf]
        %v346 = vld [vmem:[#allocation5 + $0xc] sm:$0xf]
        %v347 = vld [vmem:[#allocation5 + $0x10] sm:$0xf]
        %v348 = vld [vmem:[#allocation5 + $0x14] sm:$0xf]
        %v349 = vld [vmem:[#allocation5 + $0x18] sm:$0xf]
        %v350 = vld [vmem:[#allocation5 + $0x1c] sm:$0xf]
        %v351 = vld [vmem:[#allocation5 + $0x20] sm:$0xf]
        %v352 = vld [vmem:[#allocation5 + $0x24] sm:$0xf]
        %v353 = vld [vmem:[#allocation5 + $0x28] sm:$0xf]
        %v354 = vld [vmem:[#allocation5 + $0x2c] sm:$0xf]
        %v355 = vld [vmem:[#allocation5 + $0x30] sm:$0xf]
        %v356 = vld [vmem:[#allocation5 + $0x34] sm:$0xf]
        %v357 = vld [vmem:[#allocation5 + $0x38] sm:$0xf]
        %v358 = vld [vmem:[#allocation5 + $0x3c] sm:$0xf]
        %v359 = vld [vmem:[#allocation7] sm:$0x1]
        %v361 = vlaneseq
        %v362 = vshrl.u32 %v361, 7
        %v363 = vsub.s32 0, %v362
        %v364 = vrot.slane %v359, %v363
        %v370 = vunpack.c.l.b16 %v339
        %v371 = vunpack.c.l.b16 %v340
        %v372 = vunpack.c.l.b16 %v341
        %v373 = vunpack.c.l.b16 %v342
        %v374 = vpack.c.b16 %v371, %v370
        %v375 = vpack.c.b16 %v373, %v372
        %v394 = vunpack.c.l.b16 %v343
        %v395 = vunpack.c.l.b16 %v344
        %v396 = vunpack.c.l.b16 %v345
        %v397 = vunpack.c.l.b16 %v346
        %v398 = vunpack.c.l.b16 %v347
        %v399 = vunpack.c.l.b16 %v348
        %v400 = vunpack.c.l.b16 %v349
        %v401 = vunpack.c.l.b16 %v350
        %v402 = vunpack.c.l.b16 %v351
        %v403 = vunpack.c.l.b16 %v352
        %v404 = vunpack.c.l.b16 %v353
        %v405 = vunpack.c.l.b16 %v354
        %v406 = vunpack.c.l.b16 %v355
        %v407 = vunpack.c.l.b16 %v356
        %v408 = vunpack.c.l.b16 %v357
        %v409 = vunpack.c.l.b16 %v358
        %v410 = vpack.c.b16 %v395, %v394
        %v411 = vpack.c.b16 %v397, %v396
        %v412 = vpack.c.b16 %v399, %v398
        %v413 = vpack.c.b16 %v401, %v400
        %v414 = vpack.c.b16 %v403, %v402
        %v415 = vpack.c.b16 %v405, %v404
        %v416 = vpack.c.b16 %v407, %v406
        %v417 = vpack.c.b16 %v409, %v408
        %426 = vmatprep.subr.bf16.mxu0 0
        %427 = vmatpush1.bf16.msra.mxu0 %v410
        %428 = vmatprep.subr.bf16.mxu0 0
        %429 = vmatpush1.bf16.msra.mxu0 %v411
        %430 = vmatprep.subr.bf16.mxu0 0
        %431 = vmatpush1.bf16.msra.mxu0 %v412
        %432 = vmatprep.subr.bf16.mxu0 0
        %433 = vmatpush1.bf16.msra.mxu0 %v413
        %434 = vmatprep.subr.bf16.mxu0 0
        %435 = vmatpush1.bf16.msra.mxu0 %v414
        %436 = vmatprep.subr.bf16.mxu0 0
        %437 = vmatpush1.bf16.msra.mxu0 %v415
        %438 = vmatprep.subr.bf16.mxu0 0
        %439 = vmatpush1.bf16.msra.mxu0 %v416
        %440 = vmatprep.subr.bf16.mxu0 0
        %441 = vmatpush1.bf16.msra.mxu0 %v417
        %442 = vmatprep.subr.bf16.mxu0 0
        %443 = vmatpush1.bf16.msra.mxu0 0
        %444 = vmatprep.subr.bf16.mxu0 0
        %445 = vmatpush1.bf16.msra.mxu0 0
        %446 = vmatprep.subr.bf16.mxu0 0
        %447 = vmatpush1.bf16.msra.mxu0 0
        %448 = vmatprep.subr.bf16.mxu0 0
        %449 = vmatpush1.bf16.msra.mxu0 0
        %450 = vmatprep.subr.bf16.mxu0 0
        %451 = vmatpush1.bf16.msra.mxu0 0
        %452 = vmatprep.subr.bf16.mxu0 0
        %453 = vmatpush1.bf16.msra.mxu0 0
        %454 = vmatprep.subr.bf16.mxu0 0
        %455 = vmatpush1.bf16.msra.mxu0 0
        %456 = vmatprep.subr.bf16.mxu0 0
        %457 = vmatpush1.bf16.msra.mxu0 0
        %458 = vmatprep.mubr.bf16.mxu0 0
        %459 = vmatmul.mubr.bf16.gmra.mrb[0].mxu0 %v374
        %v460 = vpop.f32.mrb[0].mxu0
        %v461 = vadd.f32 %v364, %v460
        %v462 = vpop.f32.mrb[0].mxu0
        %v463 = vpop.f32.mrb[0].mxu0
        %v464 = vadd.f32 %v364, %v463
        %v465 = vpop.f32.mrb[0].mxu0
        %466 = vmatprep.mubr.bf16.mxu0 0
        %467 = vmatmul.mubr.bf16.gmra.mrb[0].mxu0 %v375
        %v468 = vpop.f32.mrb[0].mxu0
        %v469 = vadd.f32 %v364, %v468
        %v470 = vpop.f32.mrb[0].mxu0
        %v471 = vpop.f32.mrb[0].mxu0
        %v472 = vadd.f32 %v364, %v471
        %v473 = vpop.f32.mrb[0].mxu0
        %474 = vdwg.mxu0
        %v475 = vxor.u32 %v461, 2147483648
        %v476 = vxor.u32 %v464, 2147483648
        %v477 = vxor.u32 %v469, 2147483648
        %v478 = vxor.u32 %v472, 2147483648
        %v479 = vmul.f32 %v475, 1.442695
        %v480 = vpow.pop %v479
        %v481 = vmul.f32 %v476, 1.442695
        %v482 = vpow.pop %v481
        %v483 = vmul.f32 %v477, 1.442695
        %v484 = vpow.pop %v483
        %v485 = vmul.f32 %v478, 1.442695
        %v486 = vpow.pop %v485
        %v487 = vadd.f32 %v480, 1.0
        %v488 = vadd.f32 %v482, 1.0
        %v489 = vadd.f32 %v484, 1.0
        %v490 = vadd.f32 %v486, 1.0
        %v491 = vrcp.pop %v487
        %v492 = vmul.f32 1.0, %v491
        %v493 = vrcp.pop %v488
        %v494 = vmul.f32 1.0, %v493
        %v495 = vrcp.pop %v489
        %v496 = vmul.f32 1.0, %v495
        %v497 = vrcp.pop %v490
        %v498 = vmul.f32 1.0, %v497
        %v499 = vmul.f32 %v461, %v492
        %v500 = vmul.f32 %v464, %v494
        %v501 = vmul.f32 %v469, %v496
        %v502 = vmul.f32 %v472, %v498
        %v503 = vpack.c.bf16 %v500, %v499
        %v504 = vpack.c.bf16 %v502, %v501
        %v507 = vunpack.c.l.b16 %v503
        %v508 = vunpack.c.h.b16 %v503
        %v509 = vunpack.c.l.b16 %v504
        %v510 = vunpack.c.h.b16 %v504
        %v511 = vpack.c.b16 %v507, %v507
        %v512 = vpack.c.b16 %v508, %v508
        %v513 = vpack.c.b16 %v509, %v509
        %v514 = vpack.c.b16 %v510, %v510
        %519 = vst [vmem:[%s327] sm:$0xf] %v511
        %520 = vst [vmem:[%s327 + $0x4] sm:$0xf] %v512
        %521 = vst [vmem:[%s327 + $0x8] sm:$0xf] %v513
        %522 = vst [vmem:[%s327 + $0xc] sm:$0xf] %v514
        %v523 = vld [vmem:[#allocation8] sm:$0xf]
        %v524 = vld [vmem:[#allocation8 + $0x4] sm:$0xf]
        %v525 = vld [vmem:[#allocation8 + $0x8] sm:$0xf]
        %v526 = vld [vmem:[#allocation8 + $0xc] sm:$0xf]
        %v527 = vld [vmem:[#allocation8 + $0x10] sm:$0xf]
        %v528 = vld [vmem:[#allocation8 + $0x14] sm:$0xf]
        %v529 = vld [vmem:[#allocation8 + $0x18] sm:$0xf]
        %v530 = vld [vmem:[#allocation8 + $0x1c] sm:$0xf]
        %v531 = vld [vmem:[#allocation8 + $0x20] sm:$0xf]
        %v532 = vld [vmem:[#allocation8 + $0x24] sm:$0xf]
        %v533 = vld [vmem:[#allocation8 + $0x28] sm:$0xf]
        %v534 = vld [vmem:[#allocation8 + $0x2c] sm:$0xf]
        %v535 = vld [vmem:[#allocation8 + $0x30] sm:$0xf]
        %v536 = vld [vmem:[#allocation8 + $0x34] sm:$0xf]
        %v537 = vld [vmem:[#allocation8 + $0x38] sm:$0xf]
        %v538 = vld [vmem:[#allocation8 + $0x3c] sm:$0xf]
        %v539 = vld [vmem:[#allocation10] sm:$0x1]
        %v541 = vlaneseq
        %v542 = vshrl.u32 %v541, 7
        %v543 = vsub.s32 0, %v542
        %v544 = vrot.slane %v539, %v543
        %v562 = vunpack.c.l.b16 %v523
        %v563 = vunpack.c.l.b16 %v524
        %v564 = vunpack.c.l.b16 %v525
        %v565 = vunpack.c.l.b16 %v526
        %v566 = vunpack.c.l.b16 %v527
        %v567 = vunpack.c.l.b16 %v528
        %v568 = vunpack.c.l.b16 %v529
        %v569 = vunpack.c.l.b16 %v530
        %v570 = vunpack.c.l.b16 %v531
        %v571 = vunpack.c.l.b16 %v532
        %v572 = vunpack.c.l.b16 %v533
        %v573 = vunpack.c.l.b16 %v534
        %v574 = vunpack.c.l.b16 %v535
        %v575 = vunpack.c.l.b16 %v536
        %v576 = vunpack.c.l.b16 %v537
        %v577 = vunpack.c.l.b16 %v538
        %v578 = vpack.c.b16 %v563, %v562
        %v579 = vpack.c.b16 %v565, %v564
        %v580 = vpack.c.b16 %v567, %v566
        %v581 = vpack.c.b16 %v569, %v568
        %v582 = vpack.c.b16 %v571, %v570
        %v583 = vpack.c.b16 %v573, %v572
        %v584 = vpack.c.b16 %v575, %v574
        %v585 = vpack.c.b16 %v577, %v576
        %594 = vmatprep.subr.bf16.mxu0 0
        %595 = vmatpush1.bf16.msra.mxu0 %v578
        %596 = vmatprep.subr.bf16.mxu0 0
        %597 = vmatpush1.bf16.msra.mxu0 %v579
        %598 = vmatprep.subr.bf16.mxu0 0
        %599 = vmatpush1.bf16.msra.mxu0 %v580
        %600 = vmatprep.subr.bf16.mxu0 0
        %601 = vmatpush1.bf16.msra.mxu0 %v581
        %602 = vmatprep.subr.bf16.mxu0 0
        %603 = vmatpush1.bf16.msra.mxu0 %v582
        %604 = vmatprep.subr.bf16.mxu0 0
        %605 = vmatpush1.bf16.msra.mxu0 %v583
        %606 = vmatprep.subr.bf16.mxu0 0
        %607 = vmatpush1.bf16.msra.mxu0 %v584
        %608 = vmatprep.subr.bf16.mxu0 0
        %609 = vmatpush1.bf16.msra.mxu0 %v585
        %610 = vmatprep.subr.bf16.mxu0 0
        %611 = vmatpush1.bf16.msra.mxu0 0
        %612 = vmatprep.subr.bf16.mxu0 0
        %613 = vmatpush1.bf16.msra.mxu0 0
        %614 = vmatprep.subr.bf16.mxu0 0
        %615 = vmatpush1.bf16.msra.mxu0 0
        %616 = vmatprep.subr.bf16.mxu0 0
        %617 = vmatpush1.bf16.msra.mxu0 0
        %618 = vmatprep.subr.bf16.mxu0 0
        %619 = vmatpush1.bf16.msra.mxu0 0
        %620 = vmatprep.subr.bf16.mxu0 0
        %621 = vmatpush1.bf16.msra.mxu0 0
        %622 = vmatprep.subr.bf16.mxu0 0
        %623 = vmatpush1.bf16.msra.mxu0 0
        %624 = vmatprep.subr.bf16.mxu0 0
        %625 = vmatpush1.bf16.msra.mxu0 0
        %626 = vmatprep.mubr.bf16.mxu0 0
        %627 = vmatmul.mubr.bf16.gmra.mrb[0].mxu0 %v503
        %v628 = vpop.f32.mrb[0].mxu0
        %v629 = vadd.f32 %v544, %v628
        %v630 = vpop.f32.mrb[0].mxu0
        %v631 = vpop.f32.mrb[0].mxu0
        %v632 = vadd.f32 %v544, %v631
        %v633 = vpop.f32.mrb[0].mxu0
        %634 = vmatprep.mubr.bf16.mxu0 0
        %635 = vmatmul.mubr.bf16.gmra.mrb[0].mxu0 %v504
        %v636 = vpop.f32.mrb[0].mxu0
        %v637 = vadd.f32 %v544, %v636
        %v638 = vpop.f32.mrb[0].mxu0
        %v639 = vpop.f32.mrb[0].mxu0
        %v640 = vadd.f32 %v544, %v639
        %v641 = vpop.f32.mrb[0].mxu0
        %642 = vdwg.mxu0
        %643 = vst [vmem:[%s334] sm:$0xff] %v629
        %644 = vst [vmem:[%s334 + $0x8] sm:$0xff] %v632
        %645 = vst [vmem:[%s334 + $0x10] sm:$0xff] %v637
        %646 = vst [vmem:[%s334 + $0x18] sm:$0xff] %v640
        %s647 = sand.u32 %s147, 1
        %s648 = scalar_lea.sflag [#allocation4], %s647
        %s649 = sand.u32 %s147, 1
        %s650 = smul.addr %s649, 16
        %s651 = scalar_lea.vmem [#allocation11], %s650
        %s652 = sand.u32 %s173, 1
        %s653 = scalar_lea.sflag [#allocation13], %s652
        %s654 = sand.u32 %s173, 1
        %s655 = smul.addr %s654, 32
        %s656 = scalar_lea.vmem [#allocation12], %s655
        // Predicated region
        $region61: #{_forward_impl.5} parent=39 // pred_check
          %p657 = pneg %p157
        $region62: #{_forward_impl.5} parent=39 // pred_check_branch
          %659 = sbr.rel (%p657) target = $region64
        $region63: #{_forward_impl.5} parent=39 // pred_region
          %s660 = smul.u32 4, %s29
          %s662 = ssub.s32 256, 256
          %663 = vsyncadd %s648, %s662
          %s664 = smul.addr %s660, 64
          %s665 = scalar_lea.hbm %s5, %s664
          %s666 = sshll.u32 %s651, 4
          %s667 = int_to_ptr.vmem [resolvable:$true] %s666
          %672 = dma.vmem_to_hbm [thread:$0]  %s667, 256, %s665, %s648, 64, 64, 4
        $region64: #{_forward_impl.5} parent=39 // pred_fallthru
          _
        // Predicated region
        $region65: #{_forward_impl.5} parent=39 // pred_check
          %p673 = pneg %p183
        $region66: #{_forward_impl.5} parent=39 // pred_check_branch
          %675 = sbr.rel (%p673) target = $region68
        $region67: #{_forward_impl.5} parent=39 // pred_region
          %s676 = smul.u32 4, %s29
          %s678 = ssub.s32 512, 512
          %679 = vsyncadd %s653, %s678
          %s680 = smul.addr %s676, 128
          %s681 = scalar_lea.hbm %s6, %s680
          %s682 = sshll.u32 %s656, 4
          %s683 = int_to_ptr.vmem [resolvable:$true] %s682
          %688 = dma.vmem_to_hbm [thread:$0]  %s683, 512, %s681, %s653, 128, 128, 8
        $region68: #{_forward_impl.5} parent=39 // pred_fallthru
          _
      $region40: #{_forward_impl.5} parent=5 // pred_fallthru
        _
      %p689 = scmp.le.s32.totalorder 2, %s24
      // Predicated region
      $region69: #{_forward_impl.5} parent=5 // pred_check
        %p690 = pneg %p689
      $region70: #{_forward_impl.5} parent=5 // pred_check_branch
        %692 = sbr.rel (%p690) target = $region72
      $region71: #{_forward_impl.5} parent=5 // pred_region
        %s693 = ssub.s32 %s24, 2
        // Predicated region
        $region73: #{_forward_impl.5} parent=71 // pred_check
          %p694 = pneg %p163
        $region74: #{_forward_impl.5} parent=71 // pred_check_branch
          %696 = sbr.rel (%p694) target = $region76
        $region75: #{_forward_impl.5} parent=71 // pred_region
          %s697 = sand.u32 %s148, 1
          %s698 = scalar_lea.sflag [#allocation4], %s697
          %s699 = sand.u32 %s148, 1
          %s700 = smul.addr %s699, 16
          %s701 = scalar_lea.vmem [#allocation11], %s700
          %702 = dma.done %s698, 256
        $region76: #{_forward_impl.5} parent=71 // pred_fallthru
          _
        // Predicated region
        $region77: #{_forward_impl.5} parent=71 // pred_check
          %p703 = pneg %p189
        $region78: #{_forward_impl.5} parent=71 // pred_check_branch
          %705 = sbr.rel (%p703) target = $region80
        $region79: #{_forward_impl.5} parent=71 // pred_region
          %s706 = sand.u32 %s174, 1
          %s707 = scalar_lea.sflag [#allocation13], %s706
          %s708 = sand.u32 %s174, 1
          %s709 = smul.addr %s708, 32
          %s710 = scalar_lea.vmem [#allocation12], %s709
          %711 = dma.done %s707, 512
        $region80: #{_forward_impl.5} parent=71 // pred_fallthru
          _
      $region72: #{_forward_impl.5} parent=5 // pred_fallthru
        _
    $region6: #{_forward_impl.5} parent=1 // loop_footer
      %s28 = sadd.s32 1, %s24
    $region7: #{_forward_impl.5} parent=1 // loop_footer_branch
      %23 = sbr.rel target = $region3
    $region8: #{_forward_impl.5} parent=1 // loop_exit
      _
    %712 = vsyncpa [#allocation3], 1
    %s713 = scalar_lea.sflag [#allocation3], 1
    %714 = vsyncpa %s713, 1
    %715 = vsyncpa [#allocation6], 1
    %716 = vsyncpa [#allocation9], 1
    %717 = vsyncpa [#allocation4], 1
    %s718 = scalar_lea.sflag [#allocation4], 1
    %719 = vsyncpa %s718, 1
    %720 = vsyncpa [#allocation13], 1
    %s721 = scalar_lea.sflag [#allocation13], 1
    %722 = vsyncpa %s721, 1

</llo_original>
